<compile_context>
chip_gen: v7x
topology: tpu7x:2x2x1
jax: 0.10.0
libtpu: 0.0.40
codegen_flags: <defaults>
</compile_context>

<pallas_src>
import math
import functools

import jax
import jax.numpy as jnp
from jax.experimental import pallas as pl
from jax.experimental.pallas import tpu as pltpu

# ---- small synthetic DistilBERT config ----
VOCAB = 128        # lane-aligned vocab for the one-hot embedding matmul
MAX_POS = 16
DIM = 32           # hidden size
N_HEADS = 4
HEAD_DIM = DIM // N_HEADS
FFN_DIM = 64
N_LAYERS = 2
LN_EPS = 1e-12
NEG_INF = -1e30


# -------------------- shared math (used by kernel and JAX reference) --------------------

def _layernorm(x, g, b):
    mu = jnp.mean(x, axis=-1, keepdims=True)
    var = jnp.mean(jnp.square(x - mu), axis=-1, keepdims=True)
    return (x - mu) * jax.lax.rsqrt(var + LN_EPS) * g + b


def _gelu(x):
    # TODO(synk): torch DistilBERT uses exact erf-GELU; tanh approximation here (EUP-friendly).
    c = math.sqrt(2.0 / math.pi)
    return 0.5 * x * (1.0 + jnp.tanh(c * (x + 0.044715 * x * x * x)))


# -------------------- fused Pallas kernel (one grid step == one batch row) --------------------

def _tag_encoder_kernel(ids_ref, mask_ref, wemb_ref, pos_ref, eg_ref, eb_ref,
                        wqkv_ref, bqkv_ref, wo_ref, bo_ref, sag_ref, sab_ref,
                        w1_ref, b1_ref, w2_ref, b2_ref, og_ref, ob_ref,
                        o_ref, *, n_heads, agg):
    vocab, dim = wemb_ref.shape
    seq = pos_ref.shape[0]
    n_layers = wqkv_ref.shape[0]
    head_dim = dim // n_heads
    scale = 1.0 / math.sqrt(head_dim)

    # ---- embeddings: token lookup as one-hot MXU matmul + positions, then LayerNorm ----
    ids = ids_ref[0]                                                   # (S, 1) int32
    onehot = (jax.lax.broadcasted_iota(jnp.int32, (seq, vocab), 1) == ids).astype(jnp.float32)
    x = jnp.dot(onehot, wemb_ref[...], preferred_element_type=jnp.float32) + pos_ref[...]
    x = _layernorm(x, eg_ref[...], eb_ref[...])                        # (S, DIM)

    key_pad = mask_ref[0] < 0.5                                        # (1, S) bool key mask

    for l in range(n_layers):                                          # static unroll (2 layers)
        # fused Q/K/V projection: one (S, DIM) @ (DIM, 3*DIM) matmul
        qkv = jnp.dot(x, wqkv_ref[l], preferred_element_type=jnp.float32) + bqkv_ref[l]

        ctx_heads = []
        for h in range(n_heads):                                       # static unroll (4 heads)
            q = qkv[:, h * head_dim:(h + 1) * head_dim]                # (S, DH)
            k = qkv[:, dim + h * head_dim:dim + (h + 1) * head_dim]
            v = qkv[:, 2 * dim + h * head_dim:2 * dim + (h + 1) * head_dim]
            sc = jnp.dot(q, k.T, preferred_element_type=jnp.float32) * scale   # (S, S)
            sc = jnp.where(key_pad, NEG_INF, sc)
            sc = sc - jnp.max(sc, axis=-1, keepdims=True)
            p = jnp.exp(sc)
            p = p / jnp.sum(p, axis=-1, keepdims=True)
            ctx_heads.append(jnp.dot(p, v, preferred_element_type=jnp.float32))
        ctx = jnp.concatenate(ctx_heads, axis=-1)                      # (S, DIM)

        attn_out = jnp.dot(ctx, wo_ref[l], preferred_element_type=jnp.float32) + bo_ref[l]
        x = _layernorm(x + attn_out, sag_ref[l], sab_ref[l])

        hdn = _gelu(jnp.dot(x, w1_ref[l], preferred_element_type=jnp.float32) + b1_ref[l])
        ff = jnp.dot(hdn, w2_ref[l], preferred_element_type=jnp.float32) + b2_ref[l]
        x = _layernorm(x + ff, og_ref[l], ob_ref[l])

    # ---- aggregation folded into the kernel ----
    if agg == "cls":
        o_ref[0] = x[0:1, :]                                           # lhs[:, 0]
    else:
        o_ref[0] = jnp.mean(x, axis=0, keepdims=True)                  # torch.mean(lhs, dim=1)


# -------------------- parameters --------------------

def init_params(key):
    def dense(k, shape):
        return jax.random.normal(k, shape, jnp.float32) * 0.02

    k = jax.random.split(key, 6)
    return {
        "word_emb": dense(k[0], (VOCAB, DIM)),
        "pos_emb": dense(k[1], (MAX_POS, DIM)),
        "emb_ln_g": jnp.ones((1, DIM), jnp.float32),
        "emb_ln_b": jnp.zeros((1, DIM), jnp.float32),
        # per-layer weights stacked on a leading layer axis; W stored as [in, out]
        "wqkv": dense(k[2], (N_LAYERS, DIM, 3 * DIM)),
        "bqkv": jnp.zeros((N_LAYERS, 1, 3 * DIM), jnp.float32),
        "wo": dense(k[3], (N_LAYERS, DIM, DIM)),
        "bo": jnp.zeros((N_LAYERS, 1, DIM), jnp.float32),
        "sa_ln_g": jnp.ones((N_LAYERS, 1, DIM), jnp.float32),
        "sa_ln_b": jnp.zeros((N_LAYERS, 1, DIM), jnp.float32),
        "w1": dense(k[4], (N_LAYERS, DIM, FFN_DIM)),
        "b1": jnp.zeros((N_LAYERS, 1, FFN_DIM), jnp.float32),
        "w2": dense(k[5], (N_LAYERS, FFN_DIM, DIM)),
        "b2": jnp.zeros((N_LAYERS, 1, DIM), jnp.float32),
        "out_ln_g": jnp.ones((N_LAYERS, 1, DIM), jnp.float32),
        "out_ln_b": jnp.zeros((N_LAYERS, 1, DIM), jnp.float32),
    }


# -------------------- forward (TagModel._embed + _get_agg), single pallas_call --------------------

def tag_model_forward(params, input_ids, attention_mask, agg="mean"):
    b, s = input_ids.shape
    ids = input_ids.astype(jnp.int32).reshape(b, s, 1)
    mask = attention_mask.astype(jnp.float32).reshape(b, 1, s)
    pos = params["pos_emb"][:s]                                        # (S, DIM)

    weight_args = (params["word_emb"], pos, params["emb_ln_g"], params["emb_ln_b"],
                   params["wqkv"], params["bqkv"], params["wo"], params["bo"],
                   params["sa_ln_g"], params["sa_ln_b"],
                   params["w1"], params["b1"], params["w2"], params["b2"],
                   params["out_ln_g"], params["out_ln_b"])

    def resident_spec(a):
        nd = a.ndim
        # same block index every grid step -> weight stays resident in VMEM
        return pl.BlockSpec(a.shape, lambda i, _nd=nd: (0,) * _nd)

    in_specs = ([pl.BlockSpec((1, s, 1), lambda i: (i, 0, 0)),          # ids
                 pl.BlockSpec((1, 1, s), lambda i: (i, 0, 0))]          # mask
                + [resident_spec(a) for a in weight_args])

    out = pl.pallas_call(
        functools.partial(_tag_encoder_kernel, n_heads=N_HEADS, agg=agg),
        grid=(b,),
        in_specs=in_specs,
        out_specs=pl.BlockSpec((1, 1, DIM), lambda i: (i, 0, 0)),
        out_shape=jax.ShapeDtypeStruct((b, 1, DIM), jnp.float32),
        compiler_params=pltpu.CompilerParams(dimension_semantics=("parallel",)),
    )(ids, mask, *weight_args)
    return out.reshape(b, DIM)


# -------------------- plain-JAX reference (wiring sanity check) --------------------

def _reference_forward(params, input_ids, attention_mask, agg="mean"):
    b, s = input_ids.shape
    x = params["word_emb"][input_ids] + params["pos_emb"][:s][None]
    x = _layernorm(x, params["emb_ln_g"], params["emb_ln_b"])
    maskf = attention_mask.astype(jnp.float32)
    for l in range(N_LAYERS):
        qkv = x @ params["wqkv"][l] + params["bqkv"][l]
        q, k, v = jnp.split(qkv, 3, axis=-1)

        def heads(t):
            return t.reshape(b, s, N_HEADS, HEAD_DIM).transpose(0, 2, 1, 3)

        qh, kh, vh = heads(q), heads(k), heads(v)
        sc = jnp.einsum("bhqd,bhkd->bhqk", qh, kh) / math.sqrt(HEAD_DIM)
        sc = jnp.where(maskf[:, None, None, :] < 0.5, NEG_INF, sc)
        sc = sc - jnp.max(sc, axis=-1, keepdims=True)
        p = jnp.exp(sc)
        p = p / jnp.sum(p, axis=-1, keepdims=True)
        ctx = jnp.einsum("bhqk,bhkd->bhqd", p, vh).transpose(0, 2, 1, 3).reshape(b, s, DIM)
        x = _layernorm(x + ctx @ params["wo"][l] + params["bo"][l],
                       params["sa_ln_g"][l], params["sa_ln_b"][l])
        hdn = _gelu(x @ params["w1"][l] + params["b1"][l])
        x = _layernorm(x + hdn @ params["w2"][l] + params["b2"][l],
                       params["out_ln_g"][l], params["out_ln_b"][l])
    if agg == "cls":
        return x[:, 0]
    return jnp.mean(x, axis=1)


if __name__ == "__main__":
    key = jax.random.PRNGKey(0)
    pkey, ikey = jax.random.split(key)
    params = init_params(pkey)

    B, S = 2, 8
    input_ids = jax.random.randint(ikey, (B, S), 0, VOCAB, dtype=jnp.int32)
    attention_mask = jnp.ones((B, S), jnp.int32).at[1, 6:].set(0)   # pad last 2 tokens of row 1

    fwd_mean = jax.jit(functools.partial(tag_model_forward, agg="mean"))
    out_mean = fwd_mean(params, input_ids, attention_mask)
    jax.block_until_ready(out_mean)
    assert out_mean.shape == (B, DIM) and out_mean.dtype == jnp.float32

    fwd_cls = jax.jit(functools.partial(tag_model_forward, agg="cls"))
    out_cls = fwd_cls(params, input_ids, attention_mask)
    jax.block_until_ready(out_cls)
    assert out_cls.shape == (B, DIM)

    # loose wiring sanity check vs plain-JAX reference (tolerates MXU precision differences)
    ref_mean = _reference_forward(params, input_ids, attention_mask, agg="mean")
    ref_cls = _reference_forward(params, input_ids, attention_mask, agg="cls")
    err = max(float(jnp.max(jnp.abs(out_mean - ref_mean))),
              float(jnp.max(jnp.abs(out_cls - ref_cls))))
    assert err < 5e-2, f"kernel/reference mismatch: max abs err {err}"

    print("KERNEL_OK")
</pallas_src>

<mosaic_0001>
module attributes {stable_mosaic.version = 11 : i64} {
  func.func @_tag_encoder_kernel(%arg0: i32, %arg1: memref<1x8x1xi32, #tpu.memory_space<vmem>>, %arg2: memref<1x1x8xf32, #tpu.memory_space<vmem>>, %arg3: memref<128x32xf32, #tpu.memory_space<vmem>>, %arg4: memref<8x32xf32, #tpu.memory_space<vmem>>, %arg5: memref<1x32xf32, #tpu.memory_space<vmem>>, %arg6: memref<1x32xf32, #tpu.memory_space<vmem>>, %arg7: memref<2x32x96xf32, #tpu.memory_space<vmem>>, %arg8: memref<2x1x96xf32, #tpu.memory_space<vmem>>, %arg9: memref<2x32x32xf32, #tpu.memory_space<vmem>>, %arg10: memref<2x1x32xf32, #tpu.memory_space<vmem>>, %arg11: memref<2x1x32xf32, #tpu.memory_space<vmem>>, %arg12: memref<2x1x32xf32, #tpu.memory_space<vmem>>, %arg13: memref<2x32x64xf32, #tpu.memory_space<vmem>>, %arg14: memref<2x1x64xf32, #tpu.memory_space<vmem>>, %arg15: memref<2x64x32xf32, #tpu.memory_space<vmem>>, %arg16: memref<2x1x32xf32, #tpu.memory_space<vmem>>, %arg17: memref<2x1x32xf32, #tpu.memory_space<vmem>>, %arg18: memref<2x1x32xf32, #tpu.memory_space<vmem>>, %arg19: memref<1x1x32xf32, #tpu.memory_space<vmem>>) attributes {dimension_semantics = [#tpu.dimension_semantics<parallel>], iteration_bounds = array<i64: 2>, scalar_prefetch = 0 : i64, scratch_operands = 0 : i64, tpu.core_type = #tpu.core_type<tc>, window_params = [{transform_indices = @transform_0, window_bounds = array<i64: 1, 8, 1>}, {transform_indices = @transform_1, window_bounds = array<i64: 1, 1, 8>}, {pipeline_mode = #tpu.pipeline_mode<synchronous>, transform_indices = @transform_2, window_bounds = array<i64: 128, 32>}, {pipeline_mode = #tpu.pipeline_mode<synchronous>, transform_indices = @transform_3, window_bounds = array<i64: 8, 32>}, {pipeline_mode = #tpu.pipeline_mode<synchronous>, transform_indices = @transform_4, window_bounds = array<i64: 1, 32>}, {pipeline_mode = #tpu.pipeline_mode<synchronous>, transform_indices = @transform_5, window_bounds = array<i64: 1, 32>}, {pipeline_mode = #tpu.pipeline_mode<synchronous>, transform_indices = @transform_6, window_bounds = array<i64: 2, 32, 96>}, {pipeline_mode = #tpu.pipeline_mode<synchronous>, transform_indices = @transform_7, window_bounds = array<i64: 2, 1, 96>}, {pipeline_mode = #tpu.pipeline_mode<synchronous>, transform_indices = @transform_8, window_bounds = array<i64: 2, 32, 32>}, {pipeline_mode = #tpu.pipeline_mode<synchronous>, transform_indices = @transform_9, window_bounds = array<i64: 2, 1, 32>}, {pipeline_mode = #tpu.pipeline_mode<synchronous>, transform_indices = @transform_10, window_bounds = array<i64: 2, 1, 32>}, {pipeline_mode = #tpu.pipeline_mode<synchronous>, transform_indices = @transform_11, window_bounds = array<i64: 2, 1, 32>}, {pipeline_mode = #tpu.pipeline_mode<synchronous>, transform_indices = @transform_12, window_bounds = array<i64: 2, 32, 64>}, {pipeline_mode = #tpu.pipeline_mode<synchronous>, transform_indices = @transform_13, window_bounds = array<i64: 2, 1, 64>}, {pipeline_mode = #tpu.pipeline_mode<synchronous>, transform_indices = @transform_14, window_bounds = array<i64: 2, 64, 32>}, {pipeline_mode = #tpu.pipeline_mode<synchronous>, transform_indices = @transform_15, window_bounds = array<i64: 2, 1, 32>}, {pipeline_mode = #tpu.pipeline_mode<synchronous>, transform_indices = @transform_16, window_bounds = array<i64: 2, 1, 32>}, {pipeline_mode = #tpu.pipeline_mode<synchronous>, transform_indices = @transform_17, window_bounds = array<i64: 2, 1, 32>}, {transform_indices = @transform_18, window_bounds = array<i64: 1, 1, 32>}]} {
    %c0 = arith.constant 0 : index
    %c0_0 = arith.constant 0 : index
    %c0_1 = arith.constant 0 : index
    %0 = vector.load %arg1[%c0, %c0_0, %c0_1] : memref<1x8x1xi32, #tpu.memory_space<vmem>>, vector<1x8x1xi32>
    %1 = vector.shape_cast %0 : vector<1x8x1xi32> to vector<8x1xi32>
    %2 = tpu.iota {dimensions = array<i32: 1>} : vector<8x128xi32>
    %3 = vector.broadcast %1 : vector<8x1xi32> to vector<8x128xi32>
    %4 = arith.cmpi eq, %2, %3 : vector<8x128xi32>
    %5 = arith.extui %4 : vector<8x128xi1> to vector<8x128xi32>
    %6 = arith.sitofp %5 : vector<8x128xi32> to vector<8x128xf32>
    %c0_2 = arith.constant 0 : index
    %c0_3 = arith.constant 0 : index
    %7 = vector.load %arg3[%c0_2, %c0_3] : memref<128x32xf32, #tpu.memory_space<vmem>>, vector<128x32xf32>
    %cst = arith.constant dense<0.000000e+00> : vector<8x32xf32>
    %8 = tpu.matmul %6, %7, %cst {dimension_numbers = #tpu.dot_dimension_numbers<[1], [0], [0], [1], [0, 0, 1, 1], [], []>} : vector<8x128xf32>, vector<128x32xf32>, vector<8x32xf32> -> vector<8x32xf32>
    %c0_4 = arith.constant 0 : index
    %c0_5 = arith.constant 0 : index
    %9 = vector.load %arg4[%c0_4, %c0_5] : memref<8x32xf32, #tpu.memory_space<vmem>>, vector<8x32xf32>
    %10 = arith.addf %8, %9 : vector<8x32xf32>
    %c0_6 = arith.constant 0 : index
    %c0_7 = arith.constant 0 : index
    %11 = vector.load %arg5[%c0_6, %c0_7] : memref<1x32xf32, #tpu.memory_space<vmem>>, vector<1x32xf32>
    %c0_8 = arith.constant 0 : index
    %c0_9 = arith.constant 0 : index
    %12 = vector.load %arg6[%c0_8, %c0_9] : memref<1x32xf32, #tpu.memory_space<vmem>>, vector<1x32xf32>
    %cst_10 = arith.constant dense<0.000000e+00> : vector<8xf32>
    %13 = vector.multi_reduction <add>, %10, %cst_10 [1] : vector<8x32xf32> to vector<8xf32>
    %14 = vector.shape_cast %13 : vector<8xf32> to vector<8x1xf32>
    %cst_11 = arith.constant 3.200000e+01 : f32
    %15 = vector.broadcast %cst_11 : f32 to vector<8x1xf32>
    %16 = arith.divf %14, %15 : vector<8x1xf32>
    %17 = vector.broadcast %16 : vector<8x1xf32> to vector<8x32xf32>
    %18 = arith.subf %10, %17 : vector<8x32xf32>
    %19 = arith.mulf %18, %18 : vector<8x32xf32>
    %cst_12 = arith.constant dense<0.000000e+00> : vector<8xf32>
    %20 = vector.multi_reduction <add>, %19, %cst_12 [1] : vector<8x32xf32> to vector<8xf32>
    %21 = vector.shape_cast %20 : vector<8xf32> to vector<8x1xf32>
    %cst_13 = arith.constant 3.200000e+01 : f32
    %22 = vector.broadcast %cst_13 : f32 to vector<8x1xf32>
    %23 = arith.divf %21, %22 : vector<8x1xf32>
    %24 = vector.broadcast %16 : vector<8x1xf32> to vector<8x32xf32>
    %25 = arith.subf %10, %24 : vector<8x32xf32>
    %cst_14 = arith.constant 9.99999996E-13 : f32
    %26 = vector.broadcast %cst_14 : f32 to vector<8x1xf32>
    %27 = arith.addf %23, %26 : vector<8x1xf32>
    %28 = math.rsqrt %27 : vector<8x1xf32>
    %29 = vector.broadcast %28 : vector<8x1xf32> to vector<8x32xf32>
    %30 = arith.mulf %25, %29 : vector<8x32xf32>
    %31 = vector.broadcast %11 : vector<1x32xf32> to vector<8x32xf32>
    %32 = arith.mulf %30, %31 : vector<8x32xf32>
    %33 = vector.broadcast %12 : vector<1x32xf32> to vector<8x32xf32>
    %34 = arith.addf %32, %33 : vector<8x32xf32>
    %c0_15 = arith.constant 0 : index
    %c0_16 = arith.constant 0 : index
    %c0_17 = arith.constant 0 : index
    %35 = vector.load %arg2[%c0_15, %c0_16, %c0_17] : memref<1x1x8xf32, #tpu.memory_space<vmem>>, vector<1x1x8xf32>
    %36 = vector.shape_cast %35 : vector<1x1x8xf32> to vector<1x8xf32>
    %cst_18 = arith.constant 5.000000e-01 : f32
    %37 = vector.broadcast %cst_18 : f32 to vector<1x8xf32>
    %38 = arith.cmpf olt, %36, %37 : vector<1x8xf32>
    %c0_19 = arith.constant 0 : index
    %c0_20 = arith.constant 0 : index
    %c0_21 = arith.constant 0 : index
    %39 = vector.load %arg7[%c0_19, %c0_20, %c0_21] : memref<2x32x96xf32, #tpu.memory_space<vmem>>, vector<1x32x96xf32>
    %40 = vector.shape_cast %39 : vector<1x32x96xf32> to vector<32x96xf32>
    %cst_22 = arith.constant dense<0.000000e+00> : vector<8x96xf32>
    %41 = tpu.matmul %34, %40, %cst_22 {dimension_numbers = #tpu.dot_dimension_numbers<[1], [0], [0], [1], [0, 0, 1, 1], [], []>} : vector<8x32xf32>, vector<32x96xf32>, vector<8x96xf32> -> vector<8x96xf32>
    %c0_23 = arith.constant 0 : index
    %c0_24 = arith.constant 0 : index
    %c0_25 = arith.constant 0 : index
    %42 = vector.load %arg8[%c0_23, %c0_24, %c0_25] : memref<2x1x96xf32, #tpu.memory_space<vmem>>, vector<1x1x96xf32>
    %43 = vector.shape_cast %42 : vector<1x1x96xf32> to vector<1x96xf32>
    %44 = vector.broadcast %43 : vector<1x96xf32> to vector<8x96xf32>
    %45 = arith.addf %41, %44 : vector<8x96xf32>
    %46 = vector.extract_strided_slice %45 {offsets = [0, 0], sizes = [8, 8], strides = [1, 1]} : vector<8x96xf32> to vector<8x8xf32>
    %47 = vector.extract_strided_slice %45 {offsets = [0, 32], sizes = [8, 8], strides = [1, 1]} : vector<8x96xf32> to vector<8x8xf32>
    %48 = vector.extract_strided_slice %45 {offsets = [0, 64], sizes = [8, 8], strides = [1, 1]} : vector<8x96xf32> to vector<8x8xf32>
    %49 = tpu.transpose %47, [1, 0] : vector<8x8xf32> -> vector<8x8xf32>
    %cst_26 = arith.constant dense<0.000000e+00> : vector<8x8xf32>
    %50 = tpu.matmul %46, %49, %cst_26 {dimension_numbers = #tpu.dot_dimension_numbers<[1], [0], [0], [1], [0, 0, 1, 1], [], []>} : vector<8x8xf32>, vector<8x8xf32>, vector<8x8xf32> -> vector<8x8xf32>
    %cst_27 = arith.constant 0.353553385 : f32
    %51 = vector.broadcast %cst_27 : f32 to vector<8x8xf32>
    %52 = arith.mulf %50, %51 : vector<8x8xf32>
    %cst_28 = arith.constant -1.000000e+30 : f32
    %53 = vector.shape_cast %38 : vector<1x8xi1> to vector<1x8xi1>
    %54 = vector.broadcast %53 : vector<1x8xi1> to vector<8x8xi1>
    %55 = vector.broadcast %cst_28 : f32 to vector<8x8xf32>
    %56 = arith.select %54, %55, %52 : vector<8x8xi1>, vector<8x8xf32>
    %cst_29 = arith.constant dense<0xFF800000> : vector<8xf32>
    %57 = vector.multi_reduction <maximumf>, %56, %cst_29 [1] : vector<8x8xf32> to vector<8xf32>
    %58 = vector.shape_cast %57 : vector<8xf32> to vector<8x1xf32>
    %59 = vector.broadcast %58 : vector<8x1xf32> to vector<8x8xf32>
    %60 = arith.subf %56, %59 : vector<8x8xf32>
    %61 = math.exp %60 : vector<8x8xf32>
    %cst_30 = arith.constant dense<0.000000e+00> : vector<8xf32>
    %62 = vector.multi_reduction <add>, %61, %cst_30 [1] : vector<8x8xf32> to vector<8xf32>
    %63 = vector.shape_cast %62 : vector<8xf32> to vector<8x1xf32>
    %64 = vector.broadcast %63 : vector<8x1xf32> to vector<8x8xf32>
    %65 = arith.divf %61, %64 : vector<8x8xf32>
    %cst_31 = arith.constant dense<0.000000e+00> : vector<8x8xf32>
    %66 = tpu.matmul %65, %48, %cst_31 {dimension_numbers = #tpu.dot_dimension_numbers<[1], [0], [0], [1], [0, 0, 1, 1], [], []>} : vector<8x8xf32>, vector<8x8xf32>, vector<8x8xf32> -> vector<8x8xf32>
    %67 = vector.extract_strided_slice %45 {offsets = [0, 8], sizes = [8, 8], strides = [1, 1]} : vector<8x96xf32> to vector<8x8xf32>
    %68 = vector.extract_strided_slice %45 {offsets = [0, 40], sizes = [8, 8], strides = [1, 1]} : vector<8x96xf32> to vector<8x8xf32>
    %69 = vector.extract_strided_slice %45 {offsets = [0, 72], sizes = [8, 8], strides = [1, 1]} : vector<8x96xf32> to vector<8x8xf32>
    %70 = tpu.transpose %68, [1, 0] : vector<8x8xf32> -> vector<8x8xf32>
    %cst_32 = arith.constant dense<0.000000e+00> : vector<8x8xf32>
    %71 = tpu.matmul %67, %70, %cst_32 {dimension_numbers = #tpu.dot_dimension_numbers<[1], [0], [0], [1], [0, 0, 1, 1], [], []>} : vector<8x8xf32>, vector<8x8xf32>, vector<8x8xf32> -> vector<8x8xf32>
    %cst_33 = arith.constant 0.353553385 : f32
    %72 = vector.broadcast %cst_33 : f32 to vector<8x8xf32>
    %73 = arith.mulf %71, %72 : vector<8x8xf32>
    %cst_34 = arith.constant -1.000000e+30 : f32
    %74 = vector.shape_cast %38 : vector<1x8xi1> to vector<1x8xi1>
    %75 = vector.broadcast %74 : vector<1x8xi1> to vector<8x8xi1>
    %76 = vector.broadcast %cst_34 : f32 to vector<8x8xf32>
    %77 = arith.select %75, %76, %73 : vector<8x8xi1>, vector<8x8xf32>
    %cst_35 = arith.constant dense<0xFF800000> : vector<8xf32>
    %78 = vector.multi_reduction <maximumf>, %77, %cst_35 [1] : vector<8x8xf32> to vector<8xf32>
    %79 = vector.shape_cast %78 : vector<8xf32> to vector<8x1xf32>
    %80 = vector.broadcast %79 : vector<8x1xf32> to vector<8x8xf32>
    %81 = arith.subf %77, %80 : vector<8x8xf32>
    %82 = math.exp %81 : vector<8x8xf32>
    %cst_36 = arith.constant dense<0.000000e+00> : vector<8xf32>
    %83 = vector.multi_reduction <add>, %82, %cst_36 [1] : vector<8x8xf32> to vector<8xf32>
    %84 = vector.shape_cast %83 : vector<8xf32> to vector<8x1xf32>
    %85 = vector.broadcast %84 : vector<8x1xf32> to vector<8x8xf32>
    %86 = arith.divf %82, %85 : vector<8x8xf32>
    %cst_37 = arith.constant dense<0.000000e+00> : vector<8x8xf32>
    %87 = tpu.matmul %86, %69, %cst_37 {dimension_numbers = #tpu.dot_dimension_numbers<[1], [0], [0], [1], [0, 0, 1, 1], [], []>} : vector<8x8xf32>, vector<8x8xf32>, vector<8x8xf32> -> vector<8x8xf32>
    %88 = vector.extract_strided_slice %45 {offsets = [0, 16], sizes = [8, 8], strides = [1, 1]} : vector<8x96xf32> to vector<8x8xf32>
    %89 = vector.extract_strided_slice %45 {offsets = [0, 48], sizes = [8, 8], strides = [1, 1]} : vector<8x96xf32> to vector<8x8xf32>
    %90 = vector.extract_strided_slice %45 {offsets = [0, 80], sizes = [8, 8], strides = [1, 1]} : vector<8x96xf32> to vector<8x8xf32>
    %91 = tpu.transpose %89, [1, 0] : vector<8x8xf32> -> vector<8x8xf32>
    %cst_38 = arith.constant dense<0.000000e+00> : vector<8x8xf32>
    %92 = tpu.matmul %88, %91, %cst_38 {dimension_numbers = #tpu.dot_dimension_numbers<[1], [0], [0], [1], [0, 0, 1, 1], [], []>} : vector<8x8xf32>, vector<8x8xf32>, vector<8x8xf32> -> vector<8x8xf32>
    %cst_39 = arith.constant 0.353553385 : f32
    %93 = vector.broadcast %cst_39 : f32 to vector<8x8xf32>
    %94 = arith.mulf %92, %93 : vector<8x8xf32>
    %cst_40 = arith.constant -1.000000e+30 : f32
    %95 = vector.shape_cast %38 : vector<1x8xi1> to vector<1x8xi1>
    %96 = vector.broadcast %95 : vector<1x8xi1> to vector<8x8xi1>
    %97 = vector.broadcast %cst_40 : f32 to vector<8x8xf32>
    %98 = arith.select %96, %97, %94 : vector<8x8xi1>, vector<8x8xf32>
    %cst_41 = arith.constant dense<0xFF800000> : vector<8xf32>
    %99 = vector.multi_reduction <maximumf>, %98, %cst_41 [1] : vector<8x8xf32> to vector<8xf32>
    %100 = vector.shape_cast %99 : vector<8xf32> to vector<8x1xf32>
    %101 = vector.broadcast %100 : vector<8x1xf32> to vector<8x8xf32>
    %102 = arith.subf %98, %101 : vector<8x8xf32>
    %103 = math.exp %102 : vector<8x8xf32>
    %cst_42 = arith.constant dense<0.000000e+00> : vector<8xf32>
    %104 = vector.multi_reduction <add>, %103, %cst_42 [1] : vector<8x8xf32> to vector<8xf32>
    %105 = vector.shape_cast %104 : vector<8xf32> to vector<8x1xf32>
    %106 = vector.broadcast %105 : vector<8x1xf32> to vector<8x8xf32>
    %107 = arith.divf %103, %106 : vector<8x8xf32>
    %cst_43 = arith.constant dense<0.000000e+00> : vector<8x8xf32>
    %108 = tpu.matmul %107, %90, %cst_43 {dimension_numbers = #tpu.dot_dimension_numbers<[1], [0], [0], [1], [0, 0, 1, 1], [], []>} : vector<8x8xf32>, vector<8x8xf32>, vector<8x8xf32> -> vector<8x8xf32>
    %109 = vector.extract_strided_slice %45 {offsets = [0, 24], sizes = [8, 8], strides = [1, 1]} : vector<8x96xf32> to vector<8x8xf32>
    %110 = vector.extract_strided_slice %45 {offsets = [0, 56], sizes = [8, 8], strides = [1, 1]} : vector<8x96xf32> to vector<8x8xf32>
    %111 = vector.extract_strided_slice %45 {offsets = [0, 88], sizes = [8, 8], strides = [1, 1]} : vector<8x96xf32> to vector<8x8xf32>
    %112 = tpu.transpose %110, [1, 0] : vector<8x8xf32> -> vector<8x8xf32>
    %cst_44 = arith.constant dense<0.000000e+00> : vector<8x8xf32>
    %113 = tpu.matmul %109, %112, %cst_44 {dimension_numbers = #tpu.dot_dimension_numbers<[1], [0], [0], [1], [0, 0, 1, 1], [], []>} : vector<8x8xf32>, vector<8x8xf32>, vector<8x8xf32> -> vector<8x8xf32>
    %cst_45 = arith.constant 0.353553385 : f32
    %114 = vector.broadcast %cst_45 : f32 to vector<8x8xf32>
    %115 = arith.mulf %113, %114 : vector<8x8xf32>
    %cst_46 = arith.constant -1.000000e+30 : f32
    %116 = vector.shape_cast %38 : vector<1x8xi1> to vector<1x8xi1>
    %117 = vector.broadcast %116 : vector<1x8xi1> to vector<8x8xi1>
    %118 = vector.broadcast %cst_46 : f32 to vector<8x8xf32>
    %119 = arith.select %117, %118, %115 : vector<8x8xi1>, vector<8x8xf32>
    %cst_47 = arith.constant dense<0xFF800000> : vector<8xf32>
    %120 = vector.multi_reduction <maximumf>, %119, %cst_47 [1] : vector<8x8xf32> to vector<8xf32>
    %121 = vector.shape_cast %120 : vector<8xf32> to vector<8x1xf32>
    %122 = vector.broadcast %121 : vector<8x1xf32> to vector<8x8xf32>
    %123 = arith.subf %119, %122 : vector<8x8xf32>
    %124 = math.exp %123 : vector<8x8xf32>
    %cst_48 = arith.constant dense<0.000000e+00> : vector<8xf32>
    %125 = vector.multi_reduction <add>, %124, %cst_48 [1] : vector<8x8xf32> to vector<8xf32>
    %126 = vector.shape_cast %125 : vector<8xf32> to vector<8x1xf32>
    %127 = vector.broadcast %126 : vector<8x1xf32> to vector<8x8xf32>
    %128 = arith.divf %124, %127 : vector<8x8xf32>
    %cst_49 = arith.constant dense<0.000000e+00> : vector<8x8xf32>
    %129 = tpu.matmul %128, %111, %cst_49 {dimension_numbers = #tpu.dot_dimension_numbers<[1], [0], [0], [1], [0, 0, 1, 1], [], []>} : vector<8x8xf32>, vector<8x8xf32>, vector<8x8xf32> -> vector<8x8xf32>
    %130 = tpu.concatenate %66, %87, %108, %129 in 1 : vector<8x8xf32>, vector<8x8xf32>, vector<8x8xf32>, vector<8x8xf32> -> vector<8x32xf32>
    %c0_50 = arith.constant 0 : index
    %c0_51 = arith.constant 0 : index
    %c0_52 = arith.constant 0 : index
    %131 = vector.load %arg9[%c0_50, %c0_51, %c0_52] : memref<2x32x32xf32, #tpu.memory_space<vmem>>, vector<1x32x32xf32>
    %132 = vector.shape_cast %131 : vector<1x32x32xf32> to vector<32x32xf32>
    %cst_53 = arith.constant dense<0.000000e+00> : vector<8x32xf32>
    %133 = tpu.matmul %130, %132, %cst_53 {dimension_numbers = #tpu.dot_dimension_numbers<[1], [0], [0], [1], [0, 0, 1, 1], [], []>} : vector<8x32xf32>, vector<32x32xf32>, vector<8x32xf32> -> vector<8x32xf32>
    %c0_54 = arith.constant 0 : index
    %c0_55 = arith.constant 0 : index
    %c0_56 = arith.constant 0 : index
    %134 = vector.load %arg10[%c0_54, %c0_55, %c0_56] : memref<2x1x32xf32, #tpu.memory_space<vmem>>, vector<1x1x32xf32>
    %135 = vector.shape_cast %134 : vector<1x1x32xf32> to vector<1x32xf32>
    %136 = vector.broadcast %135 : vector<1x32xf32> to vector<8x32xf32>
    %137 = arith.addf %133, %136 : vector<8x32xf32>
    %138 = arith.addf %34, %137 : vector<8x32xf32>
    %c0_57 = arith.constant 0 : index
    %c0_58 = arith.constant 0 : index
    %c0_59 = arith.constant 0 : index
    %139 = vector.load %arg11[%c0_57, %c0_58, %c0_59] : memref<2x1x32xf32, #tpu.memory_space<vmem>>, vector<1x1x32xf32>
    %140 = vector.shape_cast %139 : vector<1x1x32xf32> to vector<1x32xf32>
    %c0_60 = arith.constant 0 : index
    %c0_61 = arith.constant 0 : index
    %c0_62 = arith.constant 0 : index
    %141 = vector.load %arg12[%c0_60, %c0_61, %c0_62] : memref<2x1x32xf32, #tpu.memory_space<vmem>>, vector<1x1x32xf32>
    %142 = vector.shape_cast %141 : vector<1x1x32xf32> to vector<1x32xf32>
    %cst_63 = arith.constant dense<0.000000e+00> : vector<8xf32>
    %143 = vector.multi_reduction <add>, %138, %cst_63 [1] : vector<8x32xf32> to vector<8xf32>
    %144 = vector.shape_cast %143 : vector<8xf32> to vector<8x1xf32>
    %cst_64 = arith.constant 3.200000e+01 : f32
    %145 = vector.broadcast %cst_64 : f32 to vector<8x1xf32>
    %146 = arith.divf %144, %145 : vector<8x1xf32>
    %147 = vector.broadcast %146 : vector<8x1xf32> to vector<8x32xf32>
    %148 = arith.subf %138, %147 : vector<8x32xf32>
    %149 = arith.mulf %148, %148 : vector<8x32xf32>
    %cst_65 = arith.constant dense<0.000000e+00> : vector<8xf32>
    %150 = vector.multi_reduction <add>, %149, %cst_65 [1] : vector<8x32xf32> to vector<8xf32>
    %151 = vector.shape_cast %150 : vector<8xf32> to vector<8x1xf32>
    %cst_66 = arith.constant 3.200000e+01 : f32
    %152 = vector.broadcast %cst_66 : f32 to vector<8x1xf32>
    %153 = arith.divf %151, %152 : vector<8x1xf32>
    %154 = vector.broadcast %146 : vector<8x1xf32> to vector<8x32xf32>
    %155 = arith.subf %138, %154 : vector<8x32xf32>
    %cst_67 = arith.constant 9.99999996E-13 : f32
    %156 = vector.broadcast %cst_67 : f32 to vector<8x1xf32>
    %157 = arith.addf %153, %156 : vector<8x1xf32>
    %158 = math.rsqrt %157 : vector<8x1xf32>
    %159 = vector.broadcast %158 : vector<8x1xf32> to vector<8x32xf32>
    %160 = arith.mulf %155, %159 : vector<8x32xf32>
    %161 = vector.broadcast %140 : vector<1x32xf32> to vector<8x32xf32>
    %162 = arith.mulf %160, %161 : vector<8x32xf32>
    %163 = vector.broadcast %142 : vector<1x32xf32> to vector<8x32xf32>
    %164 = arith.addf %162, %163 : vector<8x32xf32>
    %c0_68 = arith.constant 0 : index
    %c0_69 = arith.constant 0 : index
    %c0_70 = arith.constant 0 : index
    %165 = vector.load %arg13[%c0_68, %c0_69, %c0_70] : memref<2x32x64xf32, #tpu.memory_space<vmem>>, vector<1x32x64xf32>
    %166 = vector.shape_cast %165 : vector<1x32x64xf32> to vector<32x64xf32>
    %cst_71 = arith.constant dense<0.000000e+00> : vector<8x64xf32>
    %167 = tpu.matmul %164, %166, %cst_71 {dimension_numbers = #tpu.dot_dimension_numbers<[1], [0], [0], [1], [0, 0, 1, 1], [], []>} : vector<8x32xf32>, vector<32x64xf32>, vector<8x64xf32> -> vector<8x64xf32>
    %c0_72 = arith.constant 0 : index
    %c0_73 = arith.constant 0 : index
    %c0_74 = arith.constant 0 : index
    %168 = vector.load %arg14[%c0_72, %c0_73, %c0_74] : memref<2x1x64xf32, #tpu.memory_space<vmem>>, vector<1x1x64xf32>
    %169 = vector.shape_cast %168 : vector<1x1x64xf32> to vector<1x64xf32>
    %170 = vector.broadcast %169 : vector<1x64xf32> to vector<8x64xf32>
    %171 = arith.addf %167, %170 : vector<8x64xf32>
    %cst_75 = arith.constant 5.000000e-01 : f32
    %172 = vector.broadcast %cst_75 : f32 to vector<8x64xf32>
    %173 = arith.mulf %172, %171 : vector<8x64xf32>
    %cst_76 = arith.constant 4.471500e-02 : f32
    %174 = vector.broadcast %cst_76 : f32 to vector<8x64xf32>
    %175 = arith.mulf %174, %171 : vector<8x64xf32>
    %176 = arith.mulf %175, %171 : vector<8x64xf32>
    %177 = arith.mulf %176, %171 : vector<8x64xf32>
    %178 = arith.addf %171, %177 : vector<8x64xf32>
    %cst_77 = arith.constant 0.797884583 : f32
    %179 = vector.broadcast %cst_77 : f32 to vector<8x64xf32>
    %180 = arith.mulf %179, %178 : vector<8x64xf32>
    %181 = math.tanh %180 : vector<8x64xf32>
    %cst_78 = arith.constant 1.000000e+00 : f32
    %182 = vector.broadcast %cst_78 : f32 to vector<8x64xf32>
    %183 = arith.addf %182, %181 : vector<8x64xf32>
    %184 = arith.mulf %173, %183 : vector<8x64xf32>
    %c0_79 = arith.constant 0 : index
    %c0_80 = arith.constant 0 : index
    %c0_81 = arith.constant 0 : index
    %185 = vector.load %arg15[%c0_79, %c0_80, %c0_81] : memref<2x64x32xf32, #tpu.memory_space<vmem>>, vector<1x64x32xf32>
    %186 = vector.shape_cast %185 : vector<1x64x32xf32> to vector<64x32xf32>
    %cst_82 = arith.constant dense<0.000000e+00> : vector<8x32xf32>
    %187 = tpu.matmul %184, %186, %cst_82 {dimension_numbers = #tpu.dot_dimension_numbers<[1], [0], [0], [1], [0, 0, 1, 1], [], []>} : vector<8x64xf32>, vector<64x32xf32>, vector<8x32xf32> -> vector<8x32xf32>
    %c0_83 = arith.constant 0 : index
    %c0_84 = arith.constant 0 : index
    %c0_85 = arith.constant 0 : index
    %188 = vector.load %arg16[%c0_83, %c0_84, %c0_85] : memref<2x1x32xf32, #tpu.memory_space<vmem>>, vector<1x1x32xf32>
    %189 = vector.shape_cast %188 : vector<1x1x32xf32> to vector<1x32xf32>
    %190 = vector.broadcast %189 : vector<1x32xf32> to vector<8x32xf32>
    %191 = arith.addf %187, %190 : vector<8x32xf32>
    %192 = arith.addf %164, %191 : vector<8x32xf32>
    %c0_86 = arith.constant 0 : index
    %c0_87 = arith.constant 0 : index
    %c0_88 = arith.constant 0 : index
    %193 = vector.load %arg17[%c0_86, %c0_87, %c0_88] : memref<2x1x32xf32, #tpu.memory_space<vmem>>, vector<1x1x32xf32>
    %194 = vector.shape_cast %193 : vector<1x1x32xf32> to vector<1x32xf32>
    %c0_89 = arith.constant 0 : index
    %c0_90 = arith.constant 0 : index
    %c0_91 = arith.constant 0 : index
    %195 = vector.load %arg18[%c0_89, %c0_90, %c0_91] : memref<2x1x32xf32, #tpu.memory_space<vmem>>, vector<1x1x32xf32>
    %196 = vector.shape_cast %195 : vector<1x1x32xf32> to vector<1x32xf32>
    %cst_92 = arith.constant dense<0.000000e+00> : vector<8xf32>
    %197 = vector.multi_reduction <add>, %192, %cst_92 [1] : vector<8x32xf32> to vector<8xf32>
    %198 = vector.shape_cast %197 : vector<8xf32> to vector<8x1xf32>
    %cst_93 = arith.constant 3.200000e+01 : f32
    %199 = vector.broadcast %cst_93 : f32 to vector<8x1xf32>
    %200 = arith.divf %198, %199 : vector<8x1xf32>
    %201 = vector.broadcast %200 : vector<8x1xf32> to vector<8x32xf32>
    %202 = arith.subf %192, %201 : vector<8x32xf32>
    %203 = arith.mulf %202, %202 : vector<8x32xf32>
    %cst_94 = arith.constant dense<0.000000e+00> : vector<8xf32>
    %204 = vector.multi_reduction <add>, %203, %cst_94 [1] : vector<8x32xf32> to vector<8xf32>
    %205 = vector.shape_cast %204 : vector<8xf32> to vector<8x1xf32>
    %cst_95 = arith.constant 3.200000e+01 : f32
    %206 = vector.broadcast %cst_95 : f32 to vector<8x1xf32>
    %207 = arith.divf %205, %206 : vector<8x1xf32>
    %208 = vector.broadcast %200 : vector<8x1xf32> to vector<8x32xf32>
    %209 = arith.subf %192, %208 : vector<8x32xf32>
    %cst_96 = arith.constant 9.99999996E-13 : f32
    %210 = vector.broadcast %cst_96 : f32 to vector<8x1xf32>
    %211 = arith.addf %207, %210 : vector<8x1xf32>
    %212 = math.rsqrt %211 : vector<8x1xf32>
    %213 = vector.broadcast %212 : vector<8x1xf32> to vector<8x32xf32>
    %214 = arith.mulf %209, %213 : vector<8x32xf32>
    %215 = vector.broadcast %194 : vector<1x32xf32> to vector<8x32xf32>
    %216 = arith.mulf %214, %215 : vector<8x32xf32>
    %217 = vector.broadcast %196 : vector<1x32xf32> to vector<8x32xf32>
    %218 = arith.addf %216, %217 : vector<8x32xf32>
    %c1 = arith.constant 1 : index
    %c0_97 = arith.constant 0 : index
    %c0_98 = arith.constant 0 : index
    %219 = vector.load %arg7[%c1, %c0_97, %c0_98] : memref<2x32x96xf32, #tpu.memory_space<vmem>>, vector<1x32x96xf32>
    %220 = vector.shape_cast %219 : vector<1x32x96xf32> to vector<32x96xf32>
    %cst_99 = arith.constant dense<0.000000e+00> : vector<8x96xf32>
    %221 = tpu.matmul %218, %220, %cst_99 {dimension_numbers = #tpu.dot_dimension_numbers<[1], [0], [0], [1], [0, 0, 1, 1], [], []>} : vector<8x32xf32>, vector<32x96xf32>, vector<8x96xf32> -> vector<8x96xf32>
    %c1_100 = arith.constant 1 : index
    %c0_101 = arith.constant 0 : index
    %c0_102 = arith.constant 0 : index
    %222 = vector.load %arg8[%c1_100, %c0_101, %c0_102] : memref<2x1x96xf32, #tpu.memory_space<vmem>>, vector<1x1x96xf32>
    %223 = vector.shape_cast %222 : vector<1x1x96xf32> to vector<1x96xf32>
    %224 = vector.broadcast %223 : vector<1x96xf32> to vector<8x96xf32>
    %225 = arith.addf %221, %224 : vector<8x96xf32>
    %226 = vector.extract_strided_slice %225 {offsets = [0, 0], sizes = [8, 8], strides = [1, 1]} : vector<8x96xf32> to vector<8x8xf32>
    %227 = vector.extract_strided_slice %225 {offsets = [0, 32], sizes = [8, 8], strides = [1, 1]} : vector<8x96xf32> to vector<8x8xf32>
    %228 = vector.extract_strided_slice %225 {offsets = [0, 64], sizes = [8, 8], strides = [1, 1]} : vector<8x96xf32> to vector<8x8xf32>
    %229 = tpu.transpose %227, [1, 0] : vector<8x8xf32> -> vector<8x8xf32>
    %cst_103 = arith.constant dense<0.000000e+00> : vector<8x8xf32>
    %230 = tpu.matmul %226, %229, %cst_103 {dimension_numbers = #tpu.dot_dimension_numbers<[1], [0], [0], [1], [0, 0, 1, 1], [], []>} : vector<8x8xf32>, vector<8x8xf32>, vector<8x8xf32> -> vector<8x8xf32>
    %cst_104 = arith.constant 0.353553385 : f32
    %231 = vector.broadcast %cst_104 : f32 to vector<8x8xf32>
    %232 = arith.mulf %230, %231 : vector<8x8xf32>
    %cst_105 = arith.constant -1.000000e+30 : f32
    %233 = vector.shape_cast %38 : vector<1x8xi1> to vector<1x8xi1>
    %234 = vector.broadcast %233 : vector<1x8xi1> to vector<8x8xi1>
    %235 = vector.broadcast %cst_105 : f32 to vector<8x8xf32>
    %236 = arith.select %234, %235, %232 : vector<8x8xi1>, vector<8x8xf32>
    %cst_106 = arith.constant dense<0xFF800000> : vector<8xf32>
    %237 = vector.multi_reduction <maximumf>, %236, %cst_106 [1] : vector<8x8xf32> to vector<8xf32>
    %238 = vector.shape_cast %237 : vector<8xf32> to vector<8x1xf32>
    %239 = vector.broadcast %238 : vector<8x1xf32> to vector<8x8xf32>
    %240 = arith.subf %236, %239 : vector<8x8xf32>
    %241 = math.exp %240 : vector<8x8xf32>
    %cst_107 = arith.constant dense<0.000000e+00> : vector<8xf32>
    %242 = vector.multi_reduction <add>, %241, %cst_107 [1] : vector<8x8xf32> to vector<8xf32>
    %243 = vector.shape_cast %242 : vector<8xf32> to vector<8x1xf32>
    %244 = vector.broadcast %243 : vector<8x1xf32> to vector<8x8xf32>
    %245 = arith.divf %241, %244 : vector<8x8xf32>
    %cst_108 = arith.constant dense<0.000000e+00> : vector<8x8xf32>
    %246 = tpu.matmul %245, %228, %cst_108 {dimension_numbers = #tpu.dot_dimension_numbers<[1], [0], [0], [1], [0, 0, 1, 1], [], []>} : vector<8x8xf32>, vector<8x8xf32>, vector<8x8xf32> -> vector<8x8xf32>
    %247 = vector.extract_strided_slice %225 {offsets = [0, 8], sizes = [8, 8], strides = [1, 1]} : vector<8x96xf32> to vector<8x8xf32>
    %248 = vector.extract_strided_slice %225 {offsets = [0, 40], sizes = [8, 8], strides = [1, 1]} : vector<8x96xf32> to vector<8x8xf32>
    %249 = vector.extract_strided_slice %225 {offsets = [0, 72], sizes = [8, 8], strides = [1, 1]} : vector<8x96xf32> to vector<8x8xf32>
    %250 = tpu.transpose %248, [1, 0] : vector<8x8xf32> -> vector<8x8xf32>
    %cst_109 = arith.constant dense<0.000000e+00> : vector<8x8xf32>
    %251 = tpu.matmul %247, %250, %cst_109 {dimension_numbers = #tpu.dot_dimension_numbers<[1], [0], [0], [1], [0, 0, 1, 1], [], []>} : vector<8x8xf32>, vector<8x8xf32>, vector<8x8xf32> -> vector<8x8xf32>
    %cst_110 = arith.constant 0.353553385 : f32
    %252 = vector.broadcast %cst_110 : f32 to vector<8x8xf32>
    %253 = arith.mulf %251, %252 : vector<8x8xf32>
    %cst_111 = arith.constant -1.000000e+30 : f32
    %254 = vector.shape_cast %38 : vector<1x8xi1> to vector<1x8xi1>
    %255 = vector.broadcast %254 : vector<1x8xi1> to vector<8x8xi1>
    %256 = vector.broadcast %cst_111 : f32 to vector<8x8xf32>
    %257 = arith.select %255, %256, %253 : vector<8x8xi1>, vector<8x8xf32>
    %cst_112 = arith.constant dense<0xFF800000> : vector<8xf32>
    %258 = vector.multi_reduction <maximumf>, %257, %cst_112 [1] : vector<8x8xf32> to vector<8xf32>
    %259 = vector.shape_cast %258 : vector<8xf32> to vector<8x1xf32>
    %260 = vector.broadcast %259 : vector<8x1xf32> to vector<8x8xf32>
    %261 = arith.subf %257, %260 : vector<8x8xf32>
    %262 = math.exp %261 : vector<8x8xf32>
    %cst_113 = arith.constant dense<0.000000e+00> : vector<8xf32>
    %263 = vector.multi_reduction <add>, %262, %cst_113 [1] : vector<8x8xf32> to vector<8xf32>
    %264 = vector.shape_cast %263 : vector<8xf32> to vector<8x1xf32>
    %265 = vector.broadcast %264 : vector<8x1xf32> to vector<8x8xf32>
    %266 = arith.divf %262, %265 : vector<8x8xf32>
    %cst_114 = arith.constant dense<0.000000e+00> : vector<8x8xf32>
    %267 = tpu.matmul %266, %249, %cst_114 {dimension_numbers = #tpu.dot_dimension_numbers<[1], [0], [0], [1], [0, 0, 1, 1], [], []>} : vector<8x8xf32>, vector<8x8xf32>, vector<8x8xf32> -> vector<8x8xf32>
    %268 = vector.extract_strided_slice %225 {offsets = [0, 16], sizes = [8, 8], strides = [1, 1]} : vector<8x96xf32> to vector<8x8xf32>
    %269 = vector.extract_strided_slice %225 {offsets = [0, 48], sizes = [8, 8], strides = [1, 1]} : vector<8x96xf32> to vector<8x8xf32>
    %270 = vector.extract_strided_slice %225 {offsets = [0, 80], sizes = [8, 8], strides = [1, 1]} : vector<8x96xf32> to vector<8x8xf32>
    %271 = tpu.transpose %269, [1, 0] : vector<8x8xf32> -> vector<8x8xf32>
    %cst_115 = arith.constant dense<0.000000e+00> : vector<8x8xf32>
    %272 = tpu.matmul %268, %271, %cst_115 {dimension_numbers = #tpu.dot_dimension_numbers<[1], [0], [0], [1], [0, 0, 1, 1], [], []>} : vector<8x8xf32>, vector<8x8xf32>, vector<8x8xf32> -> vector<8x8xf32>
    %cst_116 = arith.constant 0.353553385 : f32
    %273 = vector.broadcast %cst_116 : f32 to vector<8x8xf32>
    %274 = arith.mulf %272, %273 : vector<8x8xf32>
    %cst_117 = arith.constant -1.000000e+30 : f32
    %275 = vector.shape_cast %38 : vector<1x8xi1> to vector<1x8xi1>
    %276 = vector.broadcast %275 : vector<1x8xi1> to vector<8x8xi1>
    %277 = vector.broadcast %cst_117 : f32 to vector<8x8xf32>
    %278 = arith.select %276, %277, %274 : vector<8x8xi1>, vector<8x8xf32>
    %cst_118 = arith.constant dense<0xFF800000> : vector<8xf32>
    %279 = vector.multi_reduction <maximumf>, %278, %cst_118 [1] : vector<8x8xf32> to vector<8xf32>
    %280 = vector.shape_cast %279 : vector<8xf32> to vector<8x1xf32>
    %281 = vector.broadcast %280 : vector<8x1xf32> to vector<8x8xf32>
    %282 = arith.subf %278, %281 : vector<8x8xf32>
    %283 = math.exp %282 : vector<8x8xf32>
    %cst_119 = arith.constant dense<0.000000e+00> : vector<8xf32>
    %284 = vector.multi_reduction <add>, %283, %cst_119 [1] : vector<8x8xf32> to vector<8xf32>
    %285 = vector.shape_cast %284 : vector<8xf32> to vector<8x1xf32>
    %286 = vector.broadcast %285 : vector<8x1xf32> to vector<8x8xf32>
    %287 = arith.divf %283, %286 : vector<8x8xf32>
    %cst_120 = arith.constant dense<0.000000e+00> : vector<8x8xf32>
    %288 = tpu.matmul %287, %270, %cst_120 {dimension_numbers = #tpu.dot_dimension_numbers<[1], [0], [0], [1], [0, 0, 1, 1], [], []>} : vector<8x8xf32>, vector<8x8xf32>, vector<8x8xf32> -> vector<8x8xf32>
    %289 = vector.extract_strided_slice %225 {offsets = [0, 24], sizes = [8, 8], strides = [1, 1]} : vector<8x96xf32> to vector<8x8xf32>
    %290 = vector.extract_strided_slice %225 {offsets = [0, 56], sizes = [8, 8], strides = [1, 1]} : vector<8x96xf32> to vector<8x8xf32>
    %291 = vector.extract_strided_slice %225 {offsets = [0, 88], sizes = [8, 8], strides = [1, 1]} : vector<8x96xf32> to vector<8x8xf32>
    %292 = tpu.transpose %290, [1, 0] : vector<8x8xf32> -> vector<8x8xf32>
    %cst_121 = arith.constant dense<0.000000e+00> : vector<8x8xf32>
    %293 = tpu.matmul %289, %292, %cst_121 {dimension_numbers = #tpu.dot_dimension_numbers<[1], [0], [0], [1], [0, 0, 1, 1], [], []>} : vector<8x8xf32>, vector<8x8xf32>, vector<8x8xf32> -> vector<8x8xf32>
    %cst_122 = arith.constant 0.353553385 : f32
    %294 = vector.broadcast %cst_122 : f32 to vector<8x8xf32>
    %295 = arith.mulf %293, %294 : vector<8x8xf32>
    %cst_123 = arith.constant -1.000000e+30 : f32
    %296 = vector.shape_cast %38 : vector<1x8xi1> to vector<1x8xi1>
    %297 = vector.broadcast %296 : vector<1x8xi1> to vector<8x8xi1>
    %298 = vector.broadcast %cst_123 : f32 to vector<8x8xf32>
    %299 = arith.select %297, %298, %295 : vector<8x8xi1>, vector<8x8xf32>
    %cst_124 = arith.constant dense<0xFF800000> : vector<8xf32>
    %300 = vector.multi_reduction <maximumf>, %299, %cst_124 [1] : vector<8x8xf32> to vector<8xf32>
    %301 = vector.shape_cast %300 : vector<8xf32> to vector<8x1xf32>
    %302 = vector.broadcast %301 : vector<8x1xf32> to vector<8x8xf32>
    %303 = arith.subf %299, %302 : vector<8x8xf32>
    %304 = math.exp %303 : vector<8x8xf32>
    %cst_125 = arith.constant dense<0.000000e+00> : vector<8xf32>
    %305 = vector.multi_reduction <add>, %304, %cst_125 [1] : vector<8x8xf32> to vector<8xf32>
    %306 = vector.shape_cast %305 : vector<8xf32> to vector<8x1xf32>
    %307 = vector.broadcast %306 : vector<8x1xf32> to vector<8x8xf32>
    %308 = arith.divf %304, %307 : vector<8x8xf32>
    %cst_126 = arith.constant dense<0.000000e+00> : vector<8x8xf32>
    %309 = tpu.matmul %308, %291, %cst_126 {dimension_numbers = #tpu.dot_dimension_numbers<[1], [0], [0], [1], [0, 0, 1, 1], [], []>} : vector<8x8xf32>, vector<8x8xf32>, vector<8x8xf32> -> vector<8x8xf32>
    %310 = tpu.concatenate %246, %267, %288, %309 in 1 : vector<8x8xf32>, vector<8x8xf32>, vector<8x8xf32>, vector<8x8xf32> -> vector<8x32xf32>
    %c1_127 = arith.constant 1 : index
    %c0_128 = arith.constant 0 : index
    %c0_129 = arith.constant 0 : index
    %311 = vector.load %arg9[%c1_127, %c0_128, %c0_129] : memref<2x32x32xf32, #tpu.memory_space<vmem>>, vector<1x32x32xf32>
    %312 = vector.shape_cast %311 : vector<1x32x32xf32> to vector<32x32xf32>
    %cst_130 = arith.constant dense<0.000000e+00> : vector<8x32xf32>
    %313 = tpu.matmul %310, %312, %cst_130 {dimension_numbers = #tpu.dot_dimension_numbers<[1], [0], [0], [1], [0, 0, 1, 1], [], []>} : vector<8x32xf32>, vector<32x32xf32>, vector<8x32xf32> -> vector<8x32xf32>
    %c1_131 = arith.constant 1 : index
    %c0_132 = arith.constant 0 : index
    %c0_133 = arith.constant 0 : index
    %314 = vector.load %arg10[%c1_131, %c0_132, %c0_133] : memref<2x1x32xf32, #tpu.memory_space<vmem>>, vector<1x1x32xf32>
    %315 = vector.shape_cast %314 : vector<1x1x32xf32> to vector<1x32xf32>
    %316 = vector.broadcast %315 : vector<1x32xf32> to vector<8x32xf32>
    %317 = arith.addf %313, %316 : vector<8x32xf32>
    %318 = arith.addf %218, %317 : vector<8x32xf32>
    %c1_134 = arith.constant 1 : index
    %c0_135 = arith.constant 0 : index
    %c0_136 = arith.constant 0 : index
    %319 = vector.load %arg11[%c1_134, %c0_135, %c0_136] : memref<2x1x32xf32, #tpu.memory_space<vmem>>, vector<1x1x32xf32>
    %320 = vector.shape_cast %319 : vector<1x1x32xf32> to vector<1x32xf32>
    %c1_137 = arith.constant 1 : index
    %c0_138 = arith.constant 0 : index
    %c0_139 = arith.constant 0 : index
    %321 = vector.load %arg12[%c1_137, %c0_138, %c0_139] : memref<2x1x32xf32, #tpu.memory_space<vmem>>, vector<1x1x32xf32>
    %322 = vector.shape_cast %321 : vector<1x1x32xf32> to vector<1x32xf32>
    %cst_140 = arith.constant dense<0.000000e+00> : vector<8xf32>
    %323 = vector.multi_reduction <add>, %318, %cst_140 [1] : vector<8x32xf32> to vector<8xf32>
    %324 = vector.shape_cast %323 : vector<8xf32> to vector<8x1xf32>
    %cst_141 = arith.constant 3.200000e+01 : f32
    %325 = vector.broadcast %cst_141 : f32 to vector<8x1xf32>
    %326 = arith.divf %324, %325 : vector<8x1xf32>
    %327 = vector.broadcast %326 : vector<8x1xf32> to vector<8x32xf32>
    %328 = arith.subf %318, %327 : vector<8x32xf32>
    %329 = arith.mulf %328, %328 : vector<8x32xf32>
    %cst_142 = arith.constant dense<0.000000e+00> : vector<8xf32>
    %330 = vector.multi_reduction <add>, %329, %cst_142 [1] : vector<8x32xf32> to vector<8xf32>
    %331 = vector.shape_cast %330 : vector<8xf32> to vector<8x1xf32>
    %cst_143 = arith.constant 3.200000e+01 : f32
    %332 = vector.broadcast %cst_143 : f32 to vector<8x1xf32>
    %333 = arith.divf %331, %332 : vector<8x1xf32>
    %334 = vector.broadcast %326 : vector<8x1xf32> to vector<8x32xf32>
    %335 = arith.subf %318, %334 : vector<8x32xf32>
    %cst_144 = arith.constant 9.99999996E-13 : f32
    %336 = vector.broadcast %cst_144 : f32 to vector<8x1xf32>
    %337 = arith.addf %333, %336 : vector<8x1xf32>
    %338 = math.rsqrt %337 : vector<8x1xf32>
    %339 = vector.broadcast %338 : vector<8x1xf32> to vector<8x32xf32>
    %340 = arith.mulf %335, %339 : vector<8x32xf32>
    %341 = vector.broadcast %320 : vector<1x32xf32> to vector<8x32xf32>
    %342 = arith.mulf %340, %341 : vector<8x32xf32>
    %343 = vector.broadcast %322 : vector<1x32xf32> to vector<8x32xf32>
    %344 = arith.addf %342, %343 : vector<8x32xf32>
    %c1_145 = arith.constant 1 : index
    %c0_146 = arith.constant 0 : index
    %c0_147 = arith.constant 0 : index
    %345 = vector.load %arg13[%c1_145, %c0_146, %c0_147] : memref<2x32x64xf32, #tpu.memory_space<vmem>>, vector<1x32x64xf32>
    %346 = vector.shape_cast %345 : vector<1x32x64xf32> to vector<32x64xf32>
    %cst_148 = arith.constant dense<0.000000e+00> : vector<8x64xf32>
    %347 = tpu.matmul %344, %346, %cst_148 {dimension_numbers = #tpu.dot_dimension_numbers<[1], [0], [0], [1], [0, 0, 1, 1], [], []>} : vector<8x32xf32>, vector<32x64xf32>, vector<8x64xf32> -> vector<8x64xf32>
    %c1_149 = arith.constant 1 : index
    %c0_150 = arith.constant 0 : index
    %c0_151 = arith.constant 0 : index
    %348 = vector.load %arg14[%c1_149, %c0_150, %c0_151] : memref<2x1x64xf32, #tpu.memory_space<vmem>>, vector<1x1x64xf32>
    %349 = vector.shape_cast %348 : vector<1x1x64xf32> to vector<1x64xf32>
    %350 = vector.broadcast %349 : vector<1x64xf32> to vector<8x64xf32>
    %351 = arith.addf %347, %350 : vector<8x64xf32>
    %cst_152 = arith.constant 5.000000e-01 : f32
    %352 = vector.broadcast %cst_152 : f32 to vector<8x64xf32>
    %353 = arith.mulf %352, %351 : vector<8x64xf32>
    %cst_153 = arith.constant 4.471500e-02 : f32
    %354 = vector.broadcast %cst_153 : f32 to vector<8x64xf32>
    %355 = arith.mulf %354, %351 : vector<8x64xf32>
    %356 = arith.mulf %355, %351 : vector<8x64xf32>
    %357 = arith.mulf %356, %351 : vector<8x64xf32>
    %358 = arith.addf %351, %357 : vector<8x64xf32>
    %cst_154 = arith.constant 0.797884583 : f32
    %359 = vector.broadcast %cst_154 : f32 to vector<8x64xf32>
    %360 = arith.mulf %359, %358 : vector<8x64xf32>
    %361 = math.tanh %360 : vector<8x64xf32>
    %cst_155 = arith.constant 1.000000e+00 : f32
    %362 = vector.broadcast %cst_155 : f32 to vector<8x64xf32>
    %363 = arith.addf %362, %361 : vector<8x64xf32>
    %364 = arith.mulf %353, %363 : vector<8x64xf32>
    %c1_156 = arith.constant 1 : index
    %c0_157 = arith.constant 0 : index
    %c0_158 = arith.constant 0 : index
    %365 = vector.load %arg15[%c1_156, %c0_157, %c0_158] : memref<2x64x32xf32, #tpu.memory_space<vmem>>, vector<1x64x32xf32>
    %366 = vector.shape_cast %365 : vector<1x64x32xf32> to vector<64x32xf32>
    %cst_159 = arith.constant dense<0.000000e+00> : vector<8x32xf32>
    %367 = tpu.matmul %364, %366, %cst_159 {dimension_numbers = #tpu.dot_dimension_numbers<[1], [0], [0], [1], [0, 0, 1, 1], [], []>} : vector<8x64xf32>, vector<64x32xf32>, vector<8x32xf32> -> vector<8x32xf32>
    %c1_160 = arith.constant 1 : index
    %c0_161 = arith.constant 0 : index
    %c0_162 = arith.constant 0 : index
    %368 = vector.load %arg16[%c1_160, %c0_161, %c0_162] : memref<2x1x32xf32, #tpu.memory_space<vmem>>, vector<1x1x32xf32>
    %369 = vector.shape_cast %368 : vector<1x1x32xf32> to vector<1x32xf32>
    %370 = vector.broadcast %369 : vector<1x32xf32> to vector<8x32xf32>
    %371 = arith.addf %367, %370 : vector<8x32xf32>
    %372 = arith.addf %344, %371 : vector<8x32xf32>
    %c1_163 = arith.constant 1 : index
    %c0_164 = arith.constant 0 : index
    %c0_165 = arith.constant 0 : index
    %373 = vector.load %arg17[%c1_163, %c0_164, %c0_165] : memref<2x1x32xf32, #tpu.memory_space<vmem>>, vector<1x1x32xf32>
    %374 = vector.shape_cast %373 : vector<1x1x32xf32> to vector<1x32xf32>
    %c1_166 = arith.constant 1 : index
    %c0_167 = arith.constant 0 : index
    %c0_168 = arith.constant 0 : index
    %375 = vector.load %arg18[%c1_166, %c0_167, %c0_168] : memref<2x1x32xf32, #tpu.memory_space<vmem>>, vector<1x1x32xf32>
    %376 = vector.shape_cast %375 : vector<1x1x32xf32> to vector<1x32xf32>
    %cst_169 = arith.constant dense<0.000000e+00> : vector<8xf32>
    %377 = vector.multi_reduction <add>, %372, %cst_169 [1] : vector<8x32xf32> to vector<8xf32>
    %378 = vector.shape_cast %377 : vector<8xf32> to vector<8x1xf32>
    %cst_170 = arith.constant 3.200000e+01 : f32
    %379 = vector.broadcast %cst_170 : f32 to vector<8x1xf32>
    %380 = arith.divf %378, %379 : vector<8x1xf32>
    %381 = vector.broadcast %380 : vector<8x1xf32> to vector<8x32xf32>
    %382 = arith.subf %372, %381 : vector<8x32xf32>
    %383 = arith.mulf %382, %382 : vector<8x32xf32>
    %cst_171 = arith.constant dense<0.000000e+00> : vector<8xf32>
    %384 = vector.multi_reduction <add>, %383, %cst_171 [1] : vector<8x32xf32> to vector<8xf32>
    %385 = vector.shape_cast %384 : vector<8xf32> to vector<8x1xf32>
    %cst_172 = arith.constant 3.200000e+01 : f32
    %386 = vector.broadcast %cst_172 : f32 to vector<8x1xf32>
    %387 = arith.divf %385, %386 : vector<8x1xf32>
    %388 = vector.broadcast %380 : vector<8x1xf32> to vector<8x32xf32>
    %389 = arith.subf %372, %388 : vector<8x32xf32>
    %cst_173 = arith.constant 9.99999996E-13 : f32
    %390 = vector.broadcast %cst_173 : f32 to vector<8x1xf32>
    %391 = arith.addf %387, %390 : vector<8x1xf32>
    %392 = math.rsqrt %391 : vector<8x1xf32>
    %393 = vector.broadcast %392 : vector<8x1xf32> to vector<8x32xf32>
    %394 = arith.mulf %389, %393 : vector<8x32xf32>
    %395 = vector.broadcast %374 : vector<1x32xf32> to vector<8x32xf32>
    %396 = arith.mulf %394, %395 : vector<8x32xf32>
    %397 = vector.broadcast %376 : vector<1x32xf32> to vector<8x32xf32>
    %398 = arith.addf %396, %397 : vector<8x32xf32>
    %cst_174 = arith.constant dense<0.000000e+00> : vector<32xf32>
    %399 = vector.multi_reduction <add>, %398, %cst_174 [0] : vector<8x32xf32> to vector<32xf32>
    %400 = vector.shape_cast %399 : vector<32xf32> to vector<1x32xf32>
    %cst_175 = arith.constant 8.000000e+00 : f32
    %401 = vector.broadcast %cst_175 : f32 to vector<1x32xf32>
    %402 = arith.divf %400, %401 : vector<1x32xf32>
    %c0_176 = arith.constant 0 : index
    %c0_177 = arith.constant 0 : index
    %c0_178 = arith.constant 0 : index
    %403 = vector.load %arg19[%c0_176, %c0_177, %c0_178] : memref<1x1x32xf32, #tpu.memory_space<vmem>>, vector<1x1x32xf32>
    %404 = vector.shape_cast %403 : vector<1x1x32xf32> to vector<1x32xf32>
    %405 = vector.shape_cast %402 : vector<1x32xf32> to vector<1x1x32xf32>
    tpu.vector_store %arg19[%c0_176, %c0_177, %c0_178], %405 {strides = array<i32>} : memref<1x1x32xf32, #tpu.memory_space<vmem>>, vector<1x1x32xf32>,
    return
  }
  func.func @transform_0(%arg0: i32) -> (i32, i32, i32) {
    %c0_i32 = arith.constant 0 : i32
    %c0_i32_0 = arith.constant 0 : i32
    %c0_i32_1 = arith.constant 0 : i32
    return %arg0, %c0_i32, %c0_i32_0 : i32, i32, i32
  }
  func.func @transform_1(%arg0: i32) -> (i32, i32, i32) {
    %c0_i32 = arith.constant 0 : i32
    %c0_i32_0 = arith.constant 0 : i32
    %c0_i32_1 = arith.constant 0 : i32
    return %arg0, %c0_i32, %c0_i32_0 : i32, i32, i32
  }
  func.func @transform_2(%arg0: i32) -> (i32, i32) {
    %c0_i32 = arith.constant 0 : i32
    %c0_i32_0 = arith.constant 0 : i32
    %c0_i32_1 = arith.constant 0 : i32
    return %c0_i32, %c0_i32_0 : i32, i32
  }
  func.func @transform_3(%arg0: i32) -> (i32, i32) {
    %c0_i32 = arith.constant 0 : i32
    %c0_i32_0 = arith.constant 0 : i32
    %c0_i32_1 = arith.constant 0 : i32
    return %c0_i32, %c0_i32_0 : i32, i32
  }
  func.func @transform_4(%arg0: i32) -> (i32, i32) {
    %c0_i32 = arith.constant 0 : i32
    %c0_i32_0 = arith.constant 0 : i32
    %c0_i32_1 = arith.constant 0 : i32
    return %c0_i32, %c0_i32_0 : i32, i32
  }
  func.func @transform_5(%arg0: i32) -> (i32, i32) {
    %c0_i32 = arith.constant 0 : i32
    %c0_i32_0 = arith.constant 0 : i32
    %c0_i32_1 = arith.constant 0 : i32
    return %c0_i32, %c0_i32_0 : i32, i32
  }
  func.func @transform_6(%arg0: i32) -> (i32, i32, i32) {
    %c0_i32 = arith.constant 0 : i32
    %c0_i32_0 = arith.constant 0 : i32
    %c0_i32_1 = arith.constant 0 : i32
    %c0_i32_2 = arith.constant 0 : i32
    return %c0_i32, %c0_i32_0, %c0_i32_1 : i32, i32, i32
  }
  func.func @transform_7(%arg0: i32) -> (i32, i32, i32) {
    %c0_i32 = arith.constant 0 : i32
    %c0_i32_0 = arith.constant 0 : i32
    %c0_i32_1 = arith.constant 0 : i32
    %c0_i32_2 = arith.constant 0 : i32
    return %c0_i32, %c0_i32_0, %c0_i32_1 : i32, i32, i32
  }
  func.func @transform_8(%arg0: i32) -> (i32, i32, i32) {
    %c0_i32 = arith.constant 0 : i32
    %c0_i32_0 = arith.constant 0 : i32
    %c0_i32_1 = arith.constant 0 : i32
    %c0_i32_2 = arith.constant 0 : i32
    return %c0_i32, %c0_i32_0, %c0_i32_1 : i32, i32, i32
  }
  func.func @transform_9(%arg0: i32) -> (i32, i32, i32) {
    %c0_i32 = arith.constant 0 : i32
    %c0_i32_0 = arith.constant 0 : i32
    %c0_i32_1 = arith.constant 0 : i32
    %c0_i32_2 = arith.constant 0 : i32
    return %c0_i32, %c0_i32_0, %c0_i32_1 : i32, i32, i32
  }
  func.func @transform_10(%arg0: i32) -> (i32, i32, i32) {
    %c0_i32 = arith.constant 0 : i32
    %c0_i32_0 = arith.constant 0 : i32
    %c0_i32_1 = arith.constant 0 : i32
    %c0_i32_2 = arith.constant 0 : i32
    return %c0_i32, %c0_i32_0, %c0_i32_1 : i32, i32, i32
  }
  func.func @transform_11(%arg0: i32) -> (i32, i32, i32) {
    %c0_i32 = arith.constant 0 : i32
    %c0_i32_0 = arith.constant 0 : i32
    %c0_i32_1 = arith.constant 0 : i32
    %c0_i32_2 = arith.constant 0 : i32
    return %c0_i32, %c0_i32_0, %c0_i32_1 : i32, i32, i32
  }
  func.func @transform_12(%arg0: i32) -> (i32, i32, i32) {
    %c0_i32 = arith.constant 0 : i32
    %c0_i32_0 = arith.constant 0 : i32
    %c0_i32_1 = arith.constant 0 : i32
    %c0_i32_2 = arith.constant 0 : i32
    return %c0_i32, %c0_i32_0, %c0_i32_1 : i32, i32, i32
  }
  func.func @transform_13(%arg0: i32) -> (i32, i32, i32) {
    %c0_i32 = arith.constant 0 : i32
    %c0_i32_0 = arith.constant 0 : i32
    %c0_i32_1 = arith.constant 0 : i32
    %c0_i32_2 = arith.constant 0 : i32
    return %c0_i32, %c0_i32_0, %c0_i32_1 : i32, i32, i32
  }
  func.func @transform_14(%arg0: i32) -> (i32, i32, i32) {
    %c0_i32 = arith.constant 0 : i32
    %c0_i32_0 = arith.constant 0 : i32
    %c0_i32_1 = arith.constant 0 : i32
    %c0_i32_2 = arith.constant 0 : i32
    return %c0_i32, %c0_i32_0, %c0_i32_1 : i32, i32, i32
  }
  func.func @transform_15(%arg0: i32) -> (i32, i32, i32) {
    %c0_i32 = arith.constant 0 : i32
    %c0_i32_0 = arith.constant 0 : i32
    %c0_i32_1 = arith.constant 0 : i32
    %c0_i32_2 = arith.constant 0 : i32
    return %c0_i32, %c0_i32_0, %c0_i32_1 : i32, i32, i32
  }
  func.func @transform_16(%arg0: i32) -> (i32, i32, i32) {
    %c0_i32 = arith.constant 0 : i32
    %c0_i32_0 = arith.constant 0 : i32
    %c0_i32_1 = arith.constant 0 : i32
    %c0_i32_2 = arith.constant 0 : i32
    return %c0_i32, %c0_i32_0, %c0_i32_1 : i32, i32, i32
  }
  func.func @transform_17(%arg0: i32) -> (i32, i32, i32) {
    %c0_i32 = arith.constant 0 : i32
    %c0_i32_0 = arith.constant 0 : i32
    %c0_i32_1 = arith.constant 0 : i32
    %c0_i32_2 = arith.constant 0 : i32
    return %c0_i32, %c0_i32_0, %c0_i32_1 : i32, i32, i32
  }
  func.func @transform_18(%arg0: i32) -> (i32, i32, i32) {
    %c0_i32 = arith.constant 0 : i32
    %c0_i32_0 = arith.constant 0 : i32
    %c0_i32_1 = arith.constant 0 : i32
    return %arg0, %c0_i32, %c0_i32_0 : i32, i32, i32
  }
}

</mosaic_0001>

<llo_original>
// kernel: tag_model_forward.1
$region0: #{tag_model_forward.1}
  #allocation0 [shape = 'u32[]', space=smem, size = 0x4, offset = 0x4, fixed_abs, tag = 'smem constant byte address 0x4 - core index']
  #allocation1 [shape = 'u32[144,128]{1,0:T(1,128)}', space=vmem, size = 0x12000, scoped, tag = 'internal scratch']
  %s0 = inlined_call_operand.vmem [shape: s32[2,8,1], index: 0, kind: input, shape index: {}]
  %s1 = inlined_call_operand.vmem [shape: f32[2,1,8], index: 1, kind: input, shape index: {}]
  %s2 = inlined_call_operand.vmem [shape: f32[128,32], index: 2, kind: input, shape index: {}]
  %s3 = inlined_call_operand.vmem [shape: f32[8,32], index: 3, kind: input, shape index: {}]
  %s4 = inlined_call_operand.vmem [shape: f32[1,32], index: 4, kind: input, shape index: {}]
  %s5 = inlined_call_operand.vmem [shape: f32[1,32], index: 5, kind: input, shape index: {}]
  %s6 = inlined_call_operand.vmem [shape: f32[2,32,96], index: 6, kind: input, shape index: {}]
  %s7 = inlined_call_operand.vmem [shape: f32[2,1,96], index: 7, kind: input, shape index: {}]
  %s8 = inlined_call_operand.vmem [shape: f32[2,32,32], index: 8, kind: input, shape index: {}]
  %s9 = inlined_call_operand.vmem [shape: f32[2,1,32], index: 9, kind: input, shape index: {}]
  %s10 = inlined_call_operand.vmem [shape: f32[2,1,32], index: 10, kind: input, shape index: {}]
  %s11 = inlined_call_operand.vmem [shape: f32[2,1,32], index: 11, kind: input, shape index: {}]
  %s12 = inlined_call_operand.vmem [shape: f32[2,32,64], index: 12, kind: input, shape index: {}]
  %s13 = inlined_call_operand.vmem [shape: f32[2,1,64], index: 13, kind: input, shape index: {}]
  %s14 = inlined_call_operand.vmem [shape: f32[2,64,32], index: 14, kind: input, shape index: {}]
  %s15 = inlined_call_operand.vmem [shape: f32[2,1,32], index: 15, kind: input, shape index: {}]
  %s16 = inlined_call_operand.vmem [shape: f32[2,1,32], index: 16, kind: input, shape index: {}]
  %s17 = inlined_call_operand.vmem [shape: f32[2,1,32], index: 17, kind: input, shape index: {}]
  %s18 = inlined_call_operand.hbm [shape: f32[2,1,32], index: 18, kind: output, shape index: {}]
  %s19 = sld [smem:[#allocation0]]
  $region105: #{tag_model_forward.1} parent=0
    _
  %s21 = ssub.s32 1, %s19
  %s22 = scalar_select 0, %s21, %s19
  $region1: #{tag_model_forward.1} parent=0
    #allocation2 [shape = 'u8[1024]{0}', space=vmem, size = 0x400, scoped, tag = 'output window, operand 0']
    #allocation3 [shape = 's32[2]{0}', space=sflag, size = 0x8, scoped, tag = 'scoped memory for tag_model_forward.1']
    %23 = vsyncpa [#allocation3], 0
    %s24 = scalar_lea.sflag [#allocation3], 1
    %25 = vsyncpa %s24, 0
    loop: start=0, step=1, limit=4
    $region2: #{tag_model_forward.1} parent=1 // loop_pre_header
      _
    $region3: #{tag_model_forward.1} parent=1 // loop_header
      %s27 = sphi 0, %s31
      %p28 = scmp.ge.s32.totalorder %s27, 4
      %s37 = sphi 0, %s39
      %s40 = sphi 0, %s37
      %s41 = sphi 0, %s40
      %s57 = sphi 0, %s41
      %s63 = sphi 0, %s65
      %s66 = sphi 0, %s63
      %s67 = sphi 0, %s66
      %s83 = sphi 0, %s67
      %s87 = sphi 0, %s87
      %s89 = sphi 0, %s87
      %s90 = sphi 0, %s89
      %s104 = sphi 0, %s90
      %s108 = sphi 0, %s108
      %s110 = sphi 0, %s108
      %s111 = sphi 0, %s110
      %s125 = sphi 0, %s111
      %s129 = sphi 0, %s129
      %s131 = sphi 0, %s129
      %s132 = sphi 0, %s131
      %s146 = sphi 0, %s132
      %s150 = sphi 0, %s150
      %s152 = sphi 0, %s150
      %s153 = sphi 0, %s152
      %s167 = sphi 0, %s153
      %s171 = sphi 0, %s171
      %s173 = sphi 0, %s171
      %s174 = sphi 0, %s173
      %s188 = sphi 0, %s174
      %s192 = sphi 0, %s192
      %s194 = sphi 0, %s192
      %s195 = sphi 0, %s194
      %s209 = sphi 0, %s195
      %s213 = sphi 0, %s213
      %s215 = sphi 0, %s213
      %s216 = sphi 0, %s215
      %s230 = sphi 0, %s216
      %s234 = sphi 0, %s234
      %s236 = sphi 0, %s234
      %s237 = sphi 0, %s236
      %s251 = sphi 0, %s237
      %s255 = sphi 0, %s255
      %s257 = sphi 0, %s255
      %s258 = sphi 0, %s257
      %s272 = sphi 0, %s258
      %s276 = sphi 0, %s276
      %s278 = sphi 0, %s276
      %s279 = sphi 0, %s278
      %s293 = sphi 0, %s279
      %s297 = sphi 0, %s297
      %s299 = sphi 0, %s297
      %s300 = sphi 0, %s299
      %s314 = sphi 0, %s300
      %s318 = sphi 0, %s318
      %s320 = sphi 0, %s318
      %s321 = sphi 0, %s320
      %s335 = sphi 0, %s321
      %s339 = sphi 0, %s339
      %s341 = sphi 0, %s339
      %s342 = sphi 0, %s341
      %s356 = sphi 0, %s342
      %s360 = sphi 0, %s360
      %s362 = sphi 0, %s360
      %s363 = sphi 0, %s362
      %s377 = sphi 0, %s363
      %s381 = sphi 0, %s381
      %s383 = sphi 0, %s381
      %s384 = sphi 0, %s383
      %s398 = sphi 0, %s384
      %s402 = sphi 0, %s402
      %s404 = sphi 0, %s402
      %s405 = sphi 0, %s404
      %s419 = sphi 0, %s405
      %s425 = sphi 0, %s427
      %s428 = sphi 0, %s425
      %s429 = sphi 0, %s428
      %s445 = sphi 0, %s429
    $region4: #{tag_model_forward.1} parent=1 // loop_header_branch
      %30 = sbr.rel (%p28) target = $region8
    $region5: #{tag_model_forward.1} parent=1 // loop_body
      %s32 = ssub.s32 %s27, 1
      %s33 = ssub.s32 %s27, 2
      %s34 = sadd.s32 %s27, 1
      %s35 = ssub.s32 %s27, %s34
      %p36 = scmp.eq.s32.totalorder %s35, 0
      %s38 = sadd.s32 %s37, 1
      %s39 = scalar_select %p36, %s37, %s38
      %p42 = pneg %p36
      %p43 = scmp.eq.s32.totalorder %s27, 1
      %p44 = por %p42, %p43
      %p45 = scmp.ne.s32.totalorder %s37, %s40
      %p46 = scmp.eq.s32.totalorder %s27, 0
      %p47 = por %p45, %p46
      %p48 = scmp.ne.s32.totalorder %s37, %s40
      %p49 = scmp.eq.s32.totalorder %s32, 1
      %p50 = por %p48, %p49
      %p51 = scmp.ne.s32.totalorder %s40, %s41
      %p52 = scmp.eq.s32.totalorder %s32, 0
      %p53 = por %p51, %p52
      %p54 = scmp.ne.s32.totalorder %s40, %s41
      %p55 = scmp.eq.s32.totalorder %s33, 1
      %p56 = por %p54, %p55
      %p58 = scmp.ne.s32.totalorder %s41, %s57
      %p59 = scmp.eq.s32.totalorder %s33, 0
      %p60 = por %p58, %p59
      %s61 = ssub.s32 %s27, %s34
      %p62 = scmp.eq.s32.totalorder %s61, 0
      %s64 = sadd.s32 %s63, 1
      %s65 = scalar_select %p62, %s63, %s64
      %p68 = pneg %p62
      %p69 = scmp.eq.s32.totalorder %s27, 1
      %p70 = por %p68, %p69
      %p71 = scmp.ne.s32.totalorder %s63, %s66
      %p72 = scmp.eq.s32.totalorder %s27, 0
      %p73 = por %p71, %p72
      %p74 = scmp.ne.s32.totalorder %s63, %s66
      %p75 = scmp.eq.s32.totalorder %s32, 1
      %p76 = por %p74, %p75
      %p77 = scmp.ne.s32.totalorder %s66, %s67
      %p78 = scmp.eq.s32.totalorder %s32, 0
      %p79 = por %p77, %p78
      %p80 = scmp.ne.s32.totalorder %s66, %s67
      %p81 = scmp.eq.s32.totalorder %s33, 1
      %p82 = por %p80, %p81
      %p84 = scmp.ne.s32.totalorder %s67, %s83
      %p85 = scmp.eq.s32.totalorder %s33, 0
      %p86 = por %p84, %p85
      %s88 = sadd.s32 %s87, 1
      %p91 = scmp.eq.s32.totalorder %s27, 1
      %p92 = scmp.ne.s32.totalorder %s87, %s89
      %p93 = scmp.eq.s32.totalorder %s27, 0
      %p94 = por %p92, %p93
      %p95 = scmp.ne.s32.totalorder %s87, %s89
      %p96 = scmp.eq.s32.totalorder %s32, 1
      %p97 = por %p95, %p96
      %p98 = scmp.ne.s32.totalorder %s89, %s90
      %p99 = scmp.eq.s32.totalorder %s32, 0
      %p100 = por %p98, %p99
      %p101 = scmp.ne.s32.totalorder %s89, %s90
      %p102 = scmp.eq.s32.totalorder %s33, 1
      %p103 = por %p101, %p102
      %p105 = scmp.ne.s32.totalorder %s90, %s104
      %p106 = scmp.eq.s32.totalorder %s33, 0
      %p107 = por %p105, %p106
      %s109 = sadd.s32 %s108, 1
      %p112 = scmp.eq.s32.totalorder %s27, 1
      %p113 = scmp.ne.s32.totalorder %s108, %s110
      %p114 = scmp.eq.s32.totalorder %s27, 0
      %p115 = por %p113, %p114
      %p116 = scmp.ne.s32.totalorder %s108, %s110
      %p117 = scmp.eq.s32.totalorder %s32, 1
      %p118 = por %p116, %p117
      %p119 = scmp.ne.s32.totalorder %s110, %s111
      %p120 = scmp.eq.s32.totalorder %s32, 0
      %p121 = por %p119, %p120
      %p122 = scmp.ne.s32.totalorder %s110, %s111
      %p123 = scmp.eq.s32.totalorder %s33, 1
      %p124 = por %p122, %p123
      %p126 = scmp.ne.s32.totalorder %s111, %s125
      %p127 = scmp.eq.s32.totalorder %s33, 0
      %p128 = por %p126, %p127
      %s130 = sadd.s32 %s129, 1
      %p133 = scmp.eq.s32.totalorder %s27, 1
      %p134 = scmp.ne.s32.totalorder %s129, %s131
      %p135 = scmp.eq.s32.totalorder %s27, 0
      %p136 = por %p134, %p135
      %p137 = scmp.ne.s32.totalorder %s129, %s131
      %p138 = scmp.eq.s32.totalorder %s32, 1
      %p139 = por %p137, %p138
      %p140 = scmp.ne.s32.totalorder %s131, %s132
      %p141 = scmp.eq.s32.totalorder %s32, 0
      %p142 = por %p140, %p141
      %p143 = scmp.ne.s32.totalorder %s131, %s132
      %p144 = scmp.eq.s32.totalorder %s33, 1
      %p145 = por %p143, %p144
      %p147 = scmp.ne.s32.totalorder %s132, %s146
      %p148 = scmp.eq.s32.totalorder %s33, 0
      %p149 = por %p147, %p148
      %s151 = sadd.s32 %s150, 1
      %p154 = scmp.eq.s32.totalorder %s27, 1
      %p155 = scmp.ne.s32.totalorder %s150, %s152
      %p156 = scmp.eq.s32.totalorder %s27, 0
      %p157 = por %p155, %p156
      %p158 = scmp.ne.s32.totalorder %s150, %s152
      %p159 = scmp.eq.s32.totalorder %s32, 1
      %p160 = por %p158, %p159
      %p161 = scmp.ne.s32.totalorder %s152, %s153
      %p162 = scmp.eq.s32.totalorder %s32, 0
      %p163 = por %p161, %p162
      %p164 = scmp.ne.s32.totalorder %s152, %s153
      %p165 = scmp.eq.s32.totalorder %s33, 1
      %p166 = por %p164, %p165
      %p168 = scmp.ne.s32.totalorder %s153, %s167
      %p169 = scmp.eq.s32.totalorder %s33, 0
      %p170 = por %p168, %p169
      %s172 = sadd.s32 %s171, 1
      %p175 = scmp.eq.s32.totalorder %s27, 1
      %p176 = scmp.ne.s32.totalorder %s171, %s173
      %p177 = scmp.eq.s32.totalorder %s27, 0
      %p178 = por %p176, %p177
      %p179 = scmp.ne.s32.totalorder %s171, %s173
      %p180 = scmp.eq.s32.totalorder %s32, 1
      %p181 = por %p179, %p180
      %p182 = scmp.ne.s32.totalorder %s173, %s174
      %p183 = scmp.eq.s32.totalorder %s32, 0
      %p184 = por %p182, %p183
      %p185 = scmp.ne.s32.totalorder %s173, %s174
      %p186 = scmp.eq.s32.totalorder %s33, 1
      %p187 = por %p185, %p186
      %p189 = scmp.ne.s32.totalorder %s174, %s188
      %p190 = scmp.eq.s32.totalorder %s33, 0
      %p191 = por %p189, %p190
      %s193 = sadd.s32 %s192, 1
      %p196 = scmp.eq.s32.totalorder %s27, 1
      %p197 = scmp.ne.s32.totalorder %s192, %s194
      %p198 = scmp.eq.s32.totalorder %s27, 0
      %p199 = por %p197, %p198
      %p200 = scmp.ne.s32.totalorder %s192, %s194
      %p201 = scmp.eq.s32.totalorder %s32, 1
      %p202 = por %p200, %p201
      %p203 = scmp.ne.s32.totalorder %s194, %s195
      %p204 = scmp.eq.s32.totalorder %s32, 0
      %p205 = por %p203, %p204
      %p206 = scmp.ne.s32.totalorder %s194, %s195
      %p207 = scmp.eq.s32.totalorder %s33, 1
      %p208 = por %p206, %p207
      %p210 = scmp.ne.s32.totalorder %s195, %s209
      %p211 = scmp.eq.s32.totalorder %s33, 0
      %p212 = por %p210, %p211
      %s214 = sadd.s32 %s213, 1
      %p217 = scmp.eq.s32.totalorder %s27, 1
      %p218 = scmp.ne.s32.totalorder %s213, %s215
      %p219 = scmp.eq.s32.totalorder %s27, 0
      %p220 = por %p218, %p219
      %p221 = scmp.ne.s32.totalorder %s213, %s215
      %p222 = scmp.eq.s32.totalorder %s32, 1
      %p223 = por %p221, %p222
      %p224 = scmp.ne.s32.totalorder %s215, %s216
      %p225 = scmp.eq.s32.totalorder %s32, 0
      %p226 = por %p224, %p225
      %p227 = scmp.ne.s32.totalorder %s215, %s216
      %p228 = scmp.eq.s32.totalorder %s33, 1
      %p229 = por %p227, %p228
      %p231 = scmp.ne.s32.totalorder %s216, %s230
      %p232 = scmp.eq.s32.totalorder %s33, 0
      %p233 = por %p231, %p232
      %s235 = sadd.s32 %s234, 1
      %p238 = scmp.eq.s32.totalorder %s27, 1
      %p239 = scmp.ne.s32.totalorder %s234, %s236
      %p240 = scmp.eq.s32.totalorder %s27, 0
      %p241 = por %p239, %p240
      %p242 = scmp.ne.s32.totalorder %s234, %s236
      %p243 = scmp.eq.s32.totalorder %s32, 1
      %p244 = por %p242, %p243
      %p245 = scmp.ne.s32.totalorder %s236, %s237
      %p246 = scmp.eq.s32.totalorder %s32, 0
      %p247 = por %p245, %p246
      %p248 = scmp.ne.s32.totalorder %s236, %s237
      %p249 = scmp.eq.s32.totalorder %s33, 1
      %p250 = por %p248, %p249
      %p252 = scmp.ne.s32.totalorder %s237, %s251
      %p253 = scmp.eq.s32.totalorder %s33, 0
      %p254 = por %p252, %p253
      %s256 = sadd.s32 %s255, 1
      %p259 = scmp.eq.s32.totalorder %s27, 1
      %p260 = scmp.ne.s32.totalorder %s255, %s257
      %p261 = scmp.eq.s32.totalorder %s27, 0
      %p262 = por %p260, %p261
      %p263 = scmp.ne.s32.totalorder %s255, %s257
      %p264 = scmp.eq.s32.totalorder %s32, 1
      %p265 = por %p263, %p264
      %p266 = scmp.ne.s32.totalorder %s257, %s258
      %p267 = scmp.eq.s32.totalorder %s32, 0
      %p268 = por %p266, %p267
      %p269 = scmp.ne.s32.totalorder %s257, %s258
      %p270 = scmp.eq.s32.totalorder %s33, 1
      %p271 = por %p269, %p270
      %p273 = scmp.ne.s32.totalorder %s258, %s272
      %p274 = scmp.eq.s32.totalorder %s33, 0
      %p275 = por %p273, %p274
      %s277 = sadd.s32 %s276, 1
      %p280 = scmp.eq.s32.totalorder %s27, 1
      %p281 = scmp.ne.s32.totalorder %s276, %s278
      %p282 = scmp.eq.s32.totalorder %s27, 0
      %p283 = por %p281, %p282
      %p284 = scmp.ne.s32.totalorder %s276, %s278
      %p285 = scmp.eq.s32.totalorder %s32, 1
      %p286 = por %p284, %p285
      %p287 = scmp.ne.s32.totalorder %s278, %s279
      %p288 = scmp.eq.s32.totalorder %s32, 0
      %p289 = por %p287, %p288
      %p290 = scmp.ne.s32.totalorder %s278, %s279
      %p291 = scmp.eq.s32.totalorder %s33, 1
      %p292 = por %p290, %p291
      %p294 = scmp.ne.s32.totalorder %s279, %s293
      %p295 = scmp.eq.s32.totalorder %s33, 0
      %p296 = por %p294, %p295
      %s298 = sadd.s32 %s297, 1
      %p301 = scmp.eq.s32.totalorder %s27, 1
      %p302 = scmp.ne.s32.totalorder %s297, %s299
      %p303 = scmp.eq.s32.totalorder %s27, 0
      %p304 = por %p302, %p303
      %p305 = scmp.ne.s32.totalorder %s297, %s299
      %p306 = scmp.eq.s32.totalorder %s32, 1
      %p307 = por %p305, %p306
      %p308 = scmp.ne.s32.totalorder %s299, %s300
      %p309 = scmp.eq.s32.totalorder %s32, 0
      %p310 = por %p308, %p309
      %p311 = scmp.ne.s32.totalorder %s299, %s300
      %p312 = scmp.eq.s32.totalorder %s33, 1
      %p313 = por %p311, %p312
      %p315 = scmp.ne.s32.totalorder %s300, %s314
      %p316 = scmp.eq.s32.totalorder %s33, 0
      %p317 = por %p315, %p316
      %s319 = sadd.s32 %s318, 1
      %p322 = scmp.eq.s32.totalorder %s27, 1
      %p323 = scmp.ne.s32.totalorder %s318, %s320
      %p324 = scmp.eq.s32.totalorder %s27, 0
      %p325 = por %p323, %p324
      %p326 = scmp.ne.s32.totalorder %s318, %s320
      %p327 = scmp.eq.s32.totalorder %s32, 1
      %p328 = por %p326, %p327
      %p329 = scmp.ne.s32.totalorder %s320, %s321
      %p330 = scmp.eq.s32.totalorder %s32, 0
      %p331 = por %p329, %p330
      %p332 = scmp.ne.s32.totalorder %s320, %s321
      %p333 = scmp.eq.s32.totalorder %s33, 1
      %p334 = por %p332, %p333
      %p336 = scmp.ne.s32.totalorder %s321, %s335
      %p337 = scmp.eq.s32.totalorder %s33, 0
      %p338 = por %p336, %p337
      %s340 = sadd.s32 %s339, 1
      %p343 = scmp.eq.s32.totalorder %s27, 1
      %p344 = scmp.ne.s32.totalorder %s339, %s341
      %p345 = scmp.eq.s32.totalorder %s27, 0
      %p346 = por %p344, %p345
      %p347 = scmp.ne.s32.totalorder %s339, %s341
      %p348 = scmp.eq.s32.totalorder %s32, 1
      %p349 = por %p347, %p348
      %p350 = scmp.ne.s32.totalorder %s341, %s342
      %p351 = scmp.eq.s32.totalorder %s32, 0
      %p352 = por %p350, %p351
      %p353 = scmp.ne.s32.totalorder %s341, %s342
      %p354 = scmp.eq.s32.totalorder %s33, 1
      %p355 = por %p353, %p354
      %p357 = scmp.ne.s32.totalorder %s342, %s356
      %p358 = scmp.eq.s32.totalorder %s33, 0
      %p359 = por %p357, %p358
      %s361 = sadd.s32 %s360, 1
      %p364 = scmp.eq.s32.totalorder %s27, 1
      %p365 = scmp.ne.s32.totalorder %s360, %s362
      %p366 = scmp.eq.s32.totalorder %s27, 0
      %p367 = por %p365, %p366
      %p368 = scmp.ne.s32.totalorder %s360, %s362
      %p369 = scmp.eq.s32.totalorder %s32, 1
      %p370 = por %p368, %p369
      %p371 = scmp.ne.s32.totalorder %s362, %s363
      %p372 = scmp.eq.s32.totalorder %s32, 0
      %p373 = por %p371, %p372
      %p374 = scmp.ne.s32.totalorder %s362, %s363
      %p375 = scmp.eq.s32.totalorder %s33, 1
      %p376 = por %p374, %p375
      %p378 = scmp.ne.s32.totalorder %s363, %s377
      %p379 = scmp.eq.s32.totalorder %s33, 0
      %p380 = por %p378, %p379
      %s382 = sadd.s32 %s381, 1
      %p385 = scmp.eq.s32.totalorder %s27, 1
      %p386 = scmp.ne.s32.totalorder %s381, %s383
      %p387 = scmp.eq.s32.totalorder %s27, 0
      %p388 = por %p386, %p387
      %p389 = scmp.ne.s32.totalorder %s381, %s383
      %p390 = scmp.eq.s32.totalorder %s32, 1
      %p391 = por %p389, %p390
      %p392 = scmp.ne.s32.totalorder %s383, %s384
      %p393 = scmp.eq.s32.totalorder %s32, 0
      %p394 = por %p392, %p393
      %p395 = scmp.ne.s32.totalorder %s383, %s384
      %p396 = scmp.eq.s32.totalorder %s33, 1
      %p397 = por %p395, %p396
      %p399 = scmp.ne.s32.totalorder %s384, %s398
      %p400 = scmp.eq.s32.totalorder %s33, 0
      %p401 = por %p399, %p400
      %s403 = sadd.s32 %s402, 1
      %p406 = scmp.eq.s32.totalorder %s27, 1
      %p407 = scmp.ne.s32.totalorder %s402, %s404
      %p408 = scmp.eq.s32.totalorder %s27, 0
      %p409 = por %p407, %p408
      %p410 = scmp.ne.s32.totalorder %s402, %s404
      %p411 = scmp.eq.s32.totalorder %s32, 1
      %p412 = por %p410, %p411
      %p413 = scmp.ne.s32.totalorder %s404, %s405
      %p414 = scmp.eq.s32.totalorder %s32, 0
      %p415 = por %p413, %p414
      %p416 = scmp.ne.s32.totalorder %s404, %s405
      %p417 = scmp.eq.s32.totalorder %s33, 1
      %p418 = por %p416, %p417
      %p420 = scmp.ne.s32.totalorder %s405, %s419
      %p421 = scmp.eq.s32.totalorder %s33, 0
      %p422 = por %p420, %p421
      %s423 = ssub.s32 %s27, %s34
      %p424 = scmp.eq.s32.totalorder %s423, 0
      %s426 = sadd.s32 %s425, 1
      %s427 = scalar_select %p424, %s425, %s426
      %p430 = pneg %p424
      %p431 = scmp.eq.s32.totalorder %s27, 1
      %p432 = por %p430, %p431
      %p433 = scmp.ne.s32.totalorder %s425, %s428
      %p434 = scmp.eq.s32.totalorder %s27, 0
      %p435 = por %p433, %p434
      %p436 = scmp.ne.s32.totalorder %s425, %s428
      %p437 = scmp.eq.s32.totalorder %s32, 1
      %p438 = por %p436, %p437
      %p439 = scmp.ne.s32.totalorder %s428, %s429
      %p440 = scmp.eq.s32.totalorder %s32, 0
      %p441 = por %p439, %p440
      %p442 = scmp.ne.s32.totalorder %s428, %s429
      %p443 = scmp.eq.s32.totalorder %s33, 1
      %p444 = por %p442, %p443
      %p446 = scmp.ne.s32.totalorder %s429, %s445
      %p447 = scmp.eq.s32.totalorder %s33, 0
      %p448 = por %p446, %p447
      %p449 = scmp.le.s32.totalorder 1, %s27
      %p450 = scmp.lt.s32.totalorder %s27, 3
      %p451 = pnand %p449, %p450
      %p452 = pneg %p451
      // Predicated region
      $region9: #{tag_model_forward.1} parent=5 // pred_check
        _
      $region10: #{tag_model_forward.1} parent=5 // pred_check_branch
        %454 = sbr.rel (%p451) target = $region12
      $region11: #{tag_model_forward.1} parent=5 // pred_region
        %s455 = ssub.s32 %s27, 1
        // Predicated region
        $region13: #{tag_model_forward.1} parent=11 // pred_check
          %p456 = pneg %p100
        $region14: #{tag_model_forward.1} parent=11 // pred_check_branch
          %458 = sbr.rel (%p456) target = $region16
        $region15: #{tag_model_forward.1} parent=11 // pred_region
          _
        $region16: #{tag_model_forward.1} parent=11 // pred_fallthru
          _
        // Predicated region
        $region17: #{tag_model_forward.1} parent=11 // pred_check
          %p459 = pneg %p121
        $region18: #{tag_model_forward.1} parent=11 // pred_check_branch
          %461 = sbr.rel (%p459) target = $region20
        $region19: #{tag_model_forward.1} parent=11 // pred_region
          _
        $region20: #{tag_model_forward.1} parent=11 // pred_fallthru
          _
        // Predicated region
        $region21: #{tag_model_forward.1} parent=11 // pred_check
          %p462 = pneg %p142
        $region22: #{tag_model_forward.1} parent=11 // pred_check_branch
          %464 = sbr.rel (%p462) target = $region24
        $region23: #{tag_model_forward.1} parent=11 // pred_region
          _
        $region24: #{tag_model_forward.1} parent=11 // pred_fallthru
          _
        // Predicated region
        $region25: #{tag_model_forward.1} parent=11 // pred_check
          %p465 = pneg %p163
        $region26: #{tag_model_forward.1} parent=11 // pred_check_branch
          %467 = sbr.rel (%p465) target = $region28
        $region27: #{tag_model_forward.1} parent=11 // pred_region
          _
        $region28: #{tag_model_forward.1} parent=11 // pred_fallthru
          _
        // Predicated region
        $region29: #{tag_model_forward.1} parent=11 // pred_check
          %p468 = pneg %p184
        $region30: #{tag_model_forward.1} parent=11 // pred_check_branch
          %470 = sbr.rel (%p468) target = $region32
        $region31: #{tag_model_forward.1} parent=11 // pred_region
          _
        $region32: #{tag_model_forward.1} parent=11 // pred_fallthru
          _
        // Predicated region
        $region33: #{tag_model_forward.1} parent=11 // pred_check
          %p471 = pneg %p205
        $region34: #{tag_model_forward.1} parent=11 // pred_check_branch
          %473 = sbr.rel (%p471) target = $region36
        $region35: #{tag_model_forward.1} parent=11 // pred_region
          _
        $region36: #{tag_model_forward.1} parent=11 // pred_fallthru
          _
        // Predicated region
        $region37: #{tag_model_forward.1} parent=11 // pred_check
          %p474 = pneg %p226
        $region38: #{tag_model_forward.1} parent=11 // pred_check_branch
          %476 = sbr.rel (%p474) target = $region40
        $region39: #{tag_model_forward.1} parent=11 // pred_region
          _
        $region40: #{tag_model_forward.1} parent=11 // pred_fallthru
          _
        // Predicated region
        $region41: #{tag_model_forward.1} parent=11 // pred_check
          %p477 = pneg %p247
        $region42: #{tag_model_forward.1} parent=11 // pred_check_branch
          %479 = sbr.rel (%p477) target = $region44
        $region43: #{tag_model_forward.1} parent=11 // pred_region
          _
        $region44: #{tag_model_forward.1} parent=11 // pred_fallthru
          _
        // Predicated region
        $region45: #{tag_model_forward.1} parent=11 // pred_check
          %p480 = pneg %p268
        $region46: #{tag_model_forward.1} parent=11 // pred_check_branch
          %482 = sbr.rel (%p480) target = $region48
        $region47: #{tag_model_forward.1} parent=11 // pred_region
          _
        $region48: #{tag_model_forward.1} parent=11 // pred_fallthru
          _
        // Predicated region
        $region49: #{tag_model_forward.1} parent=11 // pred_check
          %p483 = pneg %p289
        $region50: #{tag_model_forward.1} parent=11 // pred_check_branch
          %485 = sbr.rel (%p483) target = $region52
        $region51: #{tag_model_forward.1} parent=11 // pred_region
          _
        $region52: #{tag_model_forward.1} parent=11 // pred_fallthru
          _
        // Predicated region
        $region53: #{tag_model_forward.1} parent=11 // pred_check
          %p486 = pneg %p310
        $region54: #{tag_model_forward.1} parent=11 // pred_check_branch
          %488 = sbr.rel (%p486) target = $region56
        $region55: #{tag_model_forward.1} parent=11 // pred_region
          _
        $region56: #{tag_model_forward.1} parent=11 // pred_fallthru
          _
        // Predicated region
        $region57: #{tag_model_forward.1} parent=11 // pred_check
          %p489 = pneg %p331
        $region58: #{tag_model_forward.1} parent=11 // pred_check_branch
          %491 = sbr.rel (%p489) target = $region60
        $region59: #{tag_model_forward.1} parent=11 // pred_region
          _
        $region60: #{tag_model_forward.1} parent=11 // pred_fallthru
          _
        // Predicated region
        $region61: #{tag_model_forward.1} parent=11 // pred_check
          %p492 = pneg %p352
        $region62: #{tag_model_forward.1} parent=11 // pred_check_branch
          %494 = sbr.rel (%p492) target = $region64
        $region63: #{tag_model_forward.1} parent=11 // pred_region
          _
        $region64: #{tag_model_forward.1} parent=11 // pred_fallthru
          _
        // Predicated region
        $region65: #{tag_model_forward.1} parent=11 // pred_check
          %p495 = pneg %p373
        $region66: #{tag_model_forward.1} parent=11 // pred_check_branch
          %497 = sbr.rel (%p495) target = $region68
        $region67: #{tag_model_forward.1} parent=11 // pred_region
          _
        $region68: #{tag_model_forward.1} parent=11 // pred_fallthru
          _
        // Predicated region
        $region69: #{tag_model_forward.1} parent=11 // pred_check
          %p498 = pneg %p394
        $region70: #{tag_model_forward.1} parent=11 // pred_check_branch
          %500 = sbr.rel (%p498) target = $region72
        $region71: #{tag_model_forward.1} parent=11 // pred_region
          _
        $region72: #{tag_model_forward.1} parent=11 // pred_fallthru
          _
        // Predicated region
        $region73: #{tag_model_forward.1} parent=11 // pred_check
          %p501 = pneg %p415
        $region74: #{tag_model_forward.1} parent=11 // pred_check_branch
          %503 = sbr.rel (%p501) target = $region76
        $region75: #{tag_model_forward.1} parent=11 // pred_region
          _
        $region76: #{tag_model_forward.1} parent=11 // pred_fallthru
          _
      $region12: #{tag_model_forward.1} parent=5 // pred_fallthru
        _
      %p504 = scmp.lt.s32.totalorder %s27, 2
      // Predicated region
      $region77: #{tag_model_forward.1} parent=5 // pred_check
        %p505 = pneg %p504
      $region78: #{tag_model_forward.1} parent=5 // pred_check_branch
        %507 = sbr.rel (%p505) target = $region80
      $region79: #{tag_model_forward.1} parent=5 // pred_region
        // Predicated region
        $region81: #{tag_model_forward.1} parent=79 // pred_check
          %p508 = pneg %p47
        $region82: #{tag_model_forward.1} parent=79 // pred_check_branch
          %510 = sbr.rel (%p508) target = $region84
        $region83: #{tag_model_forward.1} parent=79 // pred_region
          %p511 = scmp.lt.s32.totalorder %s27, 1
          %s512 = scalar_select %p511, %s27, 1
          %s513 = smul.addr %s512, 8
          %s514 = scalar_lea.vmem %s0, %s513
        $region84: #{tag_model_forward.1} parent=79 // pred_fallthru
          _
        // Predicated region
        $region85: #{tag_model_forward.1} parent=79 // pred_check
          %p515 = pneg %p73
        $region86: #{tag_model_forward.1} parent=79 // pred_check_branch
          %517 = sbr.rel (%p515) target = $region88
        $region87: #{tag_model_forward.1} parent=79 // pred_region
          %p518 = scmp.lt.s32.totalorder %s27, 1
          %s519 = scalar_select %p518, %s27, 1
          %s520 = scalar_lea.vmem %s1, %s519
        $region88: #{tag_model_forward.1} parent=79 // pred_fallthru
          _
      $region80: #{tag_model_forward.1} parent=5 // pred_fallthru
        _
      %p521 = scmp.le.s32.totalorder 1, %s27
      %p522 = scmp.lt.s32.totalorder %s27, 3
      %p523 = pnand %p521, %p522
      %p524 = pneg %p523
      // Predicated region
      $region89: #{tag_model_forward.1} parent=5 // pred_check
        _
      $region90: #{tag_model_forward.1} parent=5 // pred_check_branch
        %526 = sbr.rel (%p523) target = $region92
      $region91: #{tag_model_forward.1} parent=5 // pred_region
        %s527 = ssub.s32 %s27, 1
        %p528 = scmp.lt.s32.totalorder %s32, 1
        %s529 = scalar_select %p528, %s32, 1
        %s530 = smul.addr %s529, 8
        %s531 = scalar_lea.vmem %s0, %s530
        %p532 = pneg %p53
        %p533 = pneg %p50
        %p534 = scmp.lt.s32.totalorder %s32, 1
        %s535 = scalar_select %p534, %s32, 1
        %s536 = scalar_lea.vmem %s1, %s535
        %p537 = pneg %p79
        %p538 = pneg %p76
        %p539 = pneg %p100
        %p540 = pneg %p97
        %p541 = pneg %p121
        %p542 = pneg %p118
        %p543 = pneg %p142
        %p544 = pneg %p139
        %p545 = pneg %p163
        %p546 = pneg %p160
        %p547 = pneg %p184
        %p548 = pneg %p181
        %p549 = pneg %p205
        %p550 = pneg %p202
        %p551 = pneg %p226
        %p552 = pneg %p223
        %p553 = pneg %p247
        %p554 = pneg %p244
        %p555 = pneg %p268
        %p556 = pneg %p265
        %p557 = pneg %p289
        %p558 = pneg %p286
        %p559 = pneg %p310
        %p560 = pneg %p307
        %p561 = pneg %p331
        %p562 = pneg %p328
        %p563 = pneg %p352
        %p564 = pneg %p349
        %p565 = pneg %p373
        %p566 = pneg %p370
        %p567 = pneg %p394
        %p568 = pneg %p391
        %p569 = pneg %p415
        %p570 = pneg %p412
        %p571 = pneg %p441
        %p572 = pneg %p438
        %s573 = sand.u32 %s428, 1
        %s574 = scalar_lea.sflag [#allocation3], %s573
        %s575 = sand.u32 %s428, 1
        %s576 = scalar_lea.vmem [#allocation2], %s575
        %p577 = scmp.lt.s32.totalorder %s32, 1
        %s578 = scalar_select %p577, %s32, 1
        %s579 = smul.addr %s578, 8
        %s580 = scalar_lea.vmem %s0, %s579
        %p581 = scmp.lt.s32.totalorder %s32, 1
        %s582 = scalar_select %p581, %s32, 1
        %s583 = scalar_lea.vmem %s1, %s582
        %v584 = vld [vmem:[%s580] sm:$0xff]
        %v585 = vlaneseq
        %v586 = vand.u32 %v585, 127
        %587 = vset.pattern.permute.xlu0 0
        %588 = vperm.xlu0 %587, %v584
        %v589 = vpop.permute.xlu0 %588
        %vm590 = vcmp.eq.s32.totalorder %v586, %v589
        %v591 = vsel %vm590, 1, 0
        %v592 = vcvt.s32.f32 %v591
        %v593 = vld [vmem:[%s2] sm:$0xff]
        %v594 = vld [vmem:[%s2 + $0x8] sm:$0xff]
        %v595 = vld [vmem:[%s2 + $0x10] sm:$0xff]
        %v596 = vld [vmem:[%s2 + $0x18] sm:$0xff]
        %v597 = vld [vmem:[%s2 + $0x20] sm:$0xff]
        %v598 = vld [vmem:[%s2 + $0x28] sm:$0xff]
        %v599 = vld [vmem:[%s2 + $0x30] sm:$0xff]
        %v600 = vld [vmem:[%s2 + $0x38] sm:$0xff]
        %v601 = vld [vmem:[%s2 + $0x40] sm:$0xff]
        %v602 = vld [vmem:[%s2 + $0x48] sm:$0xff]
        %v603 = vld [vmem:[%s2 + $0x50] sm:$0xff]
        %v604 = vld [vmem:[%s2 + $0x58] sm:$0xff]
        %v605 = vld [vmem:[%s2 + $0x60] sm:$0xff]
        %v606 = vld [vmem:[%s2 + $0x68] sm:$0xff]
        %v607 = vld [vmem:[%s2 + $0x70] sm:$0xff]
        %v608 = vld [vmem:[%s2 + $0x78] sm:$0xff]
        %v609 = vld [vmem:[%s3] sm:$0xff]
        %610 = vmatprep.subr.mxu0 0.0
        %611 = vmatpush1.msra.mxu0 %v593
        %612 = vmatprep.subr.mxu0 0.0
        %613 = vmatpush1.msra.mxu0 %v594
        %614 = vmatprep.subr.mxu0 0.0
        %615 = vmatpush1.msra.mxu0 %v595
        %616 = vmatprep.subr.mxu0 0.0
        %617 = vmatpush1.msra.mxu0 %v596
        %618 = vmatprep.subr.mxu0 0.0
        %619 = vmatpush1.msra.mxu0 %v597
        %620 = vmatprep.subr.mxu0 0.0
        %621 = vmatpush1.msra.mxu0 %v598
        %622 = vmatprep.subr.mxu0 0.0
        %623 = vmatpush1.msra.mxu0 %v599
        %624 = vmatprep.subr.mxu0 0.0
        %625 = vmatpush1.msra.mxu0 %v600
        %626 = vmatprep.subr.mxu0 0.0
        %627 = vmatpush1.msra.mxu0 %v601
        %628 = vmatprep.subr.mxu0 0.0
        %629 = vmatpush1.msra.mxu0 %v602
        %630 = vmatprep.subr.mxu0 0.0
        %631 = vmatpush1.msra.mxu0 %v603
        %632 = vmatprep.subr.mxu0 0.0
        %633 = vmatpush1.msra.mxu0 %v604
        %634 = vmatprep.subr.mxu0 0.0
        %635 = vmatpush1.msra.mxu0 %v605
        %636 = vmatprep.subr.mxu0 0.0
        %637 = vmatpush1.msra.mxu0 %v606
        %638 = vmatprep.subr.mxu0 0.0
        %639 = vmatpush1.msra.mxu0 %v607
        %640 = vmatprep.subr.mxu0 0.0
        %641 = vmatpush1.msra.mxu0 %v608
        %642 = vmatprep.subr.mxu0 0.0
        %643 = vmatpush1.msra.mxu0 0.0
        %644 = vmatprep.subr.mxu0 0.0
        %645 = vmatpush1.msra.mxu0 0.0
        %646 = vmatprep.subr.mxu0 0.0
        %647 = vmatpush1.msra.mxu0 0.0
        %648 = vmatprep.subr.mxu0 0.0
        %649 = vmatpush1.msra.mxu0 0.0
        %650 = vmatprep.subr.mxu0 0.0
        %651 = vmatpush1.msra.mxu0 0.0
        %652 = vmatprep.subr.mxu0 0.0
        %653 = vmatpush1.msra.mxu0 0.0
        %654 = vmatprep.subr.mxu0 0.0
        %655 = vmatpush1.msra.mxu0 0.0
        %656 = vmatprep.subr.mxu0 0.0
        %657 = vmatpush1.msra.mxu0 0.0
        %658 = vmatprep.subr.mxu0 0.0
        %659 = vmatpush1.msra.mxu0 0.0
        %660 = vmatprep.subr.mxu0 0.0
        %661 = vmatpush1.msra.mxu0 0.0
        %662 = vmatprep.subr.mxu0 0.0
        %663 = vmatpush1.msra.mxu0 0.0
        %664 = vmatprep.subr.mxu0 0.0
        %665 = vmatpush1.msra.mxu0 0.0
        %666 = vmatprep.subr.mxu0 0.0
        %667 = vmatpush1.msra.mxu0 0.0
        %668 = vmatprep.subr.mxu0 0.0
        %669 = vmatpush1.msra.mxu0 0.0
        %670 = vmatprep.subr.mxu0 0.0
        %671 = vmatpush1.msra.mxu0 0.0
        %672 = vmatprep.subr.mxu0 0.0
        %673 = vmatpush1.msra.mxu0 0.0
        %674 = vmatprep.mubr.f32.mxu0 0.0
        %675 = vmatmul.mubr.f32.gmra.mrb[0].mxu0 %v592
        %v676 = vpop.f32.mrb[0].mxu0
        %v677 = vadd.f32 %v609, %v676
        %v678 = vpop.f32.mrb[0].mxu0
        %679 = vdwg.mxu0
        %v680 = vld [vmem:[%s4] sm:$0x1]
        %v681 = vld [vmem:[%s5] sm:$0x1]
        %vm682 = vcmask 261120
        %v683 = vsel %vm682, %v677, 0.0
        %684 = vadd.xlane.f32.xlu0 %v683
        %v685 = vpop.xlane.xlu0 %684
        %v686 = vrcp.pop 32.0
        %v687 = vmul.f32 %v685, %v686
        %v688 = vsub.f32 %v677, %v687
        %v689 = vmul.f32 %v688, %v688
        %v690 = vsel %vm682, %v689, 0.0
        %691 = vadd.xlane.f32.xlu0 %v690
        %v692 = vpop.xlane.xlu0 %691
        %v693 = vmul.f32 %v692, %v686
        %v694 = vadd.f32 %v693, 1e-12
        %v695 = vrsqrt.pop %v694
        %v696 = vmul.f32 %v688, %v695
        %v698 = vlaneseq
        %v699 = vshrl.u32 %v698, 7
        %v700 = vsub.s32 0, %v699
        %v701 = vrot.slane %v680, %v700
        %v703 = vmul.f32 %v696, %v701
        %v705 = vlaneseq
        %v706 = vshrl.u32 %v705, 7
        %v707 = vsub.s32 0, %v706
        %v708 = vrot.slane %v681, %v707
        %v710 = vadd.f32 %v703, %v708
        %v711 = vld [vmem:[%s583] sm:$0x1]
        %vm712 = vcmp.lt.f32.partialorder %v711, 0.5
        %v713 = vld [vmem:[%s6] sm:$0xff]
        %v714 = vld [vmem:[%s6 + $0x8] sm:$0xff]
        %v715 = vld [vmem:[%s6 + $0x10] sm:$0xff]
        %v716 = vld [vmem:[%s6 + $0x18] sm:$0xff]
        %v717 = vld [vmem:[%s7] sm:$0x1]
        %v719 = vlaneseq
        %v720 = vshrl.u32 %v719, 7
        %v721 = vsub.s32 0, %v720
        %v722 = vrot.slane %v717, %v721
        %v725 = vsel %vm682, %v710, 0
        %727 = vmatprep.subr.mxu0 0.0
        %728 = vmatpush1.msra.mxu0 %v713
        %729 = vmatprep.subr.mxu0 0.0
        %730 = vmatpush1.msra.mxu0 %v714
        %731 = vmatprep.subr.mxu0 0.0
        %732 = vmatpush1.msra.mxu0 %v715
        %733 = vmatprep.subr.mxu0 0.0
        %734 = vmatpush1.msra.mxu0 %v716
        %735 = vmatprep.subr.mxu0 0.0
        %736 = vmatpush1.msra.mxu0 0.0
        %737 = vmatprep.subr.mxu0 0.0
        %738 = vmatpush1.msra.mxu0 0.0
        %739 = vmatprep.subr.mxu0 0.0
        %740 = vmatpush1.msra.mxu0 0.0
        %741 = vmatprep.subr.mxu0 0.0
        %742 = vmatpush1.msra.mxu0 0.0
        %743 = vmatprep.subr.mxu0 0.0
        %744 = vmatpush1.msra.mxu0 0.0
        %745 = vmatprep.subr.mxu0 0.0
        %746 = vmatpush1.msra.mxu0 0.0
        %747 = vmatprep.subr.mxu0 0.0
        %748 = vmatpush1.msra.mxu0 0.0
        %749 = vmatprep.subr.mxu0 0.0
        %750 = vmatpush1.msra.mxu0 0.0
        %751 = vmatprep.subr.mxu0 0.0
        %752 = vmatpush1.msra.mxu0 0.0
        %753 = vmatprep.subr.mxu0 0.0
        %754 = vmatpush1.msra.mxu0 0.0
        %755 = vmatprep.subr.mxu0 0.0
        %756 = vmatpush1.msra.mxu0 0.0
        %757 = vmatprep.subr.mxu0 0.0
        %758 = vmatpush1.msra.mxu0 0.0
        %759 = vmatprep.subr.mxu0 0.0
        %760 = vmatpush1.msra.mxu0 0.0
        %761 = vmatprep.subr.mxu0 0.0
        %762 = vmatpush1.msra.mxu0 0.0
        %763 = vmatprep.subr.mxu0 0.0
        %764 = vmatpush1.msra.mxu0 0.0
        %765 = vmatprep.subr.mxu0 0.0
        %766 = vmatpush1.msra.mxu0 0.0
        %767 = vmatprep.subr.mxu0 0.0
        %768 = vmatpush1.msra.mxu0 0.0
        %769 = vmatprep.subr.mxu0 0.0
        %770 = vmatpush1.msra.mxu0 0.0
        %771 = vmatprep.subr.mxu0 0.0
        %772 = vmatpush1.msra.mxu0 0.0
        %773 = vmatprep.subr.mxu0 0.0
        %774 = vmatpush1.msra.mxu0 0.0
        %775 = vmatprep.subr.mxu0 0.0
        %776 = vmatpush1.msra.mxu0 0.0
        %777 = vmatprep.subr.mxu0 0.0
        %778 = vmatpush1.msra.mxu0 0.0
        %779 = vmatprep.subr.mxu0 0.0
        %780 = vmatpush1.msra.mxu0 0.0
        %781 = vmatprep.subr.mxu0 0.0
        %782 = vmatpush1.msra.mxu0 0.0
        %783 = vmatprep.subr.mxu0 0.0
        %784 = vmatpush1.msra.mxu0 0.0
        %785 = vmatprep.subr.mxu0 0.0
        %786 = vmatpush1.msra.mxu0 0.0
        %787 = vmatprep.subr.mxu0 0.0
        %788 = vmatpush1.msra.mxu0 0.0
        %789 = vmatprep.subr.mxu0 0.0
        %790 = vmatpush1.msra.mxu0 0.0
        %791 = vmatprep.mubr.f32.mxu0 0.0
        %792 = vmatmul.mubr.f32.gmra.mrb[0].mxu0 %v725
        %v793 = vpop.f32.mrb[0].mxu0
        %v794 = vadd.f32 %v722, %v793
        %v795 = vpop.f32.mrb[0].mxu0
        %796 = vdwg.mxu0
        %798 = vrot.lane.b32.xlu0 %v794, 96
        %v799 = vpop.permute.xlu0 %798
        %vm800 = vcmask 64512
        %v801 = vsel %vm800, %v794, 0
        %v803 = vsel %vm800, %v799, 0
        %805 = vmatprep.subr.mxu0 0.0
        %806 = vmatpush1.xpose.msra.mxu0 %v803
        %807 = vmatprep.subr.mxu0 0.0
        %808 = vmatpush1.xpose.msra.mxu0 0.0
        %809 = vmatprep.subr.mxu0 0.0
        %810 = vmatpush1.xpose.msra.mxu0 0.0
        %811 = vmatprep.subr.mxu0 0.0
        %812 = vmatpush1.xpose.msra.mxu0 0.0
        %813 = vmatprep.subr.mxu0 0.0
        %814 = vmatpush1.xpose.msra.mxu0 0.0
        %815 = vmatprep.subr.mxu0 0.0
        %816 = vmatpush1.xpose.msra.mxu0 0.0
        %817 = vmatprep.subr.mxu0 0.0
        %818 = vmatpush1.xpose.msra.mxu0 0.0
        %819 = vmatprep.subr.mxu0 0.0
        %820 = vmatpush1.xpose.msra.mxu0 0.0
        %821 = vmatprep.subr.mxu0 0.0
        %822 = vmatpush1.xpose.msra.mxu0 0.0
        %823 = vmatprep.subr.mxu0 0.0
        %824 = vmatpush1.xpose.msra.mxu0 0.0
        %825 = vmatprep.subr.mxu0 0.0
        %826 = vmatpush1.xpose.msra.mxu0 0.0
        %827 = vmatprep.subr.mxu0 0.0
        %828 = vmatpush1.xpose.msra.mxu0 0.0
        %829 = vmatprep.subr.mxu0 0.0
        %830 = vmatpush1.xpose.msra.mxu0 0.0
        %831 = vmatprep.subr.mxu0 0.0
        %832 = vmatpush1.xpose.msra.mxu0 0.0
        %833 = vmatprep.subr.mxu0 0.0
        %834 = vmatpush1.xpose.msra.mxu0 0.0
        %835 = vmatprep.subr.mxu0 0.0
        %836 = vmatpush1.xpose.msra.mxu0 0.0
        %837 = vmatprep.subr.mxu0 0.0
        %838 = vmatpush1.xpose.msra.mxu0 0.0
        %839 = vmatprep.subr.mxu0 0.0
        %840 = vmatpush1.xpose.msra.mxu0 0.0
        %841 = vmatprep.subr.mxu0 0.0
        %842 = vmatpush1.xpose.msra.mxu0 0.0
        %843 = vmatprep.subr.mxu0 0.0
        %844 = vmatpush1.xpose.msra.mxu0 0.0
        %845 = vmatprep.subr.mxu0 0.0
        %846 = vmatpush1.xpose.msra.mxu0 0.0
        %847 = vmatprep.subr.mxu0 0.0
        %848 = vmatpush1.xpose.msra.mxu0 0.0
        %849 = vmatprep.subr.mxu0 0.0
        %850 = vmatpush1.xpose.msra.mxu0 0.0
        %851 = vmatprep.subr.mxu0 0.0
        %852 = vmatpush1.xpose.msra.mxu0 0.0
        %853 = vmatprep.subr.mxu0 0.0
        %854 = vmatpush1.xpose.msra.mxu0 0.0
        %855 = vmatprep.subr.mxu0 0.0
        %856 = vmatpush1.xpose.msra.mxu0 0.0
        %857 = vmatprep.subr.mxu0 0.0
        %858 = vmatpush1.xpose.msra.mxu0 0.0
        %859 = vmatprep.subr.mxu0 0.0
        %860 = vmatpush1.xpose.msra.mxu0 0.0
        %861 = vmatprep.subr.mxu0 0.0
        %862 = vmatpush1.xpose.msra.mxu0 0.0
        %863 = vmatprep.subr.mxu0 0.0
        %864 = vmatpush1.xpose.msra.mxu0 0.0
        %865 = vmatprep.subr.mxu0 0.0
        %866 = vmatpush1.xpose.msra.mxu0 0.0
        %867 = vmatprep.subr.mxu0 0.0
        %868 = vmatpush1.xpose.msra.mxu0 0.0
        %869 = vmatprep.mubr.f32.mxu0 0.0
        %870 = vmatmul.mubr.f32.gmra.mrb[0].mxu0 %v801
        %v871 = vpop.f32.mrb[0].mxu0
        %v872 = vadd.f32 0.0, %v871
        %v873 = vpop.f32.mrb[0].mxu0
        %874 = vdwg.mxu0
        %v875 = vmul.f32 %v872, 0.35355338
        %v876 = vsel %vm712, 1, 0
        %v877 = vlaneseq
        %v878 = vshrl.u32 %v877, 7
        %v879 = vsub.s32 0, %v878
        %v880 = vrot.slane %v876, %v879
        %vm881 = vcmp.eq.s32.totalorder %v880, 1
        %v882 = vsel %vm881, -1e+30, %v875
        %v883 = vsel %vm800, %v882, -inf
        %884 = vmax.xlane.f32.xlu0 %v883
        %v885 = vpop.xlane.xlu0 %884
        %v886 = vsub.f32 %v882, %v885
        %v887 = vmul.f32 %v886, 1.442695
        %v888 = vpow.pop %v887
        %v889 = vsel %vm800, %v888, 0.0
        %890 = vadd.xlane.f32.xlu0 %v889
        %v891 = vpop.xlane.xlu0 %890
        %v892 = vrcp.pop %v891
        %v893 = vmul.f32 %v888, %v892
        %894 = vrot.lane.b32.xlu0 %v794, 64
        %v895 = vpop.permute.xlu0 %894
        %v898 = vsel %vm800, %v893, 0
        %900 = vmatprep.subr.mxu0 0.0
        %901 = vmatpush1.msra.mxu0 %v895
        %902 = vmatprep.subr.mxu0 0.0
        %903 = vmatpush1.msra.mxu0 0.0
        %904 = vmatprep.subr.mxu0 0.0
        %905 = vmatpush1.msra.mxu0 0.0
        %906 = vmatprep.subr.mxu0 0.0
        %907 = vmatpush1.msra.mxu0 0.0
        %908 = vmatprep.subr.mxu0 0.0
        %909 = vmatpush1.msra.mxu0 0.0
        %910 = vmatprep.subr.mxu0 0.0
        %911 = vmatpush1.msra.mxu0 0.0
        %912 = vmatprep.subr.mxu0 0.0
        %913 = vmatpush1.msra.mxu0 0.0
        %914 = vmatprep.subr.mxu0 0.0
        %915 = vmatpush1.msra.mxu0 0.0
        %916 = vmatprep.subr.mxu0 0.0
        %917 = vmatpush1.msra.mxu0 0.0
        %918 = vmatprep.subr.mxu0 0.0
        %919 = vmatpush1.msra.mxu0 0.0
        %920 = vmatprep.subr.mxu0 0.0
        %921 = vmatpush1.msra.mxu0 0.0
        %922 = vmatprep.subr.mxu0 0.0
        %923 = vmatpush1.msra.mxu0 0.0
        %924 = vmatprep.subr.mxu0 0.0
        %925 = vmatpush1.msra.mxu0 0.0
        %926 = vmatprep.subr.mxu0 0.0
        %927 = vmatpush1.msra.mxu0 0.0
        %928 = vmatprep.subr.mxu0 0.0
        %929 = vmatpush1.msra.mxu0 0.0
        %930 = vmatprep.subr.mxu0 0.0
        %931 = vmatpush1.msra.mxu0 0.0
        %932 = vmatprep.subr.mxu0 0.0
        %933 = vmatpush1.msra.mxu0 0.0
        %934 = vmatprep.subr.mxu0 0.0
        %935 = vmatpush1.msra.mxu0 0.0
        %936 = vmatprep.subr.mxu0 0.0
        %937 = vmatpush1.msra.mxu0 0.0
        %938 = vmatprep.subr.mxu0 0.0
        %939 = vmatpush1.msra.mxu0 0.0
        %940 = vmatprep.subr.mxu0 0.0
        %941 = vmatpush1.msra.mxu0 0.0
        %942 = vmatprep.subr.mxu0 0.0
        %943 = vmatpush1.msra.mxu0 0.0
        %944 = vmatprep.subr.mxu0 0.0
        %945 = vmatpush1.msra.mxu0 0.0
        %946 = vmatprep.subr.mxu0 0.0
        %947 = vmatpush1.msra.mxu0 0.0
        %948 = vmatprep.subr.mxu0 0.0
        %949 = vmatpush1.msra.mxu0 0.0
        %950 = vmatprep.subr.mxu0 0.0
        %951 = vmatpush1.msra.mxu0 0.0
        %952 = vmatprep.subr.mxu0 0.0
        %953 = vmatpush1.msra.mxu0 0.0
        %954 = vmatprep.subr.mxu0 0.0
        %955 = vmatpush1.msra.mxu0 0.0
        %956 = vmatprep.subr.mxu0 0.0
        %957 = vmatpush1.msra.mxu0 0.0
        %958 = vmatprep.subr.mxu0 0.0
        %959 = vmatpush1.msra.mxu0 0.0
        %960 = vmatprep.subr.mxu0 0.0
        %961 = vmatpush1.msra.mxu0 0.0
        %962 = vmatprep.subr.mxu0 0.0
        %963 = vmatpush1.msra.mxu0 0.0
        %964 = vmatprep.mubr.f32.mxu0 0.0
        %965 = vmatmul.mubr.f32.gmra.mrb[0].mxu0 %v898
        %v966 = vpop.f32.mrb[0].mxu0
        %v967 = vadd.f32 0.0, %v966
        %v968 = vpop.f32.mrb[0].mxu0
        %969 = vdwg.mxu0
        %970 = vrot.lane.b32.xlu0 %v794, 120
        %v971 = vpop.permute.xlu0 %970
        %972 = vrot.lane.b32.xlu0 %v794, 88
        %v973 = vpop.permute.xlu0 %972
        %v974 = vsel %vm800, %v971, 0
        %v976 = vsel %vm800, %v973, 0
        %978 = vmatprep.subr.mxu0 0.0
        %979 = vmatpush1.xpose.msra.mxu0 %v976
        %980 = vmatprep.subr.mxu0 0.0
        %981 = vmatpush1.xpose.msra.mxu0 0.0
        %982 = vmatprep.subr.mxu0 0.0
        %983 = vmatpush1.xpose.msra.mxu0 0.0
        %984 = vmatprep.subr.mxu0 0.0
        %985 = vmatpush1.xpose.msra.mxu0 0.0
        %986 = vmatprep.subr.mxu0 0.0
        %987 = vmatpush1.xpose.msra.mxu0 0.0
        %988 = vmatprep.subr.mxu0 0.0
        %989 = vmatpush1.xpose.msra.mxu0 0.0
        %990 = vmatprep.subr.mxu0 0.0
        %991 = vmatpush1.xpose.msra.mxu0 0.0
        %992 = vmatprep.subr.mxu0 0.0
        %993 = vmatpush1.xpose.msra.mxu0 0.0
        %994 = vmatprep.subr.mxu0 0.0
        %995 = vmatpush1.xpose.msra.mxu0 0.0
        %996 = vmatprep.subr.mxu0 0.0
        %997 = vmatpush1.xpose.msra.mxu0 0.0
        %998 = vmatprep.subr.mxu0 0.0
        %999 = vmatpush1.xpose.msra.mxu0 0.0
        %1000 = vmatprep.subr.mxu0 0.0
        %1001 = vmatpush1.xpose.msra.mxu0 0.0
        %1002 = vmatprep.subr.mxu0 0.0
        %1003 = vmatpush1.xpose.msra.mxu0 0.0
        %1004 = vmatprep.subr.mxu0 0.0
        %1005 = vmatpush1.xpose.msra.mxu0 0.0
        %1006 = vmatprep.subr.mxu0 0.0
        %1007 = vmatpush1.xpose.msra.mxu0 0.0
        %1008 = vmatprep.subr.mxu0 0.0
        %1009 = vmatpush1.xpose.msra.mxu0 0.0
        %1010 = vmatprep.subr.mxu0 0.0
        %1011 = vmatpush1.xpose.msra.mxu0 0.0
        %1012 = vmatprep.subr.mxu0 0.0
        %1013 = vmatpush1.xpose.msra.mxu0 0.0
        %1014 = vmatprep.subr.mxu0 0.0
        %1015 = vmatpush1.xpose.msra.mxu0 0.0
        %1016 = vmatprep.subr.mxu0 0.0
        %1017 = vmatpush1.xpose.msra.mxu0 0.0
        %1018 = vmatprep.subr.mxu0 0.0
        %1019 = vmatpush1.xpose.msra.mxu0 0.0
        %1020 = vmatprep.subr.mxu0 0.0
        %1021 = vmatpush1.xpose.msra.mxu0 0.0
        %1022 = vmatprep.subr.mxu0 0.0
        %1023 = vmatpush1.xpose.msra.mxu0 0.0
        %1024 = vmatprep.subr.mxu0 0.0
        %1025 = vmatpush1.xpose.msra.mxu0 0.0
        %1026 = vmatprep.subr.mxu0 0.0
        %1027 = vmatpush1.xpose.msra.mxu0 0.0
        %1028 = vmatprep.subr.mxu0 0.0
        %1029 = vmatpush1.xpose.msra.mxu0 0.0
        %1030 = vmatprep.subr.mxu0 0.0
        %1031 = vmatpush1.xpose.msra.mxu0 0.0
        %1032 = vmatprep.subr.mxu0 0.0
        %1033 = vmatpush1.xpose.msra.mxu0 0.0
        %1034 = vmatprep.subr.mxu0 0.0
        %1035 = vmatpush1.xpose.msra.mxu0 0.0
        %1036 = vmatprep.subr.mxu0 0.0
        %1037 = vmatpush1.xpose.msra.mxu0 0.0
        %1038 = vmatprep.subr.mxu0 0.0
        %1039 = vmatpush1.xpose.msra.mxu0 0.0
        %1040 = vmatprep.subr.mxu0 0.0
        %1041 = vmatpush1.xpose.msra.mxu0 0.0
        %1042 = vmatprep.mubr.f32.mxu0 0.0
        %1043 = vmatmul.mubr.f32.gmra.mrb[0].mxu0 %v974
        %v1044 = vpop.f32.mrb[0].mxu0
        %v1045 = vadd.f32 0.0, %v1044
        %v1046 = vpop.f32.mrb[0].mxu0
        %1047 = vdwg.mxu0
        %v1048 = vmul.f32 %v1045, 0.35355338
        %v1049 = vsel %vm881, -1e+30, %v1048
        %v1050 = vsel %vm800, %v1049, -inf
        %1051 = vmax.xlane.f32.xlu0 %v1050
        %v1052 = vpop.xlane.xlu0 %1051
        %v1053 = vsub.f32 %v1049, %v1052
        %v1054 = vmul.f32 %v1053, 1.442695
        %v1055 = vpow.pop %v1054
        %v1056 = vsel %vm800, %v1055, 0.0
        %1057 = vadd.xlane.f32.xlu0 %v1056
        %v1058 = vpop.xlane.xlu0 %1057
        %v1059 = vrcp.pop %v1058
        %v1060 = vmul.f32 %v1055, %v1059
        %1061 = vrot.lane.b32.xlu0 %v794, 56
        %v1062 = vpop.permute.xlu0 %1061
        %v1065 = vsel %vm800, %v1060, 0
        %1067 = vmatprep.subr.mxu0 0.0
        %1068 = vmatpush1.msra.mxu0 %v1062
        %1069 = vmatprep.subr.mxu0 0.0
        %1070 = vmatpush1.msra.mxu0 0.0
        %1071 = vmatprep.subr.mxu0 0.0
        %1072 = vmatpush1.msra.mxu0 0.0
        %1073 = vmatprep.subr.mxu0 0.0
        %1074 = vmatpush1.msra.mxu0 0.0
        %1075 = vmatprep.subr.mxu0 0.0
        %1076 = vmatpush1.msra.mxu0 0.0
        %1077 = vmatprep.subr.mxu0 0.0
        %1078 = vmatpush1.msra.mxu0 0.0
        %1079 = vmatprep.subr.mxu0 0.0
        %1080 = vmatpush1.msra.mxu0 0.0
        %1081 = vmatprep.subr.mxu0 0.0
        %1082 = vmatpush1.msra.mxu0 0.0
        %1083 = vmatprep.subr.mxu0 0.0
        %1084 = vmatpush1.msra.mxu0 0.0
        %1085 = vmatprep.subr.mxu0 0.0
        %1086 = vmatpush1.msra.mxu0 0.0
        %1087 = vmatprep.subr.mxu0 0.0
        %1088 = vmatpush1.msra.mxu0 0.0
        %1089 = vmatprep.subr.mxu0 0.0
        %1090 = vmatpush1.msra.mxu0 0.0
        %1091 = vmatprep.subr.mxu0 0.0
        %1092 = vmatpush1.msra.mxu0 0.0
        %1093 = vmatprep.subr.mxu0 0.0
        %1094 = vmatpush1.msra.mxu0 0.0
        %1095 = vmatprep.subr.mxu0 0.0
        %1096 = vmatpush1.msra.mxu0 0.0
        %1097 = vmatprep.subr.mxu0 0.0
        %1098 = vmatpush1.msra.mxu0 0.0
        %1099 = vmatprep.subr.mxu0 0.0
        %1100 = vmatpush1.msra.mxu0 0.0
        %1101 = vmatprep.subr.mxu0 0.0
        %1102 = vmatpush1.msra.mxu0 0.0
        %1103 = vmatprep.subr.mxu0 0.0
        %1104 = vmatpush1.msra.mxu0 0.0
        %1105 = vmatprep.subr.mxu0 0.0
        %1106 = vmatpush1.msra.mxu0 0.0
        %1107 = vmatprep.subr.mxu0 0.0
        %1108 = vmatpush1.msra.mxu0 0.0
        %1109 = vmatprep.subr.mxu0 0.0
        %1110 = vmatpush1.msra.mxu0 0.0
        %1111 = vmatprep.subr.mxu0 0.0
        %1112 = vmatpush1.msra.mxu0 0.0
        %1113 = vmatprep.subr.mxu0 0.0
        %1114 = vmatpush1.msra.mxu0 0.0
        %1115 = vmatprep.subr.mxu0 0.0
        %1116 = vmatpush1.msra.mxu0 0.0
        %1117 = vmatprep.subr.mxu0 0.0
        %1118 = vmatpush1.msra.mxu0 0.0
        %1119 = vmatprep.subr.mxu0 0.0
        %1120 = vmatpush1.msra.mxu0 0.0
        %1121 = vmatprep.subr.mxu0 0.0
        %1122 = vmatpush1.msra.mxu0 0.0
        %1123 = vmatprep.subr.mxu0 0.0
        %1124 = vmatpush1.msra.mxu0 0.0
        %1125 = vmatprep.subr.mxu0 0.0
        %1126 = vmatpush1.msra.mxu0 0.0
        %1127 = vmatprep.subr.mxu0 0.0
        %1128 = vmatpush1.msra.mxu0 0.0
        %1129 = vmatprep.subr.mxu0 0.0
        %1130 = vmatpush1.msra.mxu0 0.0
        %1131 = vmatprep.mubr.f32.mxu0 0.0
        %1132 = vmatmul.mubr.f32.gmra.mrb[0].mxu0 %v1065
        %v1133 = vpop.f32.mrb[0].mxu0
        %v1134 = vadd.f32 0.0, %v1133
        %v1135 = vpop.f32.mrb[0].mxu0
        %1136 = vdwg.mxu0
        %1137 = vrot.lane.b32.xlu0 %v794, 112
        %v1138 = vpop.permute.xlu0 %1137
        %1139 = vrot.lane.b32.xlu0 %v794, 80
        %v1140 = vpop.permute.xlu0 %1139
        %v1141 = vsel %vm800, %v1138, 0
        %v1143 = vsel %vm800, %v1140, 0
        %1145 = vmatprep.subr.mxu0 0.0
        %1146 = vmatpush1.xpose.msra.mxu0 %v1143
        %1147 = vmatprep.subr.mxu0 0.0
        %1148 = vmatpush1.xpose.msra.mxu0 0.0
        %1149 = vmatprep.subr.mxu0 0.0
        %1150 = vmatpush1.xpose.msra.mxu0 0.0
        %1151 = vmatprep.subr.mxu0 0.0
        %1152 = vmatpush1.xpose.msra.mxu0 0.0
        %1153 = vmatprep.subr.mxu0 0.0
        %1154 = vmatpush1.xpose.msra.mxu0 0.0
        %1155 = vmatprep.subr.mxu0 0.0
        %1156 = vmatpush1.xpose.msra.mxu0 0.0
        %1157 = vmatprep.subr.mxu0 0.0
        %1158 = vmatpush1.xpose.msra.mxu0 0.0
        %1159 = vmatprep.subr.mxu0 0.0
        %1160 = vmatpush1.xpose.msra.mxu0 0.0
        %1161 = vmatprep.subr.mxu0 0.0
        %1162 = vmatpush1.xpose.msra.mxu0 0.0
        %1163 = vmatprep.subr.mxu0 0.0
        %1164 = vmatpush1.xpose.msra.mxu0 0.0
        %1165 = vmatprep.subr.mxu0 0.0
        %1166 = vmatpush1.xpose.msra.mxu0 0.0
        %1167 = vmatprep.subr.mxu0 0.0
        %1168 = vmatpush1.xpose.msra.mxu0 0.0
        %1169 = vmatprep.subr.mxu0 0.0
        %1170 = vmatpush1.xpose.msra.mxu0 0.0
        %1171 = vmatprep.subr.mxu0 0.0
        %1172 = vmatpush1.xpose.msra.mxu0 0.0
        %1173 = vmatprep.subr.mxu0 0.0
        %1174 = vmatpush1.xpose.msra.mxu0 0.0
        %1175 = vmatprep.subr.mxu0 0.0
        %1176 = vmatpush1.xpose.msra.mxu0 0.0
        %1177 = vmatprep.subr.mxu0 0.0
        %1178 = vmatpush1.xpose.msra.mxu0 0.0
        %1179 = vmatprep.subr.mxu0 0.0
        %1180 = vmatpush1.xpose.msra.mxu0 0.0
        %1181 = vmatprep.subr.mxu0 0.0
        %1182 = vmatpush1.xpose.msra.mxu0 0.0
        %1183 = vmatprep.subr.mxu0 0.0
        %1184 = vmatpush1.xpose.msra.mxu0 0.0
        %1185 = vmatprep.subr.mxu0 0.0
        %1186 = vmatpush1.xpose.msra.mxu0 0.0
        %1187 = vmatprep.subr.mxu0 0.0
        %1188 = vmatpush1.xpose.msra.mxu0 0.0
        %1189 = vmatprep.subr.mxu0 0.0
        %1190 = vmatpush1.xpose.msra.mxu0 0.0
        %1191 = vmatprep.subr.mxu0 0.0
        %1192 = vmatpush1.xpose.msra.mxu0 0.0
        %1193 = vmatprep.subr.mxu0 0.0
        %1194 = vmatpush1.xpose.msra.mxu0 0.0
        %1195 = vmatprep.subr.mxu0 0.0
        %1196 = vmatpush1.xpose.msra.mxu0 0.0
        %1197 = vmatprep.subr.mxu0 0.0
        %1198 = vmatpush1.xpose.msra.mxu0 0.0
        %1199 = vmatprep.subr.mxu0 0.0
        %1200 = vmatpush1.xpose.msra.mxu0 0.0
        %1201 = vmatprep.subr.mxu0 0.0
        %1202 = vmatpush1.xpose.msra.mxu0 0.0
        %1203 = vmatprep.subr.mxu0 0.0
        %1204 = vmatpush1.xpose.msra.mxu0 0.0
        %1205 = vmatprep.subr.mxu0 0.0
        %1206 = vmatpush1.xpose.msra.mxu0 0.0
        %1207 = vmatprep.subr.mxu0 0.0
        %1208 = vmatpush1.xpose.msra.mxu0 0.0
        %1209 = vmatprep.mubr.f32.mxu0 0.0
        %1210 = vmatmul.mubr.f32.gmra.mrb[0].mxu0 %v1141
        %v1211 = vpop.f32.mrb[0].mxu0
        %v1212 = vadd.f32 0.0, %v1211
        %v1213 = vpop.f32.mrb[0].mxu0
        %1214 = vdwg.mxu0
        %v1215 = vmul.f32 %v1212, 0.35355338
        %v1216 = vsel %vm881, -1e+30, %v1215
        %v1217 = vsel %vm800, %v1216, -inf
        %1218 = vmax.xlane.f32.xlu0 %v1217
        %v1219 = vpop.xlane.xlu0 %1218
        %v1220 = vsub.f32 %v1216, %v1219
        %v1221 = vmul.f32 %v1220, 1.442695
        %v1222 = vpow.pop %v1221
        %v1223 = vsel %vm800, %v1222, 0.0
        %1224 = vadd.xlane.f32.xlu0 %v1223
        %v1225 = vpop.xlane.xlu0 %1224
        %v1226 = vrcp.pop %v1225
        %v1227 = vmul.f32 %v1222, %v1226
        %1228 = vrot.lane.b32.xlu0 %v794, 48
        %v1229 = vpop.permute.xlu0 %1228
        %v1232 = vsel %vm800, %v1227, 0
        %1234 = vmatprep.subr.mxu0 0.0
        %1235 = vmatpush1.msra.mxu0 %v1229
        %1236 = vmatprep.subr.mxu0 0.0
        %1237 = vmatpush1.msra.mxu0 0.0
        %1238 = vmatprep.subr.mxu0 0.0
        %1239 = vmatpush1.msra.mxu0 0.0
        %1240 = vmatprep.subr.mxu0 0.0
        %1241 = vmatpush1.msra.mxu0 0.0
        %1242 = vmatprep.subr.mxu0 0.0
        %1243 = vmatpush1.msra.mxu0 0.0
        %1244 = vmatprep.subr.mxu0 0.0
        %1245 = vmatpush1.msra.mxu0 0.0
        %1246 = vmatprep.subr.mxu0 0.0
        %1247 = vmatpush1.msra.mxu0 0.0
        %1248 = vmatprep.subr.mxu0 0.0
        %1249 = vmatpush1.msra.mxu0 0.0
        %1250 = vmatprep.subr.mxu0 0.0
        %1251 = vmatpush1.msra.mxu0 0.0
        %1252 = vmatprep.subr.mxu0 0.0
        %1253 = vmatpush1.msra.mxu0 0.0
        %1254 = vmatprep.subr.mxu0 0.0
        %1255 = vmatpush1.msra.mxu0 0.0
        %1256 = vmatprep.subr.mxu0 0.0
        %1257 = vmatpush1.msra.mxu0 0.0
        %1258 = vmatprep.subr.mxu0 0.0
        %1259 = vmatpush1.msra.mxu0 0.0
        %1260 = vmatprep.subr.mxu0 0.0
        %1261 = vmatpush1.msra.mxu0 0.0
        %1262 = vmatprep.subr.mxu0 0.0
        %1263 = vmatpush1.msra.mxu0 0.0
        %1264 = vmatprep.subr.mxu0 0.0
        %1265 = vmatpush1.msra.mxu0 0.0
        %1266 = vmatprep.subr.mxu0 0.0
        %1267 = vmatpush1.msra.mxu0 0.0
        %1268 = vmatprep.subr.mxu0 0.0
        %1269 = vmatpush1.msra.mxu0 0.0
        %1270 = vmatprep.subr.mxu0 0.0
        %1271 = vmatpush1.msra.mxu0 0.0
        %1272 = vmatprep.subr.mxu0 0.0
        %1273 = vmatpush1.msra.mxu0 0.0
        %1274 = vmatprep.subr.mxu0 0.0
        %1275 = vmatpush1.msra.mxu0 0.0
        %1276 = vmatprep.subr.mxu0 0.0
        %1277 = vmatpush1.msra.mxu0 0.0
        %1278 = vmatprep.subr.mxu0 0.0
        %1279 = vmatpush1.msra.mxu0 0.0
        %1280 = vmatprep.subr.mxu0 0.0
        %1281 = vmatpush1.msra.mxu0 0.0
        %1282 = vmatprep.subr.mxu0 0.0
        %1283 = vmatpush1.msra.mxu0 0.0
        %1284 = vmatprep.subr.mxu0 0.0
        %1285 = vmatpush1.msra.mxu0 0.0
        %1286 = vmatprep.subr.mxu0 0.0
        %1287 = vmatpush1.msra.mxu0 0.0
        %1288 = vmatprep.subr.mxu0 0.0
        %1289 = vmatpush1.msra.mxu0 0.0
        %1290 = vmatprep.subr.mxu0 0.0
        %1291 = vmatpush1.msra.mxu0 0.0
        %1292 = vmatprep.subr.mxu0 0.0
        %1293 = vmatpush1.msra.mxu0 0.0
        %1294 = vmatprep.subr.mxu0 0.0
        %1295 = vmatpush1.msra.mxu0 0.0
        %1296 = vmatprep.subr.mxu0 0.0
        %1297 = vmatpush1.msra.mxu0 0.0
        %1298 = vmatprep.mubr.f32.mxu0 0.0
        %1299 = vmatmul.mubr.f32.gmra.mrb[0].mxu0 %v1232
        %v1300 = vpop.f32.mrb[0].mxu0
        %v1301 = vadd.f32 0.0, %v1300
        %v1302 = vpop.f32.mrb[0].mxu0
        %1303 = vdwg.mxu0
        %1304 = vrot.lane.b32.xlu0 %v794, 104
        %v1305 = vpop.permute.xlu0 %1304
        %1306 = vrot.lane.b32.xlu0 %v794, 72
        %v1307 = vpop.permute.xlu0 %1306
        %v1308 = vsel %vm800, %v1305, 0
        %v1310 = vsel %vm800, %v1307, 0
        %1312 = vmatprep.subr.mxu0 0.0
        %1313 = vmatpush1.xpose.msra.mxu0 %v1310
        %1314 = vmatprep.subr.mxu0 0.0
        %1315 = vmatpush1.xpose.msra.mxu0 0.0
        %1316 = vmatprep.subr.mxu0 0.0
        %1317 = vmatpush1.xpose.msra.mxu0 0.0
        %1318 = vmatprep.subr.mxu0 0.0
        %1319 = vmatpush1.xpose.msra.mxu0 0.0
        %1320 = vmatprep.subr.mxu0 0.0
        %1321 = vmatpush1.xpose.msra.mxu0 0.0
        %1322 = vmatprep.subr.mxu0 0.0
        %1323 = vmatpush1.xpose.msra.mxu0 0.0
        %1324 = vmatprep.subr.mxu0 0.0
        %1325 = vmatpush1.xpose.msra.mxu0 0.0
        %1326 = vmatprep.subr.mxu0 0.0
        %1327 = vmatpush1.xpose.msra.mxu0 0.0
        %1328 = vmatprep.subr.mxu0 0.0
        %1329 = vmatpush1.xpose.msra.mxu0 0.0
        %1330 = vmatprep.subr.mxu0 0.0
        %1331 = vmatpush1.xpose.msra.mxu0 0.0
        %1332 = vmatprep.subr.mxu0 0.0
        %1333 = vmatpush1.xpose.msra.mxu0 0.0
        %1334 = vmatprep.subr.mxu0 0.0
        %1335 = vmatpush1.xpose.msra.mxu0 0.0
        %1336 = vmatprep.subr.mxu0 0.0
        %1337 = vmatpush1.xpose.msra.mxu0 0.0
        %1338 = vmatprep.subr.mxu0 0.0
        %1339 = vmatpush1.xpose.msra.mxu0 0.0
        %1340 = vmatprep.subr.mxu0 0.0
        %1341 = vmatpush1.xpose.msra.mxu0 0.0
        %1342 = vmatprep.subr.mxu0 0.0
        %1343 = vmatpush1.xpose.msra.mxu0 0.0
        %1344 = vmatprep.subr.mxu0 0.0
        %1345 = vmatpush1.xpose.msra.mxu0 0.0
        %1346 = vmatprep.subr.mxu0 0.0
        %1347 = vmatpush1.xpose.msra.mxu0 0.0
        %1348 = vmatprep.subr.mxu0 0.0
        %1349 = vmatpush1.xpose.msra.mxu0 0.0
        %1350 = vmatprep.subr.mxu0 0.0
        %1351 = vmatpush1.xpose.msra.mxu0 0.0
        %1352 = vmatprep.subr.mxu0 0.0
        %1353 = vmatpush1.xpose.msra.mxu0 0.0
        %1354 = vmatprep.subr.mxu0 0.0
        %1355 = vmatpush1.xpose.msra.mxu0 0.0
        %1356 = vmatprep.subr.mxu0 0.0
        %1357 = vmatpush1.xpose.msra.mxu0 0.0
        %1358 = vmatprep.subr.mxu0 0.0
        %1359 = vmatpush1.xpose.msra.mxu0 0.0
        %1360 = vmatprep.subr.mxu0 0.0
        %1361 = vmatpush1.xpose.msra.mxu0 0.0
        %1362 = vmatprep.subr.mxu0 0.0
        %1363 = vmatpush1.xpose.msra.mxu0 0.0
        %1364 = vmatprep.subr.mxu0 0.0
        %1365 = vmatpush1.xpose.msra.mxu0 0.0
        %1366 = vmatprep.subr.mxu0 0.0
        %1367 = vmatpush1.xpose.msra.mxu0 0.0
        %1368 = vmatprep.subr.mxu0 0.0
        %1369 = vmatpush1.xpose.msra.mxu0 0.0
        %1370 = vmatprep.subr.mxu0 0.0
        %1371 = vmatpush1.xpose.msra.mxu0 0.0
        %1372 = vmatprep.subr.mxu0 0.0
        %1373 = vmatpush1.xpose.msra.mxu0 0.0
        %1374 = vmatprep.subr.mxu0 0.0
        %1375 = vmatpush1.xpose.msra.mxu0 0.0
        %1376 = vmatprep.mubr.f32.mxu0 0.0
        %1377 = vmatmul.mubr.f32.gmra.mrb[0].mxu0 %v1308
        %v1378 = vpop.f32.mrb[0].mxu0
        %v1379 = vadd.f32 0.0, %v1378
        %v1380 = vpop.f32.mrb[0].mxu0
        %1381 = vdwg.mxu0
        %v1382 = vmul.f32 %v1379, 0.35355338
        %v1383 = vsel %vm881, -1e+30, %v1382
        %v1384 = vsel %vm800, %v1383, -inf
        %1385 = vmax.xlane.f32.xlu0 %v1384
        %v1386 = vpop.xlane.xlu0 %1385
        %v1387 = vsub.f32 %v1383, %v1386
        %v1388 = vmul.f32 %v1387, 1.442695
        %v1389 = vpow.pop %v1388
        %v1390 = vsel %vm800, %v1389, 0.0
        %1391 = vadd.xlane.f32.xlu0 %v1390
        %v1392 = vpop.xlane.xlu0 %1391
        %v1393 = vrcp.pop %v1392
        %v1394 = vmul.f32 %v1389, %v1393
        %1395 = vrot.lane.b32.xlu0 %v794, 40
        %v1396 = vpop.permute.xlu0 %1395
        %v1399 = vsel %vm800, %v1394, 0
        %1401 = vmatprep.subr.mxu0 0.0
        %1402 = vmatpush1.msra.mxu0 %v1396
        %1403 = vmatprep.subr.mxu0 0.0
        %1404 = vmatpush1.msra.mxu0 0.0
        %1405 = vmatprep.subr.mxu0 0.0
        %1406 = vmatpush1.msra.mxu0 0.0
        %1407 = vmatprep.subr.mxu0 0.0
        %1408 = vmatpush1.msra.mxu0 0.0
        %1409 = vmatprep.subr.mxu0 0.0
        %1410 = vmatpush1.msra.mxu0 0.0
        %1411 = vmatprep.subr.mxu0 0.0
        %1412 = vmatpush1.msra.mxu0 0.0
        %1413 = vmatprep.subr.mxu0 0.0
        %1414 = vmatpush1.msra.mxu0 0.0
        %1415 = vmatprep.subr.mxu0 0.0
        %1416 = vmatpush1.msra.mxu0 0.0
        %1417 = vmatprep.subr.mxu0 0.0
        %1418 = vmatpush1.msra.mxu0 0.0
        %1419 = vmatprep.subr.mxu0 0.0
        %1420 = vmatpush1.msra.mxu0 0.0
        %1421 = vmatprep.subr.mxu0 0.0
        %1422 = vmatpush1.msra.mxu0 0.0
        %1423 = vmatprep.subr.mxu0 0.0
        %1424 = vmatpush1.msra.mxu0 0.0
        %1425 = vmatprep.subr.mxu0 0.0
        %1426 = vmatpush1.msra.mxu0 0.0
        %1427 = vmatprep.subr.mxu0 0.0
        %1428 = vmatpush1.msra.mxu0 0.0
        %1429 = vmatprep.subr.mxu0 0.0
        %1430 = vmatpush1.msra.mxu0 0.0
        %1431 = vmatprep.subr.mxu0 0.0
        %1432 = vmatpush1.msra.mxu0 0.0
        %1433 = vmatprep.subr.mxu0 0.0
        %1434 = vmatpush1.msra.mxu0 0.0
        %1435 = vmatprep.subr.mxu0 0.0
        %1436 = vmatpush1.msra.mxu0 0.0
        %1437 = vmatprep.subr.mxu0 0.0
        %1438 = vmatpush1.msra.mxu0 0.0
        %1439 = vmatprep.subr.mxu0 0.0
        %1440 = vmatpush1.msra.mxu0 0.0
        %1441 = vmatprep.subr.mxu0 0.0
        %1442 = vmatpush1.msra.mxu0 0.0
        %1443 = vmatprep.subr.mxu0 0.0
        %1444 = vmatpush1.msra.mxu0 0.0
        %1445 = vmatprep.subr.mxu0 0.0
        %1446 = vmatpush1.msra.mxu0 0.0
        %1447 = vmatprep.subr.mxu0 0.0
        %1448 = vmatpush1.msra.mxu0 0.0
        %1449 = vmatprep.subr.mxu0 0.0
        %1450 = vmatpush1.msra.mxu0 0.0
        %1451 = vmatprep.subr.mxu0 0.0
        %1452 = vmatpush1.msra.mxu0 0.0
        %1453 = vmatprep.subr.mxu0 0.0
        %1454 = vmatpush1.msra.mxu0 0.0
        %1455 = vmatprep.subr.mxu0 0.0
        %1456 = vmatpush1.msra.mxu0 0.0
        %1457 = vmatprep.subr.mxu0 0.0
        %1458 = vmatpush1.msra.mxu0 0.0
        %1459 = vmatprep.subr.mxu0 0.0
        %1460 = vmatpush1.msra.mxu0 0.0
        %1461 = vmatprep.subr.mxu0 0.0
        %1462 = vmatpush1.msra.mxu0 0.0
        %1463 = vmatprep.subr.mxu0 0.0
        %1464 = vmatpush1.msra.mxu0 0.0
        %1465 = vmatprep.mubr.f32.mxu0 0.0
        %1466 = vmatmul.mubr.f32.gmra.mrb[0].mxu0 %v1399
        %v1467 = vpop.f32.mrb[0].mxu0
        %v1468 = vadd.f32 0.0, %v1467
        %v1469 = vpop.f32.mrb[0].mxu0
        %1470 = vdwg.mxu0
        %1472 = vrot.lane.b32.xlu0 %v1134, 8
        %v1473 = vpop.permute.xlu0 %1472
        %1476 = vrot.lane.b32.xlu0 %v1301, 16
        %v1477 = vpop.permute.xlu0 %1476
        %1480 = vrot.lane.b32.xlu0 %v1468, 24
        %v1481 = vpop.permute.xlu0 %1480
        %v1483 = vsel %vm800, %v967, %v1473
        %vm1484 = vcmask 130048
        %v1485 = vsel %vm1484, %v1483, %v1477
        %vm1486 = vcmask 195584
        %v1487 = vsel %vm1486, %v1485, %v1481
        %v1488 = vld [vmem:[%s8] sm:$0xff]
        %v1489 = vld [vmem:[%s8 + $0x8] sm:$0xff]
        %v1490 = vld [vmem:[%s8 + $0x10] sm:$0xff]
        %v1491 = vld [vmem:[%s8 + $0x18] sm:$0xff]
        %v1492 = vld [vmem:[%s9] sm:$0x1]
        %v1494 = vlaneseq
        %v1495 = vshrl.u32 %v1494, 7
        %v1496 = vsub.s32 0, %v1495
        %v1497 = vrot.slane %v1492, %v1496
        %v1500 = vsel %vm682, %v1487, 0
        %1502 = vmatprep.subr.mxu0 0.0
        %1503 = vmatpush1.msra.mxu0 %v1488
        %1504 = vmatprep.subr.mxu0 0.0
        %1505 = vmatpush1.msra.mxu0 %v1489
        %1506 = vmatprep.subr.mxu0 0.0
        %1507 = vmatpush1.msra.mxu0 %v1490
        %1508 = vmatprep.subr.mxu0 0.0
        %1509 = vmatpush1.msra.mxu0 %v1491
        %1510 = vmatprep.subr.mxu0 0.0
        %1511 = vmatpush1.msra.mxu0 0.0
        %1512 = vmatprep.subr.mxu0 0.0
        %1513 = vmatpush1.msra.mxu0 0.0
        %1514 = vmatprep.subr.mxu0 0.0
        %1515 = vmatpush1.msra.mxu0 0.0
        %1516 = vmatprep.subr.mxu0 0.0
        %1517 = vmatpush1.msra.mxu0 0.0
        %1518 = vmatprep.subr.mxu0 0.0
        %1519 = vmatpush1.msra.mxu0 0.0
        %1520 = vmatprep.subr.mxu0 0.0
        %1521 = vmatpush1.msra.mxu0 0.0
        %1522 = vmatprep.subr.mxu0 0.0
        %1523 = vmatpush1.msra.mxu0 0.0
        %1524 = vmatprep.subr.mxu0 0.0
        %1525 = vmatpush1.msra.mxu0 0.0
        %1526 = vmatprep.subr.mxu0 0.0
        %1527 = vmatpush1.msra.mxu0 0.0
        %1528 = vmatprep.subr.mxu0 0.0
        %1529 = vmatpush1.msra.mxu0 0.0
        %1530 = vmatprep.subr.mxu0 0.0
        %1531 = vmatpush1.msra.mxu0 0.0
        %1532 = vmatprep.subr.mxu0 0.0
        %1533 = vmatpush1.msra.mxu0 0.0
        %1534 = vmatprep.subr.mxu0 0.0
        %1535 = vmatpush1.msra.mxu0 0.0
        %1536 = vmatprep.subr.mxu0 0.0
        %1537 = vmatpush1.msra.mxu0 0.0
        %1538 = vmatprep.subr.mxu0 0.0
        %1539 = vmatpush1.msra.mxu0 0.0
        %1540 = vmatprep.subr.mxu0 0.0
        %1541 = vmatpush1.msra.mxu0 0.0
        %1542 = vmatprep.subr.mxu0 0.0
        %1543 = vmatpush1.msra.mxu0 0.0
        %1544 = vmatprep.subr.mxu0 0.0
        %1545 = vmatpush1.msra.mxu0 0.0
        %1546 = vmatprep.subr.mxu0 0.0
        %1547 = vmatpush1.msra.mxu0 0.0
        %1548 = vmatprep.subr.mxu0 0.0
        %1549 = vmatpush1.msra.mxu0 0.0
        %1550 = vmatprep.subr.mxu0 0.0
        %1551 = vmatpush1.msra.mxu0 0.0
        %1552 = vmatprep.subr.mxu0 0.0
        %1553 = vmatpush1.msra.mxu0 0.0
        %1554 = vmatprep.subr.mxu0 0.0
        %1555 = vmatpush1.msra.mxu0 0.0
        %1556 = vmatprep.subr.mxu0 0.0
        %1557 = vmatpush1.msra.mxu0 0.0
        %1558 = vmatprep.subr.mxu0 0.0
        %1559 = vmatpush1.msra.mxu0 0.0
        %1560 = vmatprep.subr.mxu0 0.0
        %1561 = vmatpush1.msra.mxu0 0.0
        %1562 = vmatprep.subr.mxu0 0.0
        %1563 = vmatpush1.msra.mxu0 0.0
        %1564 = vmatprep.subr.mxu0 0.0
        %1565 = vmatpush1.msra.mxu0 0.0
        %1566 = vmatprep.mubr.f32.mxu0 0.0
        %1567 = vmatmul.mubr.f32.gmra.mrb[0].mxu0 %v1500
        %v1568 = vpop.f32.mrb[0].mxu0
        %v1569 = vadd.f32 %v1497, %v1568
        %v1570 = vpop.f32.mrb[0].mxu0
        %1571 = vdwg.mxu0
        %v1572 = vadd.f32 %v710, %v1569
        %v1573 = vld [vmem:[%s10] sm:$0x1]
        %v1574 = vld [vmem:[%s11] sm:$0x1]
        %v1575 = vsel %vm682, %v1572, 0.0
        %1576 = vadd.xlane.f32.xlu0 %v1575
        %v1577 = vpop.xlane.xlu0 %1576
        %v1578 = vmul.f32 %v1577, %v686
        %v1579 = vsub.f32 %v1572, %v1578
        %v1580 = vmul.f32 %v1579, %v1579
        %v1581 = vsel %vm682, %v1580, 0.0
        %1582 = vadd.xlane.f32.xlu0 %v1581
        %v1583 = vpop.xlane.xlu0 %1582
        %v1584 = vmul.f32 %v1583, %v686
        %v1585 = vadd.f32 %v1584, 1e-12
        %v1586 = vrsqrt.pop %v1585
        %v1587 = vmul.f32 %v1579, %v1586
        %v1589 = vlaneseq
        %v1590 = vshrl.u32 %v1589, 7
        %v1591 = vsub.s32 0, %v1590
        %v1592 = vrot.slane %v1573, %v1591
        %v1594 = vmul.f32 %v1587, %v1592
        %v1596 = vlaneseq
        %v1597 = vshrl.u32 %v1596, 7
        %v1598 = vsub.s32 0, %v1597
        %v1599 = vrot.slane %v1574, %v1598
        %v1601 = vadd.f32 %v1594, %v1599
        %v1602 = vld [vmem:[%s12] sm:$0xff]
        %v1603 = vld [vmem:[%s12 + $0x8] sm:$0xff]
        %v1604 = vld [vmem:[%s12 + $0x10] sm:$0xff]
        %v1605 = vld [vmem:[%s12 + $0x18] sm:$0xff]
        %v1606 = vld [vmem:[%s13] sm:$0x1]
        %v1608 = vlaneseq
        %v1609 = vshrl.u32 %v1608, 7
        %v1610 = vsub.s32 0, %v1609
        %v1611 = vrot.slane %v1606, %v1610
        %v1614 = vsel %vm682, %v1601, 0
        %1616 = vmatprep.subr.mxu0 0.0
        %1617 = vmatpush1.msra.mxu0 %v1602
        %1618 = vmatprep.subr.mxu0 0.0
        %1619 = vmatpush1.msra.mxu0 %v1603
        %1620 = vmatprep.subr.mxu0 0.0
        %1621 = vmatpush1.msra.mxu0 %v1604
        %1622 = vmatprep.subr.mxu0 0.0
        %1623 = vmatpush1.msra.mxu0 %v1605
        %1624 = vmatprep.subr.mxu0 0.0
        %1625 = vmatpush1.msra.mxu0 0.0
        %1626 = vmatprep.subr.mxu0 0.0
        %1627 = vmatpush1.msra.mxu0 0.0
        %1628 = vmatprep.subr.mxu0 0.0
        %1629 = vmatpush1.msra.mxu0 0.0
        %1630 = vmatprep.subr.mxu0 0.0
        %1631 = vmatpush1.msra.mxu0 0.0
        %1632 = vmatprep.subr.mxu0 0.0
        %1633 = vmatpush1.msra.mxu0 0.0
        %1634 = vmatprep.subr.mxu0 0.0
        %1635 = vmatpush1.msra.mxu0 0.0
        %1636 = vmatprep.subr.mxu0 0.0
        %1637 = vmatpush1.msra.mxu0 0.0
        %1638 = vmatprep.subr.mxu0 0.0
        %1639 = vmatpush1.msra.mxu0 0.0
        %1640 = vmatprep.subr.mxu0 0.0
        %1641 = vmatpush1.msra.mxu0 0.0
        %1642 = vmatprep.subr.mxu0 0.0
        %1643 = vmatpush1.msra.mxu0 0.0
        %1644 = vmatprep.subr.mxu0 0.0
        %1645 = vmatpush1.msra.mxu0 0.0
        %1646 = vmatprep.subr.mxu0 0.0
        %1647 = vmatpush1.msra.mxu0 0.0
        %1648 = vmatprep.subr.mxu0 0.0
        %1649 = vmatpush1.msra.mxu0 0.0
        %1650 = vmatprep.subr.mxu0 0.0
        %1651 = vmatpush1.msra.mxu0 0.0
        %1652 = vmatprep.subr.mxu0 0.0
        %1653 = vmatpush1.msra.mxu0 0.0
        %1654 = vmatprep.subr.mxu0 0.0
        %1655 = vmatpush1.msra.mxu0 0.0
        %1656 = vmatprep.subr.mxu0 0.0
        %1657 = vmatpush1.msra.mxu0 0.0
        %1658 = vmatprep.subr.mxu0 0.0
        %1659 = vmatpush1.msra.mxu0 0.0
        %1660 = vmatprep.subr.mxu0 0.0
        %1661 = vmatpush1.msra.mxu0 0.0
        %1662 = vmatprep.subr.mxu0 0.0
        %1663 = vmatpush1.msra.mxu0 0.0
        %1664 = vmatprep.subr.mxu0 0.0
        %1665 = vmatpush1.msra.mxu0 0.0
        %1666 = vmatprep.subr.mxu0 0.0
        %1667 = vmatpush1.msra.mxu0 0.0
        %1668 = vmatprep.subr.mxu0 0.0
        %1669 = vmatpush1.msra.mxu0 0.0
        %1670 = vmatprep.subr.mxu0 0.0
        %1671 = vmatpush1.msra.mxu0 0.0
        %1672 = vmatprep.subr.mxu0 0.0
        %1673 = vmatpush1.msra.mxu0 0.0
        %1674 = vmatprep.subr.mxu0 0.0
        %1675 = vmatpush1.msra.mxu0 0.0
        %1676 = vmatprep.subr.mxu0 0.0
        %1677 = vmatpush1.msra.mxu0 0.0
        %1678 = vmatprep.subr.mxu0 0.0
        %1679 = vmatpush1.msra.mxu0 0.0
        %1680 = vmatprep.mubr.f32.mxu0 0.0
        %1681 = vmatmul.mubr.f32.gmra.mrb[0].mxu0 %v1614
        %v1682 = vpop.f32.mrb[0].mxu0
        %v1683 = vadd.f32 %v1611, %v1682
        %v1684 = vpop.f32.mrb[0].mxu0
        %1685 = vdwg.mxu0
        %v1686 = vmul.f32 %v1683, 0.5
        %v1687 = vmul.f32 %v1683, 0.044715
        %v1688 = vmul.f32 %v1687, %v1683
        %v1689 = vmul.f32 %v1688, %v1683
        %v1690 = vadd.f32 %v1683, %v1689
        %v1691 = vmul.f32 %v1690, 0.7978846
        %v1692 = vtanh.pop %v1691
        %v1693 = vadd.f32 %v1692, 1.0
        %v1694 = vmul.f32 %v1686, %v1693
        %v1695 = vld [vmem:[%s14] sm:$0xff]
        %v1696 = vld [vmem:[%s14 + $0x8] sm:$0xff]
        %v1697 = vld [vmem:[%s14 + $0x10] sm:$0xff]
        %v1698 = vld [vmem:[%s14 + $0x18] sm:$0xff]
        %v1699 = vld [vmem:[%s14 + $0x20] sm:$0xff]
        %v1700 = vld [vmem:[%s14 + $0x28] sm:$0xff]
        %v1701 = vld [vmem:[%s14 + $0x30] sm:$0xff]
        %v1702 = vld [vmem:[%s14 + $0x38] sm:$0xff]
        %v1703 = vld [vmem:[%s15] sm:$0x1]
        %v1705 = vlaneseq
        %v1706 = vshrl.u32 %v1705, 7
        %v1707 = vsub.s32 0, %v1706
        %v1708 = vrot.slane %v1703, %v1707
        %vm1710 = vcmask 523264
        %v1712 = vsel %vm1710, %v1694, 0
        %1714 = vmatprep.subr.mxu0 0.0
        %1715 = vmatpush1.msra.mxu0 %v1695
        %1716 = vmatprep.subr.mxu0 0.0
        %1717 = vmatpush1.msra.mxu0 %v1696
        %1718 = vmatprep.subr.mxu0 0.0
        %1719 = vmatpush1.msra.mxu0 %v1697
        %1720 = vmatprep.subr.mxu0 0.0
        %1721 = vmatpush1.msra.mxu0 %v1698
        %1722 = vmatprep.subr.mxu0 0.0
        %1723 = vmatpush1.msra.mxu0 %v1699
        %1724 = vmatprep.subr.mxu0 0.0
        %1725 = vmatpush1.msra.mxu0 %v1700
        %1726 = vmatprep.subr.mxu0 0.0
        %1727 = vmatpush1.msra.mxu0 %v1701
        %1728 = vmatprep.subr.mxu0 0.0
        %1729 = vmatpush1.msra.mxu0 %v1702
        %1730 = vmatprep.subr.mxu0 0.0
        %1731 = vmatpush1.msra.mxu0 0.0
        %1732 = vmatprep.subr.mxu0 0.0
        %1733 = vmatpush1.msra.mxu0 0.0
        %1734 = vmatprep.subr.mxu0 0.0
        %1735 = vmatpush1.msra.mxu0 0.0
        %1736 = vmatprep.subr.mxu0 0.0
        %1737 = vmatpush1.msra.mxu0 0.0
        %1738 = vmatprep.subr.mxu0 0.0
        %1739 = vmatpush1.msra.mxu0 0.0
        %1740 = vmatprep.subr.mxu0 0.0
        %1741 = vmatpush1.msra.mxu0 0.0
        %1742 = vmatprep.subr.mxu0 0.0
        %1743 = vmatpush1.msra.mxu0 0.0
        %1744 = vmatprep.subr.mxu0 0.0
        %1745 = vmatpush1.msra.mxu0 0.0
        %1746 = vmatprep.subr.mxu0 0.0
        %1747 = vmatpush1.msra.mxu0 0.0
        %1748 = vmatprep.subr.mxu0 0.0
        %1749 = vmatpush1.msra.mxu0 0.0
        %1750 = vmatprep.subr.mxu0 0.0
        %1751 = vmatpush1.msra.mxu0 0.0
        %1752 = vmatprep.subr.mxu0 0.0
        %1753 = vmatpush1.msra.mxu0 0.0
        %1754 = vmatprep.subr.mxu0 0.0
        %1755 = vmatpush1.msra.mxu0 0.0
        %1756 = vmatprep.subr.mxu0 0.0
        %1757 = vmatpush1.msra.mxu0 0.0
        %1758 = vmatprep.subr.mxu0 0.0
        %1759 = vmatpush1.msra.mxu0 0.0
        %1760 = vmatprep.subr.mxu0 0.0
        %1761 = vmatpush1.msra.mxu0 0.0
        %1762 = vmatprep.subr.mxu0 0.0
        %1763 = vmatpush1.msra.mxu0 0.0
        %1764 = vmatprep.subr.mxu0 0.0
        %1765 = vmatpush1.msra.mxu0 0.0
        %1766 = vmatprep.subr.mxu0 0.0
        %1767 = vmatpush1.msra.mxu0 0.0
        %1768 = vmatprep.subr.mxu0 0.0
        %1769 = vmatpush1.msra.mxu0 0.0
        %1770 = vmatprep.subr.mxu0 0.0
        %1771 = vmatpush1.msra.mxu0 0.0
        %1772 = vmatprep.subr.mxu0 0.0
        %1773 = vmatpush1.msra.mxu0 0.0
        %1774 = vmatprep.subr.mxu0 0.0
        %1775 = vmatpush1.msra.mxu0 0.0
        %1776 = vmatprep.subr.mxu0 0.0
        %1777 = vmatpush1.msra.mxu0 0.0
        %1778 = vmatprep.mubr.f32.mxu0 0.0
        %1779 = vmatmul.mubr.f32.gmra.mrb[0].mxu0 %v1712
        %v1780 = vpop.f32.mrb[0].mxu0
        %v1781 = vadd.f32 %v1708, %v1780
        %v1782 = vpop.f32.mrb[0].mxu0
        %1783 = vdwg.mxu0
        %v1784 = vadd.f32 %v1601, %v1781
        %v1785 = vld [vmem:[%s16] sm:$0x1]
        %v1786 = vld [vmem:[%s17] sm:$0x1]
        %v1787 = vsel %vm682, %v1784, 0.0
        %1788 = vadd.xlane.f32.xlu0 %v1787
        %v1789 = vpop.xlane.xlu0 %1788
        %v1790 = vmul.f32 %v1789, %v686
        %v1791 = vsub.f32 %v1784, %v1790
        %v1792 = vmul.f32 %v1791, %v1791
        %v1793 = vsel %vm682, %v1792, 0.0
        %1794 = vadd.xlane.f32.xlu0 %v1793
        %v1795 = vpop.xlane.xlu0 %1794
        %v1796 = vmul.f32 %v1795, %v686
        %v1797 = vadd.f32 %v1796, 1e-12
        %v1798 = vrsqrt.pop %v1797
        %v1799 = vmul.f32 %v1791, %v1798
        %v1801 = vlaneseq
        %v1802 = vshrl.u32 %v1801, 7
        %v1803 = vsub.s32 0, %v1802
        %v1804 = vrot.slane %v1785, %v1803
        %v1806 = vmul.f32 %v1799, %v1804
        %v1808 = vlaneseq
        %v1809 = vshrl.u32 %v1808, 7
        %v1810 = vsub.s32 0, %v1809
        %v1811 = vrot.slane %v1786, %v1810
        %v1813 = vadd.f32 %v1806, %v1811
        %s1814 = scalar_lea.vmem %s6, 32
        %v1815 = vld [vmem:[%s1814] sm:$0xff]
        %v1816 = vld [vmem:[%s1814 + $0x8] sm:$0xff]
        %v1817 = vld [vmem:[%s1814 + $0x10] sm:$0xff]
        %v1818 = vld [vmem:[%s1814 + $0x18] sm:$0xff]
        %s1819 = scalar_lea.vmem %s7, 1
        %v1820 = vld [vmem:[%s1819] sm:$0x1]
        %v1822 = vlaneseq
        %v1823 = vshrl.u32 %v1822, 7
        %v1824 = vsub.s32 0, %v1823
        %v1825 = vrot.slane %v1820, %v1824
        %v1828 = vsel %vm682, %v1813, 0
        %1830 = vmatprep.subr.mxu0 0.0
        %1831 = vmatpush1.msra.mxu0 %v1815
        %1832 = vmatprep.subr.mxu0 0.0
        %1833 = vmatpush1.msra.mxu0 %v1816
        %1834 = vmatprep.subr.mxu0 0.0
        %1835 = vmatpush1.msra.mxu0 %v1817
        %1836 = vmatprep.subr.mxu0 0.0
        %1837 = vmatpush1.msra.mxu0 %v1818
        %1838 = vmatprep.subr.mxu0 0.0
        %1839 = vmatpush1.msra.mxu0 0.0
        %1840 = vmatprep.subr.mxu0 0.0
        %1841 = vmatpush1.msra.mxu0 0.0
        %1842 = vmatprep.subr.mxu0 0.0
        %1843 = vmatpush1.msra.mxu0 0.0
        %1844 = vmatprep.subr.mxu0 0.0
        %1845 = vmatpush1.msra.mxu0 0.0
        %1846 = vmatprep.subr.mxu0 0.0
        %1847 = vmatpush1.msra.mxu0 0.0
        %1848 = vmatprep.subr.mxu0 0.0
        %1849 = vmatpush1.msra.mxu0 0.0
        %1850 = vmatprep.subr.mxu0 0.0
        %1851 = vmatpush1.msra.mxu0 0.0
        %1852 = vmatprep.subr.mxu0 0.0
        %1853 = vmatpush1.msra.mxu0 0.0
        %1854 = vmatprep.subr.mxu0 0.0
        %1855 = vmatpush1.msra.mxu0 0.0
        %1856 = vmatprep.subr.mxu0 0.0
        %1857 = vmatpush1.msra.mxu0 0.0
        %1858 = vmatprep.subr.mxu0 0.0
        %1859 = vmatpush1.msra.mxu0 0.0
        %1860 = vmatprep.subr.mxu0 0.0
        %1861 = vmatpush1.msra.mxu0 0.0
        %1862 = vmatprep.subr.mxu0 0.0
        %1863 = vmatpush1.msra.mxu0 0.0
        %1864 = vmatprep.subr.mxu0 0.0
        %1865 = vmatpush1.msra.mxu0 0.0
        %1866 = vmatprep.subr.mxu0 0.0
        %1867 = vmatpush1.msra.mxu0 0.0
        %1868 = vmatprep.subr.mxu0 0.0
        %1869 = vmatpush1.msra.mxu0 0.0
        %1870 = vmatprep.subr.mxu0 0.0
        %1871 = vmatpush1.msra.mxu0 0.0
        %1872 = vmatprep.subr.mxu0 0.0
        %1873 = vmatpush1.msra.mxu0 0.0
        %1874 = vmatprep.subr.mxu0 0.0
        %1875 = vmatpush1.msra.mxu0 0.0
        %1876 = vmatprep.subr.mxu0 0.0
        %1877 = vmatpush1.msra.mxu0 0.0
        %1878 = vmatprep.subr.mxu0 0.0
        %1879 = vmatpush1.msra.mxu0 0.0
        %1880 = vmatprep.subr.mxu0 0.0
        %1881 = vmatpush1.msra.mxu0 0.0
        %1882 = vmatprep.subr.mxu0 0.0
        %1883 = vmatpush1.msra.mxu0 0.0
        %1884 = vmatprep.subr.mxu0 0.0
        %1885 = vmatpush1.msra.mxu0 0.0
        %1886 = vmatprep.subr.mxu0 0.0
        %1887 = vmatpush1.msra.mxu0 0.0
        %1888 = vmatprep.subr.mxu0 0.0
        %1889 = vmatpush1.msra.mxu0 0.0
        %1890 = vmatprep.subr.mxu0 0.0
        %1891 = vmatpush1.msra.mxu0 0.0
        %1892 = vmatprep.subr.mxu0 0.0
        %1893 = vmatpush1.msra.mxu0 0.0
        %1894 = vmatprep.mubr.f32.mxu0 0.0
        %1895 = vmatmul.mubr.f32.gmra.mrb[0].mxu0 %v1828
        %v1896 = vpop.f32.mrb[0].mxu0
        %v1897 = vadd.f32 %v1825, %v1896
        %v1898 = vpop.f32.mrb[0].mxu0
        %1899 = vdwg.mxu0
        %1901 = vrot.lane.b32.xlu0 %v1897, 96
        %v1902 = vpop.permute.xlu0 %1901
        %v1903 = vsel %vm800, %v1897, 0
        %v1905 = vsel %vm800, %v1902, 0
        %1907 = vmatprep.subr.mxu0 0.0
        %1908 = vmatpush1.xpose.msra.mxu0 %v1905
        %1909 = vmatprep.subr.mxu0 0.0
        %1910 = vmatpush1.xpose.msra.mxu0 0.0
        %1911 = vmatprep.subr.mxu0 0.0
        %1912 = vmatpush1.xpose.msra.mxu0 0.0
        %1913 = vmatprep.subr.mxu0 0.0
        %1914 = vmatpush1.xpose.msra.mxu0 0.0
        %1915 = vmatprep.subr.mxu0 0.0
        %1916 = vmatpush1.xpose.msra.mxu0 0.0
        %1917 = vmatprep.subr.mxu0 0.0
        %1918 = vmatpush1.xpose.msra.mxu0 0.0
        %1919 = vmatprep.subr.mxu0 0.0
        %1920 = vmatpush1.xpose.msra.mxu0 0.0
        %1921 = vmatprep.subr.mxu0 0.0
        %1922 = vmatpush1.xpose.msra.mxu0 0.0
        %1923 = vmatprep.subr.mxu0 0.0
        %1924 = vmatpush1.xpose.msra.mxu0 0.0
        %1925 = vmatprep.subr.mxu0 0.0
        %1926 = vmatpush1.xpose.msra.mxu0 0.0
        %1927 = vmatprep.subr.mxu0 0.0
        %1928 = vmatpush1.xpose.msra.mxu0 0.0
        %1929 = vmatprep.subr.mxu0 0.0
        %1930 = vmatpush1.xpose.msra.mxu0 0.0
        %1931 = vmatprep.subr.mxu0 0.0
        %1932 = vmatpush1.xpose.msra.mxu0 0.0
        %1933 = vmatprep.subr.mxu0 0.0
        %1934 = vmatpush1.xpose.msra.mxu0 0.0
        %1935 = vmatprep.subr.mxu0 0.0
        %1936 = vmatpush1.xpose.msra.mxu0 0.0
        %1937 = vmatprep.subr.mxu0 0.0
        %1938 = vmatpush1.xpose.msra.mxu0 0.0
        %1939 = vmatprep.subr.mxu0 0.0
        %1940 = vmatpush1.xpose.msra.mxu0 0.0
        %1941 = vmatprep.subr.mxu0 0.0
        %1942 = vmatpush1.xpose.msra.mxu0 0.0
        %1943 = vmatprep.subr.mxu0 0.0
        %1944 = vmatpush1.xpose.msra.mxu0 0.0
        %1945 = vmatprep.subr.mxu0 0.0
        %1946 = vmatpush1.xpose.msra.mxu0 0.0
        %1947 = vmatprep.subr.mxu0 0.0
        %1948 = vmatpush1.xpose.msra.mxu0 0.0
        %1949 = vmatprep.subr.mxu0 0.0
        %1950 = vmatpush1.xpose.msra.mxu0 0.0
        %1951 = vmatprep.subr.mxu0 0.0
        %1952 = vmatpush1.xpose.msra.mxu0 0.0
        %1953 = vmatprep.subr.mxu0 0.0
        %1954 = vmatpush1.xpose.msra.mxu0 0.0
        %1955 = vmatprep.subr.mxu0 0.0
        %1956 = vmatpush1.xpose.msra.mxu0 0.0
        %1957 = vmatprep.subr.mxu0 0.0
        %1958 = vmatpush1.xpose.msra.mxu0 0.0
        %1959 = vmatprep.subr.mxu0 0.0
        %1960 = vmatpush1.xpose.msra.mxu0 0.0
        %1961 = vmatprep.subr.mxu0 0.0
        %1962 = vmatpush1.xpose.msra.mxu0 0.0
        %1963 = vmatprep.subr.mxu0 0.0
        %1964 = vmatpush1.xpose.msra.mxu0 0.0
        %1965 = vmatprep.subr.mxu0 0.0
        %1966 = vmatpush1.xpose.msra.mxu0 0.0
        %1967 = vmatprep.subr.mxu0 0.0
        %1968 = vmatpush1.xpose.msra.mxu0 0.0
        %1969 = vmatprep.subr.mxu0 0.0
        %1970 = vmatpush1.xpose.msra.mxu0 0.0
        %1971 = vmatprep.mubr.f32.mxu0 0.0
        %1972 = vmatmul.mubr.f32.gmra.mrb[0].mxu0 %v1903
        %v1973 = vpop.f32.mrb[0].mxu0
        %v1974 = vadd.f32 0.0, %v1973
        %v1975 = vpop.f32.mrb[0].mxu0
        %1976 = vdwg.mxu0
        %v1977 = vmul.f32 %v1974, 0.35355338
        %v1978 = vsel %vm881, -1e+30, %v1977
        %v1979 = vsel %vm800, %v1978, -inf
        %1980 = vmax.xlane.f32.xlu0 %v1979
        %v1981 = vpop.xlane.xlu0 %1980
        %v1982 = vsub.f32 %v1978, %v1981
        %v1983 = vmul.f32 %v1982, 1.442695
        %v1984 = vpow.pop %v1983
        %v1985 = vsel %vm800, %v1984, 0.0
        %1986 = vadd.xlane.f32.xlu0 %v1985
        %v1987 = vpop.xlane.xlu0 %1986
        %v1988 = vrcp.pop %v1987
        %v1989 = vmul.f32 %v1984, %v1988
        %1990 = vrot.lane.b32.xlu0 %v1897, 64
        %v1991 = vpop.permute.xlu0 %1990
        %v1994 = vsel %vm800, %v1989, 0
        %1996 = vmatprep.subr.mxu0 0.0
        %1997 = vmatpush1.msra.mxu0 %v1991
        %1998 = vmatprep.subr.mxu0 0.0
        %1999 = vmatpush1.msra.mxu0 0.0
        %2000 = vmatprep.subr.mxu0 0.0
        %2001 = vmatpush1.msra.mxu0 0.0
        %2002 = vmatprep.subr.mxu0 0.0
        %2003 = vmatpush1.msra.mxu0 0.0
        %2004 = vmatprep.subr.mxu0 0.0
        %2005 = vmatpush1.msra.mxu0 0.0
        %2006 = vmatprep.subr.mxu0 0.0
        %2007 = vmatpush1.msra.mxu0 0.0
        %2008 = vmatprep.subr.mxu0 0.0
        %2009 = vmatpush1.msra.mxu0 0.0
        %2010 = vmatprep.subr.mxu0 0.0
        %2011 = vmatpush1.msra.mxu0 0.0
        %2012 = vmatprep.subr.mxu0 0.0
        %2013 = vmatpush1.msra.mxu0 0.0
        %2014 = vmatprep.subr.mxu0 0.0
        %2015 = vmatpush1.msra.mxu0 0.0
        %2016 = vmatprep.subr.mxu0 0.0
        %2017 = vmatpush1.msra.mxu0 0.0
        %2018 = vmatprep.subr.mxu0 0.0
        %2019 = vmatpush1.msra.mxu0 0.0
        %2020 = vmatprep.subr.mxu0 0.0
        %2021 = vmatpush1.msra.mxu0 0.0
        %2022 = vmatprep.subr.mxu0 0.0
        %2023 = vmatpush1.msra.mxu0 0.0
        %2024 = vmatprep.subr.mxu0 0.0
        %2025 = vmatpush1.msra.mxu0 0.0
        %2026 = vmatprep.subr.mxu0 0.0
        %2027 = vmatpush1.msra.mxu0 0.0
        %2028 = vmatprep.subr.mxu0 0.0
        %2029 = vmatpush1.msra.mxu0 0.0
        %2030 = vmatprep.subr.mxu0 0.0
        %2031 = vmatpush1.msra.mxu0 0.0
        %2032 = vmatprep.subr.mxu0 0.0
        %2033 = vmatpush1.msra.mxu0 0.0
        %2034 = vmatprep.subr.mxu0 0.0
        %2035 = vmatpush1.msra.mxu0 0.0
        %2036 = vmatprep.subr.mxu0 0.0
        %2037 = vmatpush1.msra.mxu0 0.0
        %2038 = vmatprep.subr.mxu0 0.0
        %2039 = vmatpush1.msra.mxu0 0.0
        %2040 = vmatprep.subr.mxu0 0.0
        %2041 = vmatpush1.msra.mxu0 0.0
        %2042 = vmatprep.subr.mxu0 0.0
        %2043 = vmatpush1.msra.mxu0 0.0
        %2044 = vmatprep.subr.mxu0 0.0
        %2045 = vmatpush1.msra.mxu0 0.0
        %2046 = vmatprep.subr.mxu0 0.0
        %2047 = vmatpush1.msra.mxu0 0.0
        %2048 = vmatprep.subr.mxu0 0.0
        %2049 = vmatpush1.msra.mxu0 0.0
        %2050 = vmatprep.subr.mxu0 0.0
        %2051 = vmatpush1.msra.mxu0 0.0
        %2052 = vmatprep.subr.mxu0 0.0
        %2053 = vmatpush1.msra.mxu0 0.0
        %2054 = vmatprep.subr.mxu0 0.0
        %2055 = vmatpush1.msra.mxu0 0.0
        %2056 = vmatprep.subr.mxu0 0.0
        %2057 = vmatpush1.msra.mxu0 0.0
        %2058 = vmatprep.subr.mxu0 0.0
        %2059 = vmatpush1.msra.mxu0 0.0
        %2060 = vmatprep.mubr.f32.mxu0 0.0
        %2061 = vmatmul.mubr.f32.gmra.mrb[0].mxu0 %v1994
        %v2062 = vpop.f32.mrb[0].mxu0
        %v2063 = vadd.f32 0.0, %v2062
        %v2064 = vpop.f32.mrb[0].mxu0
        %2065 = vdwg.mxu0
        %2066 = vrot.lane.b32.xlu0 %v1897, 120
        %v2067 = vpop.permute.xlu0 %2066
        %2068 = vrot.lane.b32.xlu0 %v1897, 88
        %v2069 = vpop.permute.xlu0 %2068
        %v2070 = vsel %vm800, %v2067, 0
        %v2072 = vsel %vm800, %v2069, 0
        %2074 = vmatprep.subr.mxu0 0.0
        %2075 = vmatpush1.xpose.msra.mxu0 %v2072
        %2076 = vmatprep.subr.mxu0 0.0
        %2077 = vmatpush1.xpose.msra.mxu0 0.0
        %2078 = vmatprep.subr.mxu0 0.0
        %2079 = vmatpush1.xpose.msra.mxu0 0.0
        %2080 = vmatprep.subr.mxu0 0.0
        %2081 = vmatpush1.xpose.msra.mxu0 0.0
        %2082 = vmatprep.subr.mxu0 0.0
        %2083 = vmatpush1.xpose.msra.mxu0 0.0
        %2084 = vmatprep.subr.mxu0 0.0
        %2085 = vmatpush1.xpose.msra.mxu0 0.0
        %2086 = vmatprep.subr.mxu0 0.0
        %2087 = vmatpush1.xpose.msra.mxu0 0.0
        %2088 = vmatprep.subr.mxu0 0.0
        %2089 = vmatpush1.xpose.msra.mxu0 0.0
        %2090 = vmatprep.subr.mxu0 0.0
        %2091 = vmatpush1.xpose.msra.mxu0 0.0
        %2092 = vmatprep.subr.mxu0 0.0
        %2093 = vmatpush1.xpose.msra.mxu0 0.0
        %2094 = vmatprep.subr.mxu0 0.0
        %2095 = vmatpush1.xpose.msra.mxu0 0.0
        %2096 = vmatprep.subr.mxu0 0.0
        %2097 = vmatpush1.xpose.msra.mxu0 0.0
        %2098 = vmatprep.subr.mxu0 0.0
        %2099 = vmatpush1.xpose.msra.mxu0 0.0
        %2100 = vmatprep.subr.mxu0 0.0
        %2101 = vmatpush1.xpose.msra.mxu0 0.0
        %2102 = vmatprep.subr.mxu0 0.0
        %2103 = vmatpush1.xpose.msra.mxu0 0.0
        %2104 = vmatprep.subr.mxu0 0.0
        %2105 = vmatpush1.xpose.msra.mxu0 0.0
        %2106 = vmatprep.subr.mxu0 0.0
        %2107 = vmatpush1.xpose.msra.mxu0 0.0
        %2108 = vmatprep.subr.mxu0 0.0
        %2109 = vmatpush1.xpose.msra.mxu0 0.0
        %2110 = vmatprep.subr.mxu0 0.0
        %2111 = vmatpush1.xpose.msra.mxu0 0.0
        %2112 = vmatprep.subr.mxu0 0.0
        %2113 = vmatpush1.xpose.msra.mxu0 0.0
        %2114 = vmatprep.subr.mxu0 0.0
        %2115 = vmatpush1.xpose.msra.mxu0 0.0
        %2116 = vmatprep.subr.mxu0 0.0
        %2117 = vmatpush1.xpose.msra.mxu0 0.0
        %2118 = vmatprep.subr.mxu0 0.0
        %2119 = vmatpush1.xpose.msra.mxu0 0.0
        %2120 = vmatprep.subr.mxu0 0.0
        %2121 = vmatpush1.xpose.msra.mxu0 0.0
        %2122 = vmatprep.subr.mxu0 0.0
        %2123 = vmatpush1.xpose.msra.mxu0 0.0
        %2124 = vmatprep.subr.mxu0 0.0
        %2125 = vmatpush1.xpose.msra.mxu0 0.0
        %2126 = vmatprep.subr.mxu0 0.0
        %2127 = vmatpush1.xpose.msra.mxu0 0.0
        %2128 = vmatprep.subr.mxu0 0.0
        %2129 = vmatpush1.xpose.msra.mxu0 0.0
        %2130 = vmatprep.subr.mxu0 0.0
        %2131 = vmatpush1.xpose.msra.mxu0 0.0
        %2132 = vmatprep.subr.mxu0 0.0
        %2133 = vmatpush1.xpose.msra.mxu0 0.0
        %2134 = vmatprep.subr.mxu0 0.0
        %2135 = vmatpush1.xpose.msra.mxu0 0.0
        %2136 = vmatprep.subr.mxu0 0.0
        %2137 = vmatpush1.xpose.msra.mxu0 0.0
        %2138 = vmatprep.mubr.f32.mxu0 0.0
        %2139 = vmatmul.mubr.f32.gmra.mrb[0].mxu0 %v2070
        %v2140 = vpop.f32.mrb[0].mxu0
        %v2141 = vadd.f32 0.0, %v2140
        %v2142 = vpop.f32.mrb[0].mxu0
        %2143 = vdwg.mxu0
        %v2144 = vmul.f32 %v2141, 0.35355338
        %v2145 = vsel %vm881, -1e+30, %v2144
        %v2146 = vsel %vm800, %v2145, -inf
        %2147 = vmax.xlane.f32.xlu0 %v2146
        %v2148 = vpop.xlane.xlu0 %2147
        %v2149 = vsub.f32 %v2145, %v2148
        %v2150 = vmul.f32 %v2149, 1.442695
        %v2151 = vpow.pop %v2150
        %v2152 = vsel %vm800, %v2151, 0.0
        %2153 = vadd.xlane.f32.xlu0 %v2152
        %v2154 = vpop.xlane.xlu0 %2153
        %v2155 = vrcp.pop %v2154
        %v2156 = vmul.f32 %v2151, %v2155
        %2157 = vrot.lane.b32.xlu0 %v1897, 56
        %v2158 = vpop.permute.xlu0 %2157
        %v2161 = vsel %vm800, %v2156, 0
        %2163 = vmatprep.subr.mxu0 0.0
        %2164 = vmatpush1.msra.mxu0 %v2158
        %2165 = vmatprep.subr.mxu0 0.0
        %2166 = vmatpush1.msra.mxu0 0.0
        %2167 = vmatprep.subr.mxu0 0.0
        %2168 = vmatpush1.msra.mxu0 0.0
        %2169 = vmatprep.subr.mxu0 0.0
        %2170 = vmatpush1.msra.mxu0 0.0
        %2171 = vmatprep.subr.mxu0 0.0
        %2172 = vmatpush1.msra.mxu0 0.0
        %2173 = vmatprep.subr.mxu0 0.0
        %2174 = vmatpush1.msra.mxu0 0.0
        %2175 = vmatprep.subr.mxu0 0.0
        %2176 = vmatpush1.msra.mxu0 0.0
        %2177 = vmatprep.subr.mxu0 0.0
        %2178 = vmatpush1.msra.mxu0 0.0
        %2179 = vmatprep.subr.mxu0 0.0
        %2180 = vmatpush1.msra.mxu0 0.0
        %2181 = vmatprep.subr.mxu0 0.0
        %2182 = vmatpush1.msra.mxu0 0.0
        %2183 = vmatprep.subr.mxu0 0.0
        %2184 = vmatpush1.msra.mxu0 0.0
        %2185 = vmatprep.subr.mxu0 0.0
        %2186 = vmatpush1.msra.mxu0 0.0
        %2187 = vmatprep.subr.mxu0 0.0
        %2188 = vmatpush1.msra.mxu0 0.0
        %2189 = vmatprep.subr.mxu0 0.0
        %2190 = vmatpush1.msra.mxu0 0.0
        %2191 = vmatprep.subr.mxu0 0.0
        %2192 = vmatpush1.msra.mxu0 0.0
        %2193 = vmatprep.subr.mxu0 0.0
        %2194 = vmatpush1.msra.mxu0 0.0
        %2195 = vmatprep.subr.mxu0 0.0
        %2196 = vmatpush1.msra.mxu0 0.0
        %2197 = vmatprep.subr.mxu0 0.0
        %2198 = vmatpush1.msra.mxu0 0.0
        %2199 = vmatprep.subr.mxu0 0.0
        %2200 = vmatpush1.msra.mxu0 0.0
        %2201 = vmatprep.subr.mxu0 0.0
        %2202 = vmatpush1.msra.mxu0 0.0
        %2203 = vmatprep.subr.mxu0 0.0
        %2204 = vmatpush1.msra.mxu0 0.0
        %2205 = vmatprep.subr.mxu0 0.0
        %2206 = vmatpush1.msra.mxu0 0.0
        %2207 = vmatprep.subr.mxu0 0.0
        %2208 = vmatpush1.msra.mxu0 0.0
        %2209 = vmatprep.subr.mxu0 0.0
        %2210 = vmatpush1.msra.mxu0 0.0
        %2211 = vmatprep.subr.mxu0 0.0
        %2212 = vmatpush1.msra.mxu0 0.0
        %2213 = vmatprep.subr.mxu0 0.0
        %2214 = vmatpush1.msra.mxu0 0.0
        %2215 = vmatprep.subr.mxu0 0.0
        %2216 = vmatpush1.msra.mxu0 0.0
        %2217 = vmatprep.subr.mxu0 0.0
        %2218 = vmatpush1.msra.mxu0 0.0
        %2219 = vmatprep.subr.mxu0 0.0
        %2220 = vmatpush1.msra.mxu0 0.0
        %2221 = vmatprep.subr.mxu0 0.0
        %2222 = vmatpush1.msra.mxu0 0.0
        %2223 = vmatprep.subr.mxu0 0.0
        %2224 = vmatpush1.msra.mxu0 0.0
        %2225 = vmatprep.subr.mxu0 0.0
        %2226 = vmatpush1.msra.mxu0 0.0
        %2227 = vmatprep.mubr.f32.mxu0 0.0
        %2228 = vmatmul.mubr.f32.gmra.mrb[0].mxu0 %v2161
        %v2229 = vpop.f32.mrb[0].mxu0
        %v2230 = vadd.f32 0.0, %v2229
        %v2231 = vpop.f32.mrb[0].mxu0
        %2232 = vdwg.mxu0
        %2233 = vrot.lane.b32.xlu0 %v1897, 112
        %v2234 = vpop.permute.xlu0 %2233
        %2235 = vrot.lane.b32.xlu0 %v1897, 80
        %v2236 = vpop.permute.xlu0 %2235
        %v2237 = vsel %vm800, %v2234, 0
        %v2239 = vsel %vm800, %v2236, 0
        %2241 = vmatprep.subr.mxu0 0.0
        %2242 = vmatpush1.xpose.msra.mxu0 %v2239
        %2243 = vmatprep.subr.mxu0 0.0
        %2244 = vmatpush1.xpose.msra.mxu0 0.0
        %2245 = vmatprep.subr.mxu0 0.0
        %2246 = vmatpush1.xpose.msra.mxu0 0.0
        %2247 = vmatprep.subr.mxu0 0.0
        %2248 = vmatpush1.xpose.msra.mxu0 0.0
        %2249 = vmatprep.subr.mxu0 0.0
        %2250 = vmatpush1.xpose.msra.mxu0 0.0
        %2251 = vmatprep.subr.mxu0 0.0
        %2252 = vmatpush1.xpose.msra.mxu0 0.0
        %2253 = vmatprep.subr.mxu0 0.0
        %2254 = vmatpush1.xpose.msra.mxu0 0.0
        %2255 = vmatprep.subr.mxu0 0.0
        %2256 = vmatpush1.xpose.msra.mxu0 0.0
        %2257 = vmatprep.subr.mxu0 0.0
        %2258 = vmatpush1.xpose.msra.mxu0 0.0
        %2259 = vmatprep.subr.mxu0 0.0
        %2260 = vmatpush1.xpose.msra.mxu0 0.0
        %2261 = vmatprep.subr.mxu0 0.0
        %2262 = vmatpush1.xpose.msra.mxu0 0.0
        %2263 = vmatprep.subr.mxu0 0.0
        %2264 = vmatpush1.xpose.msra.mxu0 0.0
        %2265 = vmatprep.subr.mxu0 0.0
        %2266 = vmatpush1.xpose.msra.mxu0 0.0
        %2267 = vmatprep.subr.mxu0 0.0
        %2268 = vmatpush1.xpose.msra.mxu0 0.0
        %2269 = vmatprep.subr.mxu0 0.0
        %2270 = vmatpush1.xpose.msra.mxu0 0.0
        %2271 = vmatprep.subr.mxu0 0.0
        %2272 = vmatpush1.xpose.msra.mxu0 0.0
        %2273 = vmatprep.subr.mxu0 0.0
        %2274 = vmatpush1.xpose.msra.mxu0 0.0
        %2275 = vmatprep.subr.mxu0 0.0
        %2276 = vmatpush1.xpose.msra.mxu0 0.0
        %2277 = vmatprep.subr.mxu0 0.0
        %2278 = vmatpush1.xpose.msra.mxu0 0.0
        %2279 = vmatprep.subr.mxu0 0.0
        %2280 = vmatpush1.xpose.msra.mxu0 0.0
        %2281 = vmatprep.subr.mxu0 0.0
        %2282 = vmatpush1.xpose.msra.mxu0 0.0
        %2283 = vmatprep.subr.mxu0 0.0
        %2284 = vmatpush1.xpose.msra.mxu0 0.0
        %2285 = vmatprep.subr.mxu0 0.0
        %2286 = vmatpush1.xpose.msra.mxu0 0.0
        %2287 = vmatprep.subr.mxu0 0.0
        %2288 = vmatpush1.xpose.msra.mxu0 0.0
        %2289 = vmatprep.subr.mxu0 0.0
        %2290 = vmatpush1.xpose.msra.mxu0 0.0
        %2291 = vmatprep.subr.mxu0 0.0
        %2292 = vmatpush1.xpose.msra.mxu0 0.0
        %2293 = vmatprep.subr.mxu0 0.0
        %2294 = vmatpush1.xpose.msra.mxu0 0.0
        %2295 = vmatprep.subr.mxu0 0.0
        %2296 = vmatpush1.xpose.msra.mxu0 0.0
        %2297 = vmatprep.subr.mxu0 0.0
        %2298 = vmatpush1.xpose.msra.mxu0 0.0
        %2299 = vmatprep.subr.mxu0 0.0
        %2300 = vmatpush1.xpose.msra.mxu0 0.0
        %2301 = vmatprep.subr.mxu0 0.0
        %2302 = vmatpush1.xpose.msra.mxu0 0.0
        %2303 = vmatprep.subr.mxu0 0.0
        %2304 = vmatpush1.xpose.msra.mxu0 0.0
        %2305 = vmatprep.mubr.f32.mxu0 0.0
        %2306 = vmatmul.mubr.f32.gmra.mrb[0].mxu0 %v2237
        %v2307 = vpop.f32.mrb[0].mxu0
        %v2308 = vadd.f32 0.0, %v2307
        %v2309 = vpop.f32.mrb[0].mxu0
        %2310 = vdwg.mxu0
        %v2311 = vmul.f32 %v2308, 0.35355338
        %v2312 = vsel %vm881, -1e+30, %v2311
        %v2313 = vsel %vm800, %v2312, -inf
        %2314 = vmax.xlane.f32.xlu0 %v2313
        %v2315 = vpop.xlane.xlu0 %2314
        %v2316 = vsub.f32 %v2312, %v2315
        %v2317 = vmul.f32 %v2316, 1.442695
        %v2318 = vpow.pop %v2317
        %v2319 = vsel %vm800, %v2318, 0.0
        %2320 = vadd.xlane.f32.xlu0 %v2319
        %v2321 = vpop.xlane.xlu0 %2320
        %v2322 = vrcp.pop %v2321
        %v2323 = vmul.f32 %v2318, %v2322
        %2324 = vrot.lane.b32.xlu0 %v1897, 48
        %v2325 = vpop.permute.xlu0 %2324
        %v2328 = vsel %vm800, %v2323, 0
        %2330 = vmatprep.subr.mxu0 0.0
        %2331 = vmatpush1.msra.mxu0 %v2325
        %2332 = vmatprep.subr.mxu0 0.0
        %2333 = vmatpush1.msra.mxu0 0.0
        %2334 = vmatprep.subr.mxu0 0.0
        %2335 = vmatpush1.msra.mxu0 0.0
        %2336 = vmatprep.subr.mxu0 0.0
        %2337 = vmatpush1.msra.mxu0 0.0
        %2338 = vmatprep.subr.mxu0 0.0
        %2339 = vmatpush1.msra.mxu0 0.0
        %2340 = vmatprep.subr.mxu0 0.0
        %2341 = vmatpush1.msra.mxu0 0.0
        %2342 = vmatprep.subr.mxu0 0.0
        %2343 = vmatpush1.msra.mxu0 0.0
        %2344 = vmatprep.subr.mxu0 0.0
        %2345 = vmatpush1.msra.mxu0 0.0
        %2346 = vmatprep.subr.mxu0 0.0
        %2347 = vmatpush1.msra.mxu0 0.0
        %2348 = vmatprep.subr.mxu0 0.0
        %2349 = vmatpush1.msra.mxu0 0.0
        %2350 = vmatprep.subr.mxu0 0.0
        %2351 = vmatpush1.msra.mxu0 0.0
        %2352 = vmatprep.subr.mxu0 0.0
        %2353 = vmatpush1.msra.mxu0 0.0
        %2354 = vmatprep.subr.mxu0 0.0
        %2355 = vmatpush1.msra.mxu0 0.0
        %2356 = vmatprep.subr.mxu0 0.0
        %2357 = vmatpush1.msra.mxu0 0.0
        %2358 = vmatprep.subr.mxu0 0.0
        %2359 = vmatpush1.msra.mxu0 0.0
        %2360 = vmatprep.subr.mxu0 0.0
        %2361 = vmatpush1.msra.mxu0 0.0
        %2362 = vmatprep.subr.mxu0 0.0
        %2363 = vmatpush1.msra.mxu0 0.0
        %2364 = vmatprep.subr.mxu0 0.0
        %2365 = vmatpush1.msra.mxu0 0.0
        %2366 = vmatprep.subr.mxu0 0.0
        %2367 = vmatpush1.msra.mxu0 0.0
        %2368 = vmatprep.subr.mxu0 0.0
        %2369 = vmatpush1.msra.mxu0 0.0
        %2370 = vmatprep.subr.mxu0 0.0
        %2371 = vmatpush1.msra.mxu0 0.0
        %2372 = vmatprep.subr.mxu0 0.0
        %2373 = vmatpush1.msra.mxu0 0.0
        %2374 = vmatprep.subr.mxu0 0.0
        %2375 = vmatpush1.msra.mxu0 0.0
        %2376 = vmatprep.subr.mxu0 0.0
        %2377 = vmatpush1.msra.mxu0 0.0
        %2378 = vmatprep.subr.mxu0 0.0
        %2379 = vmatpush1.msra.mxu0 0.0
        %2380 = vmatprep.subr.mxu0 0.0
        %2381 = vmatpush1.msra.mxu0 0.0
        %2382 = vmatprep.subr.mxu0 0.0
        %2383 = vmatpush1.msra.mxu0 0.0
        %2384 = vmatprep.subr.mxu0 0.0
        %2385 = vmatpush1.msra.mxu0 0.0
        %2386 = vmatprep.subr.mxu0 0.0
        %2387 = vmatpush1.msra.mxu0 0.0
        %2388 = vmatprep.subr.mxu0 0.0
        %2389 = vmatpush1.msra.mxu0 0.0
        %2390 = vmatprep.subr.mxu0 0.0
        %2391 = vmatpush1.msra.mxu0 0.0
        %2392 = vmatprep.subr.mxu0 0.0
        %2393 = vmatpush1.msra.mxu0 0.0
        %2394 = vmatprep.mubr.f32.mxu0 0.0
        %2395 = vmatmul.mubr.f32.gmra.mrb[0].mxu0 %v2328
        %v2396 = vpop.f32.mrb[0].mxu0
        %v2397 = vadd.f32 0.0, %v2396
        %v2398 = vpop.f32.mrb[0].mxu0
        %2399 = vdwg.mxu0
        %2400 = vrot.lane.b32.xlu0 %v1897, 104
        %v2401 = vpop.permute.xlu0 %2400
        %2402 = vrot.lane.b32.xlu0 %v1897, 72
        %v2403 = vpop.permute.xlu0 %2402
        %v2404 = vsel %vm800, %v2401, 0
        %v2406 = vsel %vm800, %v2403, 0
        %2408 = vmatprep.subr.mxu0 0.0
        %2409 = vmatpush1.xpose.msra.mxu0 %v2406
        %2410 = vmatprep.subr.mxu0 0.0
        %2411 = vmatpush1.xpose.msra.mxu0 0.0
        %2412 = vmatprep.subr.mxu0 0.0
        %2413 = vmatpush1.xpose.msra.mxu0 0.0
        %2414 = vmatprep.subr.mxu0 0.0
        %2415 = vmatpush1.xpose.msra.mxu0 0.0
        %2416 = vmatprep.subr.mxu0 0.0
        %2417 = vmatpush1.xpose.msra.mxu0 0.0
        %2418 = vmatprep.subr.mxu0 0.0
        %2419 = vmatpush1.xpose.msra.mxu0 0.0
        %2420 = vmatprep.subr.mxu0 0.0
        %2421 = vmatpush1.xpose.msra.mxu0 0.0
        %2422 = vmatprep.subr.mxu0 0.0
        %2423 = vmatpush1.xpose.msra.mxu0 0.0
        %2424 = vmatprep.subr.mxu0 0.0
        %2425 = vmatpush1.xpose.msra.mxu0 0.0
        %2426 = vmatprep.subr.mxu0 0.0
        %2427 = vmatpush1.xpose.msra.mxu0 0.0
        %2428 = vmatprep.subr.mxu0 0.0
        %2429 = vmatpush1.xpose.msra.mxu0 0.0
        %2430 = vmatprep.subr.mxu0 0.0
        %2431 = vmatpush1.xpose.msra.mxu0 0.0
        %2432 = vmatprep.subr.mxu0 0.0
        %2433 = vmatpush1.xpose.msra.mxu0 0.0
        %2434 = vmatprep.subr.mxu0 0.0
        %2435 = vmatpush1.xpose.msra.mxu0 0.0
        %2436 = vmatprep.subr.mxu0 0.0
        %2437 = vmatpush1.xpose.msra.mxu0 0.0
        %2438 = vmatprep.subr.mxu0 0.0
        %2439 = vmatpush1.xpose.msra.mxu0 0.0
        %2440 = vmatprep.subr.mxu0 0.0
        %2441 = vmatpush1.xpose.msra.mxu0 0.0
        %2442 = vmatprep.subr.mxu0 0.0
        %2443 = vmatpush1.xpose.msra.mxu0 0.0
        %2444 = vmatprep.subr.mxu0 0.0
        %2445 = vmatpush1.xpose.msra.mxu0 0.0
        %2446 = vmatprep.subr.mxu0 0.0
        %2447 = vmatpush1.xpose.msra.mxu0 0.0
        %2448 = vmatprep.subr.mxu0 0.0
        %2449 = vmatpush1.xpose.msra.mxu0 0.0
        %2450 = vmatprep.subr.mxu0 0.0
        %2451 = vmatpush1.xpose.msra.mxu0 0.0
        %2452 = vmatprep.subr.mxu0 0.0
        %2453 = vmatpush1.xpose.msra.mxu0 0.0
        %2454 = vmatprep.subr.mxu0 0.0
        %2455 = vmatpush1.xpose.msra.mxu0 0.0
        %2456 = vmatprep.subr.mxu0 0.0
        %2457 = vmatpush1.xpose.msra.mxu0 0.0
        %2458 = vmatprep.subr.mxu0 0.0
        %2459 = vmatpush1.xpose.msra.mxu0 0.0
        %2460 = vmatprep.subr.mxu0 0.0
        %2461 = vmatpush1.xpose.msra.mxu0 0.0
        %2462 = vmatprep.subr.mxu0 0.0
        %2463 = vmatpush1.xpose.msra.mxu0 0.0
        %2464 = vmatprep.subr.mxu0 0.0
        %2465 = vmatpush1.xpose.msra.mxu0 0.0
        %2466 = vmatprep.subr.mxu0 0.0
        %2467 = vmatpush1.xpose.msra.mxu0 0.0
        %2468 = vmatprep.subr.mxu0 0.0
        %2469 = vmatpush1.xpose.msra.mxu0 0.0
        %2470 = vmatprep.subr.mxu0 0.0
        %2471 = vmatpush1.xpose.msra.mxu0 0.0
        %2472 = vmatprep.mubr.f32.mxu0 0.0
        %2473 = vmatmul.mubr.f32.gmra.mrb[0].mxu0 %v2404
        %v2474 = vpop.f32.mrb[0].mxu0
        %v2475 = vadd.f32 0.0, %v2474
        %v2476 = vpop.f32.mrb[0].mxu0
        %2477 = vdwg.mxu0
        %v2478 = vmul.f32 %v2475, 0.35355338
        %v2479 = vsel %vm881, -1e+30, %v2478
        %v2480 = vsel %vm800, %v2479, -inf
        %2481 = vmax.xlane.f32.xlu0 %v2480
        %v2482 = vpop.xlane.xlu0 %2481
        %v2483 = vsub.f32 %v2479, %v2482
        %v2484 = vmul.f32 %v2483, 1.442695
        %v2485 = vpow.pop %v2484
        %v2486 = vsel %vm800, %v2485, 0.0
        %2487 = vadd.xlane.f32.xlu0 %v2486
        %v2488 = vpop.xlane.xlu0 %2487
        %v2489 = vrcp.pop %v2488
        %v2490 = vmul.f32 %v2485, %v2489
        %2491 = vrot.lane.b32.xlu0 %v1897, 40
        %v2492 = vpop.permute.xlu0 %2491
        %v2495 = vsel %vm800, %v2490, 0
        %2497 = vmatprep.subr.mxu0 0.0
        %2498 = vmatpush1.msra.mxu0 %v2492
        %2499 = vmatprep.subr.mxu0 0.0
        %2500 = vmatpush1.msra.mxu0 0.0
        %2501 = vmatprep.subr.mxu0 0.0
        %2502 = vmatpush1.msra.mxu0 0.0
        %2503 = vmatprep.subr.mxu0 0.0
        %2504 = vmatpush1.msra.mxu0 0.0
        %2505 = vmatprep.subr.mxu0 0.0
        %2506 = vmatpush1.msra.mxu0 0.0
        %2507 = vmatprep.subr.mxu0 0.0
        %2508 = vmatpush1.msra.mxu0 0.0
        %2509 = vmatprep.subr.mxu0 0.0
        %2510 = vmatpush1.msra.mxu0 0.0
        %2511 = vmatprep.subr.mxu0 0.0
        %2512 = vmatpush1.msra.mxu0 0.0
        %2513 = vmatprep.subr.mxu0 0.0
        %2514 = vmatpush1.msra.mxu0 0.0
        %2515 = vmatprep.subr.mxu0 0.0
        %2516 = vmatpush1.msra.mxu0 0.0
        %2517 = vmatprep.subr.mxu0 0.0
        %2518 = vmatpush1.msra.mxu0 0.0
        %2519 = vmatprep.subr.mxu0 0.0
        %2520 = vmatpush1.msra.mxu0 0.0
        %2521 = vmatprep.subr.mxu0 0.0
        %2522 = vmatpush1.msra.mxu0 0.0
        %2523 = vmatprep.subr.mxu0 0.0
        %2524 = vmatpush1.msra.mxu0 0.0
        %2525 = vmatprep.subr.mxu0 0.0
        %2526 = vmatpush1.msra.mxu0 0.0
        %2527 = vmatprep.subr.mxu0 0.0
        %2528 = vmatpush1.msra.mxu0 0.0
        %2529 = vmatprep.subr.mxu0 0.0
        %2530 = vmatpush1.msra.mxu0 0.0
        %2531 = vmatprep.subr.mxu0 0.0
        %2532 = vmatpush1.msra.mxu0 0.0
        %2533 = vmatprep.subr.mxu0 0.0
        %2534 = vmatpush1.msra.mxu0 0.0
        %2535 = vmatprep.subr.mxu0 0.0
        %2536 = vmatpush1.msra.mxu0 0.0
        %2537 = vmatprep.subr.mxu0 0.0
        %2538 = vmatpush1.msra.mxu0 0.0
        %2539 = vmatprep.subr.mxu0 0.0
        %2540 = vmatpush1.msra.mxu0 0.0
        %2541 = vmatprep.subr.mxu0 0.0
        %2542 = vmatpush1.msra.mxu0 0.0
        %2543 = vmatprep.subr.mxu0 0.0
        %2544 = vmatpush1.msra.mxu0 0.0
        %2545 = vmatprep.subr.mxu0 0.0
        %2546 = vmatpush1.msra.mxu0 0.0
        %2547 = vmatprep.subr.mxu0 0.0
        %2548 = vmatpush1.msra.mxu0 0.0
        %2549 = vmatprep.subr.mxu0 0.0
        %2550 = vmatpush1.msra.mxu0 0.0
        %2551 = vmatprep.subr.mxu0 0.0
        %2552 = vmatpush1.msra.mxu0 0.0
        %2553 = vmatprep.subr.mxu0 0.0
        %2554 = vmatpush1.msra.mxu0 0.0
        %2555 = vmatprep.subr.mxu0 0.0
        %2556 = vmatpush1.msra.mxu0 0.0
        %2557 = vmatprep.subr.mxu0 0.0
        %2558 = vmatpush1.msra.mxu0 0.0
        %2559 = vmatprep.subr.mxu0 0.0
        %2560 = vmatpush1.msra.mxu0 0.0
        %2561 = vmatprep.mubr.f32.mxu0 0.0
        %2562 = vmatmul.mubr.f32.gmra.mrb[0].mxu0 %v2495
        %v2563 = vpop.f32.mrb[0].mxu0
        %v2564 = vadd.f32 0.0, %v2563
        %v2565 = vpop.f32.mrb[0].mxu0
        %2566 = vdwg.mxu0
        %2568 = vrot.lane.b32.xlu0 %v2230, 8
        %v2569 = vpop.permute.xlu0 %2568
        %2572 = vrot.lane.b32.xlu0 %v2397, 16
        %v2573 = vpop.permute.xlu0 %2572
        %2576 = vrot.lane.b32.xlu0 %v2564, 24
        %v2577 = vpop.permute.xlu0 %2576
        %v2579 = vsel %vm800, %v2063, %v2569
        %v2580 = vsel %vm1484, %v2579, %v2573
        %v2581 = vsel %vm1486, %v2580, %v2577
        %s2582 = scalar_lea.vmem %s8, 32
        %v2583 = vld [vmem:[%s2582] sm:$0xff]
        %v2584 = vld [vmem:[%s2582 + $0x8] sm:$0xff]
        %v2585 = vld [vmem:[%s2582 + $0x10] sm:$0xff]
        %v2586 = vld [vmem:[%s2582 + $0x18] sm:$0xff]
        %s2587 = scalar_lea.vmem %s9, 1
        %v2588 = vld [vmem:[%s2587] sm:$0x1]
        %v2590 = vlaneseq
        %v2591 = vshrl.u32 %v2590, 7
        %v2592 = vsub.s32 0, %v2591
        %v2593 = vrot.slane %v2588, %v2592
        %v2596 = vsel %vm682, %v2581, 0
        %2598 = vmatprep.subr.mxu0 0.0
        %2599 = vmatpush1.msra.mxu0 %v2583
        %2600 = vmatprep.subr.mxu0 0.0
        %2601 = vmatpush1.msra.mxu0 %v2584
        %2602 = vmatprep.subr.mxu0 0.0
        %2603 = vmatpush1.msra.mxu0 %v2585
        %2604 = vmatprep.subr.mxu0 0.0
        %2605 = vmatpush1.msra.mxu0 %v2586
        %2606 = vmatprep.subr.mxu0 0.0
        %2607 = vmatpush1.msra.mxu0 0.0
        %2608 = vmatprep.subr.mxu0 0.0
        %2609 = vmatpush1.msra.mxu0 0.0
        %2610 = vmatprep.subr.mxu0 0.0
        %2611 = vmatpush1.msra.mxu0 0.0
        %2612 = vmatprep.subr.mxu0 0.0
        %2613 = vmatpush1.msra.mxu0 0.0
        %2614 = vmatprep.subr.mxu0 0.0
        %2615 = vmatpush1.msra.mxu0 0.0
        %2616 = vmatprep.subr.mxu0 0.0
        %2617 = vmatpush1.msra.mxu0 0.0
        %2618 = vmatprep.subr.mxu0 0.0
        %2619 = vmatpush1.msra.mxu0 0.0
        %2620 = vmatprep.subr.mxu0 0.0
        %2621 = vmatpush1.msra.mxu0 0.0
        %2622 = vmatprep.subr.mxu0 0.0
        %2623 = vmatpush1.msra.mxu0 0.0
        %2624 = vmatprep.subr.mxu0 0.0
        %2625 = vmatpush1.msra.mxu0 0.0
        %2626 = vmatprep.subr.mxu0 0.0
        %2627 = vmatpush1.msra.mxu0 0.0
        %2628 = vmatprep.subr.mxu0 0.0
        %2629 = vmatpush1.msra.mxu0 0.0
        %2630 = vmatprep.subr.mxu0 0.0
        %2631 = vmatpush1.msra.mxu0 0.0
        %2632 = vmatprep.subr.mxu0 0.0
        %2633 = vmatpush1.msra.mxu0 0.0
        %2634 = vmatprep.subr.mxu0 0.0
        %2635 = vmatpush1.msra.mxu0 0.0
        %2636 = vmatprep.subr.mxu0 0.0
        %2637 = vmatpush1.msra.mxu0 0.0
        %2638 = vmatprep.subr.mxu0 0.0
        %2639 = vmatpush1.msra.mxu0 0.0
        %2640 = vmatprep.subr.mxu0 0.0
        %2641 = vmatpush1.msra.mxu0 0.0
        %2642 = vmatprep.subr.mxu0 0.0
        %2643 = vmatpush1.msra.mxu0 0.0
        %2644 = vmatprep.subr.mxu0 0.0
        %2645 = vmatpush1.msra.mxu0 0.0
        %2646 = vmatprep.subr.mxu0 0.0
        %2647 = vmatpush1.msra.mxu0 0.0
        %2648 = vmatprep.subr.mxu0 0.0
        %2649 = vmatpush1.msra.mxu0 0.0
        %2650 = vmatprep.subr.mxu0 0.0
        %2651 = vmatpush1.msra.mxu0 0.0
        %2652 = vmatprep.subr.mxu0 0.0
        %2653 = vmatpush1.msra.mxu0 0.0
        %2654 = vmatprep.subr.mxu0 0.0
        %2655 = vmatpush1.msra.mxu0 0.0
        %2656 = vmatprep.subr.mxu0 0.0
        %2657 = vmatpush1.msra.mxu0 0.0
        %2658 = vmatprep.subr.mxu0 0.0
        %2659 = vmatpush1.msra.mxu0 0.0
        %2660 = vmatprep.subr.mxu0 0.0
        %2661 = vmatpush1.msra.mxu0 0.0
        %2662 = vmatprep.mubr.f32.mxu0 0.0
        %2663 = vmatmul.mubr.f32.gmra.mrb[0].mxu0 %v2596
        %v2664 = vpop.f32.mrb[0].mxu0
        %v2665 = vadd.f32 %v2593, %v2664
        %v2666 = vpop.f32.mrb[0].mxu0
        %2667 = vdwg.mxu0
        %v2668 = vadd.f32 %v1813, %v2665
        %s2669 = scalar_lea.vmem %s10, 1
        %v2670 = vld [vmem:[%s2669] sm:$0x1]
        %s2671 = scalar_lea.vmem %s11, 1
        %v2672 = vld [vmem:[%s2671] sm:$0x1]
        %v2673 = vsel %vm682, %v2668, 0.0
        %2674 = vadd.xlane.f32.xlu0 %v2673
        %v2675 = vpop.xlane.xlu0 %2674
        %v2676 = vmul.f32 %v2675, %v686
        %v2677 = vsub.f32 %v2668, %v2676
        %v2678 = vmul.f32 %v2677, %v2677
        %v2679 = vsel %vm682, %v2678, 0.0
        %2680 = vadd.xlane.f32.xlu0 %v2679
        %v2681 = vpop.xlane.xlu0 %2680
        %v2682 = vmul.f32 %v2681, %v686
        %v2683 = vadd.f32 %v2682, 1e-12
        %v2684 = vrsqrt.pop %v2683
        %v2685 = vmul.f32 %v2677, %v2684
        %v2687 = vlaneseq
        %v2688 = vshrl.u32 %v2687, 7
        %v2689 = vsub.s32 0, %v2688
        %v2690 = vrot.slane %v2670, %v2689
        %v2692 = vmul.f32 %v2685, %v2690
        %v2694 = vlaneseq
        %v2695 = vshrl.u32 %v2694, 7
        %v2696 = vsub.s32 0, %v2695
        %v2697 = vrot.slane %v2672, %v2696
        %v2699 = vadd.f32 %v2692, %v2697
        %s2700 = scalar_lea.vmem %s12, 32
        %v2701 = vld [vmem:[%s2700] sm:$0xff]
        %v2702 = vld [vmem:[%s2700 + $0x8] sm:$0xff]
        %v2703 = vld [vmem:[%s2700 + $0x10] sm:$0xff]
        %v2704 = vld [vmem:[%s2700 + $0x18] sm:$0xff]
        %s2705 = scalar_lea.vmem %s13, 1
        %v2706 = vld [vmem:[%s2705] sm:$0x1]
        %v2708 = vlaneseq
        %v2709 = vshrl.u32 %v2708, 7
        %v2710 = vsub.s32 0, %v2709
        %v2711 = vrot.slane %v2706, %v2710
        %v2714 = vsel %vm682, %v2699, 0
        %2716 = vmatprep.subr.mxu0 0.0
        %2717 = vmatpush1.msra.mxu0 %v2701
        %2718 = vmatprep.subr.mxu0 0.0
        %2719 = vmatpush1.msra.mxu0 %v2702
        %2720 = vmatprep.subr.mxu0 0.0
        %2721 = vmatpush1.msra.mxu0 %v2703
        %2722 = vmatprep.subr.mxu0 0.0
        %2723 = vmatpush1.msra.mxu0 %v2704
        %2724 = vmatprep.subr.mxu0 0.0
        %2725 = vmatpush1.msra.mxu0 0.0
        %2726 = vmatprep.subr.mxu0 0.0
        %2727 = vmatpush1.msra.mxu0 0.0
        %2728 = vmatprep.subr.mxu0 0.0
        %2729 = vmatpush1.msra.mxu0 0.0
        %2730 = vmatprep.subr.mxu0 0.0
        %2731 = vmatpush1.msra.mxu0 0.0
        %2732 = vmatprep.subr.mxu0 0.0
        %2733 = vmatpush1.msra.mxu0 0.0
        %2734 = vmatprep.subr.mxu0 0.0
        %2735 = vmatpush1.msra.mxu0 0.0
        %2736 = vmatprep.subr.mxu0 0.0
        %2737 = vmatpush1.msra.mxu0 0.0
        %2738 = vmatprep.subr.mxu0 0.0
        %2739 = vmatpush1.msra.mxu0 0.0
        %2740 = vmatprep.subr.mxu0 0.0
        %2741 = vmatpush1.msra.mxu0 0.0
        %2742 = vmatprep.subr.mxu0 0.0
        %2743 = vmatpush1.msra.mxu0 0.0
        %2744 = vmatprep.subr.mxu0 0.0
        %2745 = vmatpush1.msra.mxu0 0.0
        %2746 = vmatprep.subr.mxu0 0.0
        %2747 = vmatpush1.msra.mxu0 0.0
        %2748 = vmatprep.subr.mxu0 0.0
        %2749 = vmatpush1.msra.mxu0 0.0
        %2750 = vmatprep.subr.mxu0 0.0
        %2751 = vmatpush1.msra.mxu0 0.0
        %2752 = vmatprep.subr.mxu0 0.0
        %2753 = vmatpush1.msra.mxu0 0.0
        %2754 = vmatprep.subr.mxu0 0.0
        %2755 = vmatpush1.msra.mxu0 0.0
        %2756 = vmatprep.subr.mxu0 0.0
        %2757 = vmatpush1.msra.mxu0 0.0
        %2758 = vmatprep.subr.mxu0 0.0
        %2759 = vmatpush1.msra.mxu0 0.0
        %2760 = vmatprep.subr.mxu0 0.0
        %2761 = vmatpush1.msra.mxu0 0.0
        %2762 = vmatprep.subr.mxu0 0.0
        %2763 = vmatpush1.msra.mxu0 0.0
        %2764 = vmatprep.subr.mxu0 0.0
        %2765 = vmatpush1.msra.mxu0 0.0
        %2766 = vmatprep.subr.mxu0 0.0
        %2767 = vmatpush1.msra.mxu0 0.0
        %2768 = vmatprep.subr.mxu0 0.0
        %2769 = vmatpush1.msra.mxu0 0.0
        %2770 = vmatprep.subr.mxu0 0.0
        %2771 = vmatpush1.msra.mxu0 0.0
        %2772 = vmatprep.subr.mxu0 0.0
        %2773 = vmatpush1.msra.mxu0 0.0
        %2774 = vmatprep.subr.mxu0 0.0
        %2775 = vmatpush1.msra.mxu0 0.0
        %2776 = vmatprep.subr.mxu0 0.0
        %2777 = vmatpush1.msra.mxu0 0.0
        %2778 = vmatprep.subr.mxu0 0.0
        %2779 = vmatpush1.msra.mxu0 0.0
        %2780 = vmatprep.mubr.f32.mxu0 0.0
        %2781 = vmatmul.mubr.f32.gmra.mrb[0].mxu0 %v2714
        %v2782 = vpop.f32.mrb[0].mxu0
        %v2783 = vadd.f32 %v2711, %v2782
        %v2784 = vpop.f32.mrb[0].mxu0
        %2785 = vdwg.mxu0
        %v2786 = vmul.f32 %v2783, 0.5
        %v2787 = vmul.f32 %v2783, 0.044715
        %v2788 = vmul.f32 %v2787, %v2783
        %v2789 = vmul.f32 %v2788, %v2783
        %v2790 = vadd.f32 %v2783, %v2789
        %v2791 = vmul.f32 %v2790, 0.7978846
        %v2792 = vtanh.pop %v2791
        %v2793 = vadd.f32 %v2792, 1.0
        %v2794 = vmul.f32 %v2786, %v2793
        %s2795 = scalar_lea.vmem %s14, 64
        %v2796 = vld [vmem:[%s2795] sm:$0xff]
        %v2797 = vld [vmem:[%s2795 + $0x8] sm:$0xff]
        %v2798 = vld [vmem:[%s2795 + $0x10] sm:$0xff]
        %v2799 = vld [vmem:[%s2795 + $0x18] sm:$0xff]
        %v2800 = vld [vmem:[%s2795 + $0x20] sm:$0xff]
        %v2801 = vld [vmem:[%s2795 + $0x28] sm:$0xff]
        %v2802 = vld [vmem:[%s2795 + $0x30] sm:$0xff]
        %v2803 = vld [vmem:[%s2795 + $0x38] sm:$0xff]
        %s2804 = scalar_lea.vmem %s15, 1
        %v2805 = vld [vmem:[%s2804] sm:$0x1]
        %v2807 = vlaneseq
        %v2808 = vshrl.u32 %v2807, 7
        %v2809 = vsub.s32 0, %v2808
        %v2810 = vrot.slane %v2805, %v2809
        %v2813 = vsel %vm1710, %v2794, 0
        %2815 = vmatprep.subr.mxu0 0.0
        %2816 = vmatpush1.msra.mxu0 %v2796
        %2817 = vmatprep.subr.mxu0 0.0
        %2818 = vmatpush1.msra.mxu0 %v2797
        %2819 = vmatprep.subr.mxu0 0.0
        %2820 = vmatpush1.msra.mxu0 %v2798
        %2821 = vmatprep.subr.mxu0 0.0
        %2822 = vmatpush1.msra.mxu0 %v2799
        %2823 = vmatprep.subr.mxu0 0.0
        %2824 = vmatpush1.msra.mxu0 %v2800
        %2825 = vmatprep.subr.mxu0 0.0
        %2826 = vmatpush1.msra.mxu0 %v2801
        %2827 = vmatprep.subr.mxu0 0.0
        %2828 = vmatpush1.msra.mxu0 %v2802
        %2829 = vmatprep.subr.mxu0 0.0
        %2830 = vmatpush1.msra.mxu0 %v2803
        %2831 = vmatprep.subr.mxu0 0.0
        %2832 = vmatpush1.msra.mxu0 0.0
        %2833 = vmatprep.subr.mxu0 0.0
        %2834 = vmatpush1.msra.mxu0 0.0
        %2835 = vmatprep.subr.mxu0 0.0
        %2836 = vmatpush1.msra.mxu0 0.0
        %2837 = vmatprep.subr.mxu0 0.0
        %2838 = vmatpush1.msra.mxu0 0.0
        %2839 = vmatprep.subr.mxu0 0.0
        %2840 = vmatpush1.msra.mxu0 0.0
        %2841 = vmatprep.subr.mxu0 0.0
        %2842 = vmatpush1.msra.mxu0 0.0
        %2843 = vmatprep.subr.mxu0 0.0
        %2844 = vmatpush1.msra.mxu0 0.0
        %2845 = vmatprep.subr.mxu0 0.0
        %2846 = vmatpush1.msra.mxu0 0.0
        %2847 = vmatprep.subr.mxu0 0.0
        %2848 = vmatpush1.msra.mxu0 0.0
        %2849 = vmatprep.subr.mxu0 0.0
        %2850 = vmatpush1.msra.mxu0 0.0
        %2851 = vmatprep.subr.mxu0 0.0
        %2852 = vmatpush1.msra.mxu0 0.0
        %2853 = vmatprep.subr.mxu0 0.0
        %2854 = vmatpush1.msra.mxu0 0.0
        %2855 = vmatprep.subr.mxu0 0.0
        %2856 = vmatpush1.msra.mxu0 0.0
        %2857 = vmatprep.subr.mxu0 0.0
        %2858 = vmatpush1.msra.mxu0 0.0
        %2859 = vmatprep.subr.mxu0 0.0
        %2860 = vmatpush1.msra.mxu0 0.0
        %2861 = vmatprep.subr.mxu0 0.0
        %2862 = vmatpush1.msra.mxu0 0.0
        %2863 = vmatprep.subr.mxu0 0.0
        %2864 = vmatpush1.msra.mxu0 0.0
        %2865 = vmatprep.subr.mxu0 0.0
        %2866 = vmatpush1.msra.mxu0 0.0
        %2867 = vmatprep.subr.mxu0 0.0
        %2868 = vmatpush1.msra.mxu0 0.0
        %2869 = vmatprep.subr.mxu0 0.0
        %2870 = vmatpush1.msra.mxu0 0.0
        %2871 = vmatprep.subr.mxu0 0.0
        %2872 = vmatpush1.msra.mxu0 0.0
        %2873 = vmatprep.subr.mxu0 0.0
        %2874 = vmatpush1.msra.mxu0 0.0
        %2875 = vmatprep.subr.mxu0 0.0
        %2876 = vmatpush1.msra.mxu0 0.0
        %2877 = vmatprep.subr.mxu0 0.0
        %2878 = vmatpush1.msra.mxu0 0.0
        %2879 = vmatprep.mubr.f32.mxu0 0.0
        %2880 = vmatmul.mubr.f32.gmra.mrb[0].mxu0 %v2813
        %v2881 = vpop.f32.mrb[0].mxu0
        %v2882 = vadd.f32 %v2810, %v2881
        %v2883 = vpop.f32.mrb[0].mxu0
        %2884 = vdwg.mxu0
        %v2885 = vadd.f32 %v2699, %v2882
        %s2886 = scalar_lea.vmem %s16, 1
        %v2887 = vld [vmem:[%s2886] sm:$0x1]
        %s2888 = scalar_lea.vmem %s17, 1
        %v2889 = vld [vmem:[%s2888] sm:$0x1]
        %v2890 = vsel %vm682, %v2885, 0.0
        %2891 = vadd.xlane.f32.xlu0 %v2890
        %v2892 = vpop.xlane.xlu0 %2891
        %v2893 = vmul.f32 %v2892, %v686
        %v2894 = vsub.f32 %v2885, %v2893
        %v2895 = vmul.f32 %v2894, %v2894
        %v2896 = vsel %vm682, %v2895, 0.0
        %2897 = vadd.xlane.f32.xlu0 %v2896
        %v2898 = vpop.xlane.xlu0 %2897
        %v2899 = vmul.f32 %v2898, %v686
        %v2900 = vadd.f32 %v2899, 1e-12
        %v2901 = vrsqrt.pop %v2900
        %v2902 = vmul.f32 %v2894, %v2901
        %v2904 = vlaneseq
        %v2905 = vshrl.u32 %v2904, 7
        %v2906 = vsub.s32 0, %v2905
        %v2907 = vrot.slane %v2887, %v2906
        %v2909 = vmul.f32 %v2902, %v2907
        %v2911 = vlaneseq
        %v2912 = vshrl.u32 %v2911, 7
        %v2913 = vsub.s32 0, %v2912
        %v2914 = vrot.slane %v2889, %v2913
        %v2916 = vadd.f32 %v2909, %v2914
        %v2917 = vsel %vm682, %v2916, 0.0
        %v2918 = vrot.slane %v2917, 4
        %v2919 = vadd.f32 %v2917, %v2918
        %v2920 = vrot.slane %v2919, 2
        %v2921 = vadd.f32 %v2919, %v2920
        %v2922 = vrot.slane %v2921, 1
        %v2923 = vadd.f32 %v2921, %v2922
        %v2924 = vrcp.pop 8.0
        %v2925 = vmul.f32 %v2923, %v2924
        %vm2926 = vcmask 253952
        %2927 = vst.msk [vmem:[%s576] sm:$0x1] %vm2926, %v2925
        %s2928 = sand.u32 %s428, 1
        %s2929 = scalar_lea.sflag [#allocation3], %s2928
        %s2930 = sand.u32 %s428, 1
        %s2931 = scalar_lea.vmem [#allocation2], %s2930
        // Predicated region
        $region93: #{tag_model_forward.1} parent=91 // pred_check
          %p2932 = pneg %p438
        $region94: #{tag_model_forward.1} parent=91 // pred_check_branch
          %2934 = sbr.rel (%p2932) target = $region96
        $region95: #{tag_model_forward.1} parent=91 // pred_region
          %s2936 = ssub.s32 16, 16
          %2937 = vsyncadd %s2929, %s2936
          %s2938 = smul.addr %s32, 16
          %s2939 = scalar_lea.hbm %s18, %s2938
          %s2941 = sshll.u32 %s2931, 4
          %s2942 = int_to_ptr.vmem [resolvable:$true] %s2941
          %2944 = dma.vmem_to_hbm [thread:$0]  %s2942, 16, %s2939, %s2929
        $region96: #{tag_model_forward.1} parent=91 // pred_fallthru
          _
      $region92: #{tag_model_forward.1} parent=5 // pred_fallthru
        _
      %p2945 = scmp.le.s32.totalorder 2, %s27
      // Predicated region
      $region97: #{tag_model_forward.1} parent=5 // pred_check
        %p2946 = pneg %p2945
      $region98: #{tag_model_forward.1} parent=5 // pred_check_branch
        %2948 = sbr.rel (%p2946) target = $region100
      $region99: #{tag_model_forward.1} parent=5 // pred_region
        %s2949 = ssub.s32 %s27, 2
        // Predicated region
        $region101: #{tag_model_forward.1} parent=99 // pred_check
          %p2950 = pneg %p444
        $region102: #{tag_model_forward.1} parent=99 // pred_check_branch
          %2952 = sbr.rel (%p2950) target = $region104
        $region103: #{tag_model_forward.1} parent=99 // pred_region
          %s2953 = sand.u32 %s429, 1
          %s2954 = scalar_lea.sflag [#allocation3], %s2953
          %s2955 = sand.u32 %s429, 1
          %s2956 = scalar_lea.vmem [#allocation2], %s2955
          %2957 = dma.done %s2954, 16
        $region104: #{tag_model_forward.1} parent=99 // pred_fallthru
          _
      $region100: #{tag_model_forward.1} parent=5 // pred_fallthru
        _
    $region6: #{tag_model_forward.1} parent=1 // loop_footer
      %s31 = sadd.s32 1, %s27
    $region7: #{tag_model_forward.1} parent=1 // loop_footer_branch
      %26 = sbr.rel target = $region3
    $region8: #{tag_model_forward.1} parent=1 // loop_exit
      _
    %2958 = vsyncpa [#allocation3], 1
    %s2959 = scalar_lea.sflag [#allocation3], 1
    %2960 = vsyncpa %s2959, 1

</llo_original>
